<compile_context>
chip_gen: v7x
topology: tpu7x:2x2x1
jax: 0.10.0
libtpu: 0.0.40
codegen_flags: <defaults>
</compile_context>

<pallas_src>
import functools

import jax
import jax.numpy as jnp
from jax.experimental import pallas as pl
from jax.experimental.pallas import tpu as pltpu


def _cdiv(a, b):
    return -(-a // b)


def _round_up(a, b):
    return _cdiv(a, b) * b


def _conv_bn_act_kernel(x_ref, w_ref, b_ref, o_ref, acc_ref, *,
                        taps, OH, OW, stride, approx):
    # x_ref : (1, Hp, Wp, C_in)        padded NHWC image (compute dtype)
    # w_ref : (KH*KW, C_in, C_pad)     BN-scale-folded weights (VMEM-resident)
    # b_ref : (1, C_pad)               folded BN bias (f32, VMEM-resident)
    # o_ref : (1, OH*OW, C_pad)        output tile (compute dtype)
    # acc_ref: (OH*OW, C_pad)          f32 accumulator scratch

    # Fold the bias into the accumulator init (removes a full-tile VALU add
    # from the epilogue).
    acc_ref[...] = jnp.broadcast_to(b_ref[...], acc_ref.shape)

    # In-kernel im2col: one small matmul per (kh, kw) tap, unrolled (KH*KW is
    # small and static, so the LLO scheduler sees the whole loop body).
    for t, (kh, kw) in enumerate(taps):
        if stride == 1:
            rows, cols = pl.ds(kh, OH), pl.ds(kw, OW)
        else:
            rows = pl.ds(kh, OH, stride=stride)
            cols = pl.ds(kw, OW, stride=stride)
        tap = x_ref[0, rows, cols, :]                        # (OH, OW, C_in)
        tap2 = tap.reshape(OH * OW, tap.shape[-1])           # (OH*OW, C_in)
        acc_ref[...] += jnp.dot(tap2, w_ref[t],
                                preferred_element_type=jnp.float32)

    # SiLU epilogue on the f32 accumulator.  approx=True rides the EUP slot on
    # the bf16 path; the f32 path keeps the exact reciprocal for tight checks.
    y = acc_ref[...]
    sig = pl.reciprocal(1.0 + jnp.exp(-y), approx=approx)
    o_ref[0] = (y * sig).astype(o_ref.dtype)


def conv_bn_act(x_nchw, weight, gamma, beta, running_mean, running_var,
                *, stride=1, eps=1e-5, compute_dtype=jnp.bfloat16):
    """Conv2d(pad=(k-1)//2, groups=1, bias=False) + BN(inference) + SiLU.

    x_nchw : (N, C_in, H, W) float32
    weight : (C_out, C_in, KH, KW) float32 (PyTorch OIHW layout)
    Returns (N, C_out, OH, OW) float32 (module contract is NCHW in / NCHW out).
    """
    N, C_in, H, W = x_nchw.shape
    C_out, _, KH, KW = weight.shape
    pad = (KH - 1) // 2                      # matches PyTorch ConvBNAct (odd ksize)
    OH = (H + 2 * pad - KH) // stride + 1
    OW = (W + 2 * pad - KW) // stride + 1
    M_img = OH * OW
    Hp, Wp = H + 2 * pad, W + 2 * pad

    # ---- fold BN (inference) into per-channel scale/bias; scale -> weight ----
    inv_std = jax.lax.rsqrt(running_var.astype(jnp.float32) + eps)
    scale = gamma * inv_std                                   # (C_out,)
    bias = beta - running_mean * scale                        # (C_out,)

    # weight (C_out, C_in, KH, KW) -> (KH*KW, C_in, C_out), lane-dense C_pad.
    C_pad = _round_up(C_out, 128)
    w = jnp.transpose(weight, (2, 3, 1, 0)).reshape(KH * KW, C_in, C_out)
    w = w * scale[None, None, :]
    if C_pad != C_out:
        w = jnp.pad(w, ((0, 0), (0, 0), (0, C_pad - C_out)))
        bias = jnp.pad(bias, (0, C_pad - C_out))
    w = w.astype(compute_dtype)
    bias2 = bias.reshape(1, C_pad).astype(jnp.float32)

    # ---- input: single NCHW->NHWC + cast + cheap spatial zero-pad pass ----
    x = jnp.transpose(x_nchw, (0, 2, 3, 1)).astype(compute_dtype)   # (N, H, W, C)
    x_p = jnp.pad(x, ((0, 0), (pad, pad), (pad, pad), (0, 0)))      # (N, Hp, Wp, C)

    # ---- per-generation VMEM sanity check (v7x: 64 MiB/TC physical) ----
    itemsize = jnp.dtype(compute_dtype).itemsize
    est = (2 * Hp * Wp * C_in * itemsize            # input block, double-buffered
           + 2 * M_img * C_pad * itemsize           # output block, double-buffered
           + 2 * KH * KW * C_in * C_pad * itemsize  # resident weight
           + M_img * C_pad * 4                      # f32 accumulator
           + 2 * C_pad * 4)                         # resident bias
    vmem_cap = 40 * 1024 * 1024
    if est > vmem_cap:
        # TODO(synk): add output-row tiling with manual halo DMA for big images.
        raise NotImplementedError("per-image block exceeds the VMEM budget")

    taps = tuple((kh, kw) for kh in range(KH) for kw in range(KW))
    kernel = functools.partial(
        _conv_bn_act_kernel, taps=taps, OH=OH, OW=OW, stride=stride,
        approx=(compute_dtype != jnp.float32))

    out = pl.pallas_call(
        kernel,
        out_shape=jax.ShapeDtypeStruct((N, M_img, C_pad), compute_dtype),
        grid_spec=pltpu.PrefetchScalarGridSpec(
            num_scalar_prefetch=0,
            grid=(N,),
            in_specs=[
                # One padded image per grid step.
                pl.BlockSpec((1, Hp, Wp, C_in), lambda n: (n, 0, 0, 0)),
                # Weight & bias: full-array blocks, constant index -> DMA once,
                # VMEM-resident across the whole grid.
                pl.BlockSpec((KH * KW, C_in, C_pad), lambda n: (0, 0, 0)),
                pl.BlockSpec((1, C_pad), lambda n: (0, 0)),
            ],
            out_specs=pl.BlockSpec((1, M_img, C_pad), lambda n: (n, 0, 0)),
            scratch_shapes=[pltpu.VMEM((M_img, C_pad), jnp.float32)],
        ),
        compiler_params=pltpu.CompilerParams(
            dimension_semantics=("parallel",),   # batch axis splits across TCs (v7x)
            vmem_limit_bytes=vmem_cap,
        ),
    )(x_p, w, bias2)

    # (N, OH*OW, C_pad) -> NCHW f32 (contract of the PyTorch module).  The
    # reshape is metadata-only; slice + transpose + cast fuse into one pass.
    out = out.reshape(N, OH, OW, C_pad)[..., :C_out]
    return jnp.transpose(out, (0, 3, 1, 2)).astype(jnp.float32)


def _reference(x_nchw, weight, gamma, beta, running_mean, running_var,
               *, stride=1, eps=1e-5):
    pad = (weight.shape[2] - 1) // 2
    y = jax.lax.conv_general_dilated(
        x_nchw, weight, window_strides=(stride, stride),
        padding=((pad, pad), (pad, pad)),
        dimension_numbers=("NCHW", "OIHW", "NCHW"))
    inv_std = 1.0 / jnp.sqrt(running_var + eps)
    scale = (gamma * inv_std)[None, :, None, None]
    bias = (beta - running_mean * gamma * inv_std)[None, :, None, None]
    y = y * scale + bias
    return y * jax.nn.sigmoid(y)


if __name__ == "__main__":
    # ConvBNAct(in_channels=4, out_channels=8, ksize=3, stride=1, act='silu', norm='bn')
    N, C_in, H, W = 2, 4, 16, 16
    C_out, KH, KW = 8, 3, 3

    key = jax.random.PRNGKey(0)
    k_x, k_w, k_g, k_b, k_m, k_v = jax.random.split(key, 6)

    x = jax.random.normal(k_x, (N, C_in, H, W), dtype=jnp.float32)
    weight = jax.random.normal(k_w, (C_out, C_in, KH, KW), dtype=jnp.float32) * 0.1
    gamma = jax.random.normal(k_g, (C_out,), dtype=jnp.float32) * 0.1 + 1.0
    beta = jax.random.normal(k_b, (C_out,), dtype=jnp.float32) * 0.1
    running_mean = jax.random.normal(k_m, (C_out,), dtype=jnp.float32) * 0.1
    running_var = jax.random.uniform(k_v, (C_out,), dtype=jnp.float32,
                                     minval=0.5, maxval=1.5)

    ref = _reference(x, weight, gamma, beta, running_mean, running_var)

    # f32 compute path: tight check against the XLA reference.
    out_f32 = conv_bn_act(x, weight, gamma, beta, running_mean, running_var,
                          compute_dtype=jnp.float32)
    out_f32 = jax.block_until_ready(out_f32)
    assert out_f32.shape == ref.shape == (N, C_out, H, W)
    assert jnp.allclose(out_f32, ref, atol=1e-4, rtol=1e-4)

    # Default bf16-operand / f32-accumulation path (MXU-friendly, bf16 stores).
    out_bf16 = conv_bn_act(x, weight, gamma, beta, running_mean, running_var)
    out_bf16 = jax.block_until_ready(out_bf16)
    assert out_bf16.shape == ref.shape
    assert jnp.allclose(out_bf16, ref, atol=2e-2, rtol=2e-2)

    print("KERNEL_OK")
</pallas_src>

<mosaic_0001>
module attributes {stable_mosaic.version = 11 : i64} {
  func.func @_conv_bn_act_kernel(%arg0: i32, %arg1: memref<1x18x18x4xf32, #tpu.memory_space<vmem>>, %arg2: memref<9x4x128xf32, #tpu.memory_space<vmem>>, %arg3: memref<1x128xf32, #tpu.memory_space<vmem>>, %arg4: memref<1x256x128xf32, #tpu.memory_space<vmem>>, %arg5: memref<256x128xf32, #tpu.memory_space<vmem>>) attributes {dimension_semantics = [#tpu.dimension_semantics<parallel>], iteration_bounds = array<i64: 2>, scalar_prefetch = 0 : i64, scratch_operands = 1 : i64, tpu.core_type = #tpu.core_type<tc>, window_params = [{transform_indices = @transform_0, window_bounds = array<i64: 1, 18, 18, 4>}, {pipeline_mode = #tpu.pipeline_mode<synchronous>, transform_indices = @transform_1, window_bounds = array<i64: 9, 4, 128>}, {pipeline_mode = #tpu.pipeline_mode<synchronous>, transform_indices = @transform_2, window_bounds = array<i64: 1, 128>}, {transform_indices = @transform_3, window_bounds = array<i64: 1, 256, 128>}]} {
    %c0 = arith.constant 0 : index
    %c0_0 = arith.constant 0 : index
    %0 = vector.load %arg3[%c0, %c0_0] : memref<1x128xf32, #tpu.memory_space<vmem>>, vector<1x128xf32>
    %1 = vector.shape_cast %0 : vector<1x128xf32> to vector<1x128xf32>
    %2 = vector.broadcast %1 : vector<1x128xf32> to vector<256x128xf32>
    %c0_1 = arith.constant 0 : index
    %c0_2 = arith.constant 0 : index
    %3 = vector.load %arg5[%c0_1, %c0_2] : memref<256x128xf32, #tpu.memory_space<vmem>>, vector<256x128xf32>
    tpu.vector_store %arg5[%c0_1, %c0_2], %2 {strides = array<i32>} : memref<256x128xf32, #tpu.memory_space<vmem>>, vector<256x128xf32>,
    %c0_3 = arith.constant 0 : index
    %c0_4 = arith.constant 0 : index
    %c0_5 = arith.constant 0 : index
    %c0_6 = arith.constant 0 : index
    %4 = vector.load %arg1[%c0_3, %c0_4, %c0_5, %c0_6] : memref<1x18x18x4xf32, #tpu.memory_space<vmem>>, vector<1x16x16x4xf32>
    %5 = vector.shape_cast %4 : vector<1x16x16x4xf32> to vector<16x16x4xf32>
    %6 = vector.shape_cast %5 : vector<16x16x4xf32> to vector<256x4xf32>
    %c0_7 = arith.constant 0 : index
    %c0_8 = arith.constant 0 : index
    %7 = vector.load %arg5[%c0_7, %c0_8] : memref<256x128xf32, #tpu.memory_space<vmem>>, vector<256x128xf32>
    %c0_9 = arith.constant 0 : index
    %c0_10 = arith.constant 0 : index
    %c0_11 = arith.constant 0 : index
    %8 = vector.load %arg2[%c0_9, %c0_10, %c0_11] : memref<9x4x128xf32, #tpu.memory_space<vmem>>, vector<1x4x128xf32>
    %9 = vector.shape_cast %8 : vector<1x4x128xf32> to vector<4x128xf32>
    %cst = arith.constant dense<0.000000e+00> : vector<256x128xf32>
    %10 = tpu.matmul %6, %9, %cst {dimension_numbers = #tpu.dot_dimension_numbers<[1], [0], [0], [1], [0, 0, 1, 1], [], []>} : vector<256x4xf32>, vector<4x128xf32>, vector<256x128xf32> -> vector<256x128xf32>
    %11 = arith.addf %7, %10 : vector<256x128xf32>
    %c0_12 = arith.constant 0 : index
    %c0_13 = arith.constant 0 : index
    %12 = vector.load %arg5[%c0_12, %c0_13] : memref<256x128xf32, #tpu.memory_space<vmem>>, vector<256x128xf32>
    tpu.vector_store %arg5[%c0_12, %c0_13], %11 {strides = array<i32>} : memref<256x128xf32, #tpu.memory_space<vmem>>, vector<256x128xf32>,
    %c0_14 = arith.constant 0 : index
    %c0_15 = arith.constant 0 : index
    %c1 = arith.constant 1 : index
    %c0_16 = arith.constant 0 : index
    %13 = vector.load %arg1[%c0_14, %c0_15, %c1, %c0_16] : memref<1x18x18x4xf32, #tpu.memory_space<vmem>>, vector<1x16x16x4xf32>
    %14 = vector.shape_cast %13 : vector<1x16x16x4xf32> to vector<16x16x4xf32>
    %15 = vector.shape_cast %14 : vector<16x16x4xf32> to vector<256x4xf32>
    %c0_17 = arith.constant 0 : index
    %c0_18 = arith.constant 0 : index
    %16 = vector.load %arg5[%c0_17, %c0_18] : memref<256x128xf32, #tpu.memory_space<vmem>>, vector<256x128xf32>
    %c1_19 = arith.constant 1 : index
    %c0_20 = arith.constant 0 : index
    %c0_21 = arith.constant 0 : index
    %17 = vector.load %arg2[%c1_19, %c0_20, %c0_21] : memref<9x4x128xf32, #tpu.memory_space<vmem>>, vector<1x4x128xf32>
    %18 = vector.shape_cast %17 : vector<1x4x128xf32> to vector<4x128xf32>
    %cst_22 = arith.constant dense<0.000000e+00> : vector<256x128xf32>
    %19 = tpu.matmul %15, %18, %cst_22 {dimension_numbers = #tpu.dot_dimension_numbers<[1], [0], [0], [1], [0, 0, 1, 1], [], []>} : vector<256x4xf32>, vector<4x128xf32>, vector<256x128xf32> -> vector<256x128xf32>
    %20 = arith.addf %16, %19 : vector<256x128xf32>
    %c0_23 = arith.constant 0 : index
    %c0_24 = arith.constant 0 : index
    %21 = vector.load %arg5[%c0_23, %c0_24] : memref<256x128xf32, #tpu.memory_space<vmem>>, vector<256x128xf32>
    tpu.vector_store %arg5[%c0_23, %c0_24], %20 {strides = array<i32>} : memref<256x128xf32, #tpu.memory_space<vmem>>, vector<256x128xf32>,
    %c0_25 = arith.constant 0 : index
    %c0_26 = arith.constant 0 : index
    %c2 = arith.constant 2 : index
    %c0_27 = arith.constant 0 : index
    %22 = vector.load %arg1[%c0_25, %c0_26, %c2, %c0_27] : memref<1x18x18x4xf32, #tpu.memory_space<vmem>>, vector<1x16x16x4xf32>
    %23 = vector.shape_cast %22 : vector<1x16x16x4xf32> to vector<16x16x4xf32>
    %24 = vector.shape_cast %23 : vector<16x16x4xf32> to vector<256x4xf32>
    %c0_28 = arith.constant 0 : index
    %c0_29 = arith.constant 0 : index
    %25 = vector.load %arg5[%c0_28, %c0_29] : memref<256x128xf32, #tpu.memory_space<vmem>>, vector<256x128xf32>
    %c2_30 = arith.constant 2 : index
    %c0_31 = arith.constant 0 : index
    %c0_32 = arith.constant 0 : index
    %26 = vector.load %arg2[%c2_30, %c0_31, %c0_32] : memref<9x4x128xf32, #tpu.memory_space<vmem>>, vector<1x4x128xf32>
    %27 = vector.shape_cast %26 : vector<1x4x128xf32> to vector<4x128xf32>
    %cst_33 = arith.constant dense<0.000000e+00> : vector<256x128xf32>
    %28 = tpu.matmul %24, %27, %cst_33 {dimension_numbers = #tpu.dot_dimension_numbers<[1], [0], [0], [1], [0, 0, 1, 1], [], []>} : vector<256x4xf32>, vector<4x128xf32>, vector<256x128xf32> -> vector<256x128xf32>
    %29 = arith.addf %25, %28 : vector<256x128xf32>
    %c0_34 = arith.constant 0 : index
    %c0_35 = arith.constant 0 : index
    %30 = vector.load %arg5[%c0_34, %c0_35] : memref<256x128xf32, #tpu.memory_space<vmem>>, vector<256x128xf32>
    tpu.vector_store %arg5[%c0_34, %c0_35], %29 {strides = array<i32>} : memref<256x128xf32, #tpu.memory_space<vmem>>, vector<256x128xf32>,
    %c0_36 = arith.constant 0 : index
    %c1_37 = arith.constant 1 : index
    %c0_38 = arith.constant 0 : index
    %c0_39 = arith.constant 0 : index
    %31 = vector.load %arg1[%c0_36, %c1_37, %c0_38, %c0_39] : memref<1x18x18x4xf32, #tpu.memory_space<vmem>>, vector<1x16x16x4xf32>
    %32 = vector.shape_cast %31 : vector<1x16x16x4xf32> to vector<16x16x4xf32>
    %33 = vector.shape_cast %32 : vector<16x16x4xf32> to vector<256x4xf32>
    %c0_40 = arith.constant 0 : index
    %c0_41 = arith.constant 0 : index
    %34 = vector.load %arg5[%c0_40, %c0_41] : memref<256x128xf32, #tpu.memory_space<vmem>>, vector<256x128xf32>
    %c3 = arith.constant 3 : index
    %c0_42 = arith.constant 0 : index
    %c0_43 = arith.constant 0 : index
    %35 = vector.load %arg2[%c3, %c0_42, %c0_43] : memref<9x4x128xf32, #tpu.memory_space<vmem>>, vector<1x4x128xf32>
    %36 = vector.shape_cast %35 : vector<1x4x128xf32> to vector<4x128xf32>
    %cst_44 = arith.constant dense<0.000000e+00> : vector<256x128xf32>
    %37 = tpu.matmul %33, %36, %cst_44 {dimension_numbers = #tpu.dot_dimension_numbers<[1], [0], [0], [1], [0, 0, 1, 1], [], []>} : vector<256x4xf32>, vector<4x128xf32>, vector<256x128xf32> -> vector<256x128xf32>
    %38 = arith.addf %34, %37 : vector<256x128xf32>
    %c0_45 = arith.constant 0 : index
    %c0_46 = arith.constant 0 : index
    %39 = vector.load %arg5[%c0_45, %c0_46] : memref<256x128xf32, #tpu.memory_space<vmem>>, vector<256x128xf32>
    tpu.vector_store %arg5[%c0_45, %c0_46], %38 {strides = array<i32>} : memref<256x128xf32, #tpu.memory_space<vmem>>, vector<256x128xf32>,
    %c0_47 = arith.constant 0 : index
    %c1_48 = arith.constant 1 : index
    %c1_49 = arith.constant 1 : index
    %c0_50 = arith.constant 0 : index
    %40 = vector.load %arg1[%c0_47, %c1_48, %c1_49, %c0_50] : memref<1x18x18x4xf32, #tpu.memory_space<vmem>>, vector<1x16x16x4xf32>
    %41 = vector.shape_cast %40 : vector<1x16x16x4xf32> to vector<16x16x4xf32>
    %42 = vector.shape_cast %41 : vector<16x16x4xf32> to vector<256x4xf32>
    %c0_51 = arith.constant 0 : index
    %c0_52 = arith.constant 0 : index
    %43 = vector.load %arg5[%c0_51, %c0_52] : memref<256x128xf32, #tpu.memory_space<vmem>>, vector<256x128xf32>
    %c4 = arith.constant 4 : index
    %c0_53 = arith.constant 0 : index
    %c0_54 = arith.constant 0 : index
    %44 = vector.load %arg2[%c4, %c0_53, %c0_54] : memref<9x4x128xf32, #tpu.memory_space<vmem>>, vector<1x4x128xf32>
    %45 = vector.shape_cast %44 : vector<1x4x128xf32> to vector<4x128xf32>
    %cst_55 = arith.constant dense<0.000000e+00> : vector<256x128xf32>
    %46 = tpu.matmul %42, %45, %cst_55 {dimension_numbers = #tpu.dot_dimension_numbers<[1], [0], [0], [1], [0, 0, 1, 1], [], []>} : vector<256x4xf32>, vector<4x128xf32>, vector<256x128xf32> -> vector<256x128xf32>
    %47 = arith.addf %43, %46 : vector<256x128xf32>
    %c0_56 = arith.constant 0 : index
    %c0_57 = arith.constant 0 : index
    %48 = vector.load %arg5[%c0_56, %c0_57] : memref<256x128xf32, #tpu.memory_space<vmem>>, vector<256x128xf32>
    tpu.vector_store %arg5[%c0_56, %c0_57], %47 {strides = array<i32>} : memref<256x128xf32, #tpu.memory_space<vmem>>, vector<256x128xf32>,
    %c0_58 = arith.constant 0 : index
    %c1_59 = arith.constant 1 : index
    %c2_60 = arith.constant 2 : index
    %c0_61 = arith.constant 0 : index
    %49 = vector.load %arg1[%c0_58, %c1_59, %c2_60, %c0_61] : memref<1x18x18x4xf32, #tpu.memory_space<vmem>>, vector<1x16x16x4xf32>
    %50 = vector.shape_cast %49 : vector<1x16x16x4xf32> to vector<16x16x4xf32>
    %51 = vector.shape_cast %50 : vector<16x16x4xf32> to vector<256x4xf32>
    %c0_62 = arith.constant 0 : index
    %c0_63 = arith.constant 0 : index
    %52 = vector.load %arg5[%c0_62, %c0_63] : memref<256x128xf32, #tpu.memory_space<vmem>>, vector<256x128xf32>
    %c5 = arith.constant 5 : index
    %c0_64 = arith.constant 0 : index
    %c0_65 = arith.constant 0 : index
    %53 = vector.load %arg2[%c5, %c0_64, %c0_65] : memref<9x4x128xf32, #tpu.memory_space<vmem>>, vector<1x4x128xf32>
    %54 = vector.shape_cast %53 : vector<1x4x128xf32> to vector<4x128xf32>
    %cst_66 = arith.constant dense<0.000000e+00> : vector<256x128xf32>
    %55 = tpu.matmul %51, %54, %cst_66 {dimension_numbers = #tpu.dot_dimension_numbers<[1], [0], [0], [1], [0, 0, 1, 1], [], []>} : vector<256x4xf32>, vector<4x128xf32>, vector<256x128xf32> -> vector<256x128xf32>
    %56 = arith.addf %52, %55 : vector<256x128xf32>
    %c0_67 = arith.constant 0 : index
    %c0_68 = arith.constant 0 : index
    %57 = vector.load %arg5[%c0_67, %c0_68] : memref<256x128xf32, #tpu.memory_space<vmem>>, vector<256x128xf32>
    tpu.vector_store %arg5[%c0_67, %c0_68], %56 {strides = array<i32>} : memref<256x128xf32, #tpu.memory_space<vmem>>, vector<256x128xf32>,
    %c0_69 = arith.constant 0 : index
    %c2_70 = arith.constant 2 : index
    %c0_71 = arith.constant 0 : index
    %c0_72 = arith.constant 0 : index
    %58 = vector.load %arg1[%c0_69, %c2_70, %c0_71, %c0_72] : memref<1x18x18x4xf32, #tpu.memory_space<vmem>>, vector<1x16x16x4xf32>
    %59 = vector.shape_cast %58 : vector<1x16x16x4xf32> to vector<16x16x4xf32>
    %60 = vector.shape_cast %59 : vector<16x16x4xf32> to vector<256x4xf32>
    %c0_73 = arith.constant 0 : index
    %c0_74 = arith.constant 0 : index
    %61 = vector.load %arg5[%c0_73, %c0_74] : memref<256x128xf32, #tpu.memory_space<vmem>>, vector<256x128xf32>
    %c6 = arith.constant 6 : index
    %c0_75 = arith.constant 0 : index
    %c0_76 = arith.constant 0 : index
    %62 = vector.load %arg2[%c6, %c0_75, %c0_76] : memref<9x4x128xf32, #tpu.memory_space<vmem>>, vector<1x4x128xf32>
    %63 = vector.shape_cast %62 : vector<1x4x128xf32> to vector<4x128xf32>
    %cst_77 = arith.constant dense<0.000000e+00> : vector<256x128xf32>
    %64 = tpu.matmul %60, %63, %cst_77 {dimension_numbers = #tpu.dot_dimension_numbers<[1], [0], [0], [1], [0, 0, 1, 1], [], []>} : vector<256x4xf32>, vector<4x128xf32>, vector<256x128xf32> -> vector<256x128xf32>
    %65 = arith.addf %61, %64 : vector<256x128xf32>
    %c0_78 = arith.constant 0 : index
    %c0_79 = arith.constant 0 : index
    %66 = vector.load %arg5[%c0_78, %c0_79] : memref<256x128xf32, #tpu.memory_space<vmem>>, vector<256x128xf32>
    tpu.vector_store %arg5[%c0_78, %c0_79], %65 {strides = array<i32>} : memref<256x128xf32, #tpu.memory_space<vmem>>, vector<256x128xf32>,
    %c0_80 = arith.constant 0 : index
    %c2_81 = arith.constant 2 : index
    %c1_82 = arith.constant 1 : index
    %c0_83 = arith.constant 0 : index
    %67 = vector.load %arg1[%c0_80, %c2_81, %c1_82, %c0_83] : memref<1x18x18x4xf32, #tpu.memory_space<vmem>>, vector<1x16x16x4xf32>
    %68 = vector.shape_cast %67 : vector<1x16x16x4xf32> to vector<16x16x4xf32>
    %69 = vector.shape_cast %68 : vector<16x16x4xf32> to vector<256x4xf32>
    %c0_84 = arith.constant 0 : index
    %c0_85 = arith.constant 0 : index
    %70 = vector.load %arg5[%c0_84, %c0_85] : memref<256x128xf32, #tpu.memory_space<vmem>>, vector<256x128xf32>
    %c7 = arith.constant 7 : index
    %c0_86 = arith.constant 0 : index
    %c0_87 = arith.constant 0 : index
    %71 = vector.load %arg2[%c7, %c0_86, %c0_87] : memref<9x4x128xf32, #tpu.memory_space<vmem>>, vector<1x4x128xf32>
    %72 = vector.shape_cast %71 : vector<1x4x128xf32> to vector<4x128xf32>
    %cst_88 = arith.constant dense<0.000000e+00> : vector<256x128xf32>
    %73 = tpu.matmul %69, %72, %cst_88 {dimension_numbers = #tpu.dot_dimension_numbers<[1], [0], [0], [1], [0, 0, 1, 1], [], []>} : vector<256x4xf32>, vector<4x128xf32>, vector<256x128xf32> -> vector<256x128xf32>
    %74 = arith.addf %70, %73 : vector<256x128xf32>
    %c0_89 = arith.constant 0 : index
    %c0_90 = arith.constant 0 : index
    %75 = vector.load %arg5[%c0_89, %c0_90] : memref<256x128xf32, #tpu.memory_space<vmem>>, vector<256x128xf32>
    tpu.vector_store %arg5[%c0_89, %c0_90], %74 {strides = array<i32>} : memref<256x128xf32, #tpu.memory_space<vmem>>, vector<256x128xf32>,
    %c0_91 = arith.constant 0 : index
    %c2_92 = arith.constant 2 : index
    %c2_93 = arith.constant 2 : index
    %c0_94 = arith.constant 0 : index
    %76 = vector.load %arg1[%c0_91, %c2_92, %c2_93, %c0_94] : memref<1x18x18x4xf32, #tpu.memory_space<vmem>>, vector<1x16x16x4xf32>
    %77 = vector.shape_cast %76 : vector<1x16x16x4xf32> to vector<16x16x4xf32>
    %78 = vector.shape_cast %77 : vector<16x16x4xf32> to vector<256x4xf32>
    %c0_95 = arith.constant 0 : index
    %c0_96 = arith.constant 0 : index
    %79 = vector.load %arg5[%c0_95, %c0_96] : memref<256x128xf32, #tpu.memory_space<vmem>>, vector<256x128xf32>
    %c8 = arith.constant 8 : index
    %c0_97 = arith.constant 0 : index
    %c0_98 = arith.constant 0 : index
    %80 = vector.load %arg2[%c8, %c0_97, %c0_98] : memref<9x4x128xf32, #tpu.memory_space<vmem>>, vector<1x4x128xf32>
    %81 = vector.shape_cast %80 : vector<1x4x128xf32> to vector<4x128xf32>
    %cst_99 = arith.constant dense<0.000000e+00> : vector<256x128xf32>
    %82 = tpu.matmul %78, %81, %cst_99 {dimension_numbers = #tpu.dot_dimension_numbers<[1], [0], [0], [1], [0, 0, 1, 1], [], []>} : vector<256x4xf32>, vector<4x128xf32>, vector<256x128xf32> -> vector<256x128xf32>
    %83 = arith.addf %79, %82 : vector<256x128xf32>
    %c0_100 = arith.constant 0 : index
    %c0_101 = arith.constant 0 : index
    %84 = vector.load %arg5[%c0_100, %c0_101] : memref<256x128xf32, #tpu.memory_space<vmem>>, vector<256x128xf32>
    tpu.vector_store %arg5[%c0_100, %c0_101], %83 {strides = array<i32>} : memref<256x128xf32, #tpu.memory_space<vmem>>, vector<256x128xf32>,
    %c0_102 = arith.constant 0 : index
    %c0_103 = arith.constant 0 : index
    %85 = vector.load %arg5[%c0_102, %c0_103] : memref<256x128xf32, #tpu.memory_space<vmem>>, vector<256x128xf32>
    %cst_104 = arith.constant 0.000000e+00 : f32
    %86 = vector.broadcast %cst_104 : f32 to vector<256x128xf32>
    %87 = arith.subf %86, %85 : vector<256x128xf32>
    %88 = math.exp %87 : vector<256x128xf32>
    %cst_105 = arith.constant 1.000000e+00 : f32
    %89 = vector.broadcast %cst_105 : f32 to vector<256x128xf32>
    %90 = arith.addf %89, %88 : vector<256x128xf32>
    %91 = tpu.reciprocal %90 : vector<256x128xf32> -> vector<256x128xf32>
    %92 = arith.mulf %85, %91 : vector<256x128xf32>
    %c0_106 = arith.constant 0 : index
    %c0_107 = arith.constant 0 : index
    %c0_108 = arith.constant 0 : index
    %93 = vector.load %arg4[%c0_106, %c0_107, %c0_108] : memref<1x256x128xf32, #tpu.memory_space<vmem>>, vector<1x256x128xf32>
    %94 = vector.shape_cast %93 : vector<1x256x128xf32> to vector<256x128xf32>
    %95 = vector.shape_cast %92 : vector<256x128xf32> to vector<1x256x128xf32>
    tpu.vector_store %arg4[%c0_106, %c0_107, %c0_108], %95 {strides = array<i32>} : memref<1x256x128xf32, #tpu.memory_space<vmem>>, vector<1x256x128xf32>,
    return
  }
  func.func @transform_0(%arg0: i32) -> (i32, i32, i32, i32) {
    %c0_i32 = arith.constant 0 : i32
    %c0_i32_0 = arith.constant 0 : i32
    %c0_i32_1 = arith.constant 0 : i32
    %c0_i32_2 = arith.constant 0 : i32
    return %arg0, %c0_i32, %c0_i32_0, %c0_i32_1 : i32, i32, i32, i32
  }
  func.func @transform_1(%arg0: i32) -> (i32, i32, i32) {
    %c0_i32 = arith.constant 0 : i32
    %c0_i32_0 = arith.constant 0 : i32
    %c0_i32_1 = arith.constant 0 : i32
    %c0_i32_2 = arith.constant 0 : i32
    return %c0_i32, %c0_i32_0, %c0_i32_1 : i32, i32, i32
  }
  func.func @transform_2(%arg0: i32) -> (i32, i32) {
    %c0_i32 = arith.constant 0 : i32
    %c0_i32_0 = arith.constant 0 : i32
    %c0_i32_1 = arith.constant 0 : i32
    return %c0_i32, %c0_i32_0 : i32, i32
  }
  func.func @transform_3(%arg0: i32) -> (i32, i32, i32) {
    %c0_i32 = arith.constant 0 : i32
    %c0_i32_0 = arith.constant 0 : i32
    %c0_i32_1 = arith.constant 0 : i32
    return %arg0, %c0_i32, %c0_i32_0 : i32, i32, i32
  }
}

</mosaic_0001>

<llo_original>
// kernel: tpu_custom_call.1
$region0: #{tpu_custom_call.1}
  #allocation0 [shape = 'u32[]', space=smem, size = 0x4, offset = 0x4, fixed_abs, tag = 'smem constant byte address 0x4 - core index']
  #allocation1 [shape = 'u32[144,128]{1,0:T(1,128)}', space=vmem, size = 0x12000, scoped, tag = 'internal scratch']
  #allocation2 [shape = 'f32[256,128]{1,0:T(8,128)}', space=vmem, size = 0x20000, scoped, tag = 'scratch operand']
  %s0 = inlined_call_operand.vmem [shape: f32[2,18,18,4], index: 0, kind: input, shape index: {}]
  %s1 = inlined_call_operand.vmem [shape: f32[9,4,128], index: 1, kind: input, shape index: {}]
  %s2 = inlined_call_operand.vmem [shape: f32[1,128], index: 2, kind: input, shape index: {}]
  %s3 = inlined_call_operand.hbm [shape: f32[2,256,128], index: 3, kind: output, shape index: {}]
  %s4 = sld [smem:[#allocation0]]
  $region45: #{tpu_custom_call.1} parent=0
    _
  %s6 = ssub.s32 1, %s4
  %s7 = scalar_select 0, %s6, %s4
  $region1: #{tpu_custom_call.1} parent=0
    #allocation3 [shape = 'u8[262144]{0}', space=vmem, size = 0x40000, scoped, tag = 'output window, operand 0']
    #allocation4 [shape = 's32[2]{0}', space=sflag, size = 0x8, scoped, tag = 'scoped memory for tpu_custom_call.1']
    %8 = vsyncpa [#allocation4], 0
    %s9 = scalar_lea.sflag [#allocation4], 1
    %10 = vsyncpa %s9, 0
    loop: start=0, step=1, limit=4
    $region2: #{tpu_custom_call.1} parent=1 // loop_pre_header
      _
    $region3: #{tpu_custom_call.1} parent=1 // loop_header
      %s12 = sphi 0, %s16
      %p13 = scmp.ge.s32.totalorder %s12, 4
      %s22 = sphi 0, %s24
      %s25 = sphi 0, %s22
      %s26 = sphi 0, %s25
      %s42 = sphi 0, %s26
      %s46 = sphi 0, %s46
      %s48 = sphi 0, %s46
      %s49 = sphi 0, %s48
      %s63 = sphi 0, %s49
      %s67 = sphi 0, %s67
      %s69 = sphi 0, %s67
      %s70 = sphi 0, %s69
      %s84 = sphi 0, %s70
      %s90 = sphi 0, %s92
      %s93 = sphi 0, %s90
      %s94 = sphi 0, %s93
      %s110 = sphi 0, %s94
    $region4: #{tpu_custom_call.1} parent=1 // loop_header_branch
      %15 = sbr.rel (%p13) target = $region8
    $region5: #{tpu_custom_call.1} parent=1 // loop_body
      %s17 = ssub.s32 %s12, 1
      %s18 = ssub.s32 %s12, 2
      %s19 = sadd.s32 %s12, 1
      %s20 = ssub.s32 %s12, %s19
      %p21 = scmp.eq.s32.totalorder %s20, 0
      %s23 = sadd.s32 %s22, 1
      %s24 = scalar_select %p21, %s22, %s23
      %p27 = pneg %p21
      %p28 = scmp.eq.s32.totalorder %s12, 1
      %p29 = por %p27, %p28
      %p30 = scmp.ne.s32.totalorder %s22, %s25
      %p31 = scmp.eq.s32.totalorder %s12, 0
      %p32 = por %p30, %p31
      %p33 = scmp.ne.s32.totalorder %s22, %s25
      %p34 = scmp.eq.s32.totalorder %s17, 1
      %p35 = por %p33, %p34
      %p36 = scmp.ne.s32.totalorder %s25, %s26
      %p37 = scmp.eq.s32.totalorder %s17, 0
      %p38 = por %p36, %p37
      %p39 = scmp.ne.s32.totalorder %s25, %s26
      %p40 = scmp.eq.s32.totalorder %s18, 1
      %p41 = por %p39, %p40
      %p43 = scmp.ne.s32.totalorder %s26, %s42
      %p44 = scmp.eq.s32.totalorder %s18, 0
      %p45 = por %p43, %p44
      %s47 = sadd.s32 %s46, 1
      %p50 = scmp.eq.s32.totalorder %s12, 1
      %p51 = scmp.ne.s32.totalorder %s46, %s48
      %p52 = scmp.eq.s32.totalorder %s12, 0
      %p53 = por %p51, %p52
      %p54 = scmp.ne.s32.totalorder %s46, %s48
      %p55 = scmp.eq.s32.totalorder %s17, 1
      %p56 = por %p54, %p55
      %p57 = scmp.ne.s32.totalorder %s48, %s49
      %p58 = scmp.eq.s32.totalorder %s17, 0
      %p59 = por %p57, %p58
      %p60 = scmp.ne.s32.totalorder %s48, %s49
      %p61 = scmp.eq.s32.totalorder %s18, 1
      %p62 = por %p60, %p61
      %p64 = scmp.ne.s32.totalorder %s49, %s63
      %p65 = scmp.eq.s32.totalorder %s18, 0
      %p66 = por %p64, %p65
      %s68 = sadd.s32 %s67, 1
      %p71 = scmp.eq.s32.totalorder %s12, 1
      %p72 = scmp.ne.s32.totalorder %s67, %s69
      %p73 = scmp.eq.s32.totalorder %s12, 0
      %p74 = por %p72, %p73
      %p75 = scmp.ne.s32.totalorder %s67, %s69
      %p76 = scmp.eq.s32.totalorder %s17, 1
      %p77 = por %p75, %p76
      %p78 = scmp.ne.s32.totalorder %s69, %s70
      %p79 = scmp.eq.s32.totalorder %s17, 0
      %p80 = por %p78, %p79
      %p81 = scmp.ne.s32.totalorder %s69, %s70
      %p82 = scmp.eq.s32.totalorder %s18, 1
      %p83 = por %p81, %p82
      %p85 = scmp.ne.s32.totalorder %s70, %s84
      %p86 = scmp.eq.s32.totalorder %s18, 0
      %p87 = por %p85, %p86
      %s88 = ssub.s32 %s12, %s19
      %p89 = scmp.eq.s32.totalorder %s88, 0
      %s91 = sadd.s32 %s90, 1
      %s92 = scalar_select %p89, %s90, %s91
      %p95 = pneg %p89
      %p96 = scmp.eq.s32.totalorder %s12, 1
      %p97 = por %p95, %p96
      %p98 = scmp.ne.s32.totalorder %s90, %s93
      %p99 = scmp.eq.s32.totalorder %s12, 0
      %p100 = por %p98, %p99
      %p101 = scmp.ne.s32.totalorder %s90, %s93
      %p102 = scmp.eq.s32.totalorder %s17, 1
      %p103 = por %p101, %p102
      %p104 = scmp.ne.s32.totalorder %s93, %s94
      %p105 = scmp.eq.s32.totalorder %s17, 0
      %p106 = por %p104, %p105
      %p107 = scmp.ne.s32.totalorder %s93, %s94
      %p108 = scmp.eq.s32.totalorder %s18, 1
      %p109 = por %p107, %p108
      %p111 = scmp.ne.s32.totalorder %s94, %s110
      %p112 = scmp.eq.s32.totalorder %s18, 0
      %p113 = por %p111, %p112
      %p114 = scmp.le.s32.totalorder 1, %s12
      %p115 = scmp.lt.s32.totalorder %s12, 3
      %p116 = pnand %p114, %p115
      %p117 = pneg %p116
      // Predicated region
      $region9: #{tpu_custom_call.1} parent=5 // pred_check
        _
      $region10: #{tpu_custom_call.1} parent=5 // pred_check_branch
        %119 = sbr.rel (%p116) target = $region12
      $region11: #{tpu_custom_call.1} parent=5 // pred_region
        %s120 = ssub.s32 %s12, 1
        // Predicated region
        $region13: #{tpu_custom_call.1} parent=11 // pred_check
          %p121 = pneg %p59
        $region14: #{tpu_custom_call.1} parent=11 // pred_check_branch
          %123 = sbr.rel (%p121) target = $region16
        $region15: #{tpu_custom_call.1} parent=11 // pred_region
          _
        $region16: #{tpu_custom_call.1} parent=11 // pred_fallthru
          _
        // Predicated region
        $region17: #{tpu_custom_call.1} parent=11 // pred_check
          %p124 = pneg %p80
        $region18: #{tpu_custom_call.1} parent=11 // pred_check_branch
          %126 = sbr.rel (%p124) target = $region20
        $region19: #{tpu_custom_call.1} parent=11 // pred_region
          _
        $region20: #{tpu_custom_call.1} parent=11 // pred_fallthru
          _
      $region12: #{tpu_custom_call.1} parent=5 // pred_fallthru
        _
      %p127 = scmp.lt.s32.totalorder %s12, 2
      // Predicated region
      $region21: #{tpu_custom_call.1} parent=5 // pred_check
        %p128 = pneg %p127
      $region22: #{tpu_custom_call.1} parent=5 // pred_check_branch
        %130 = sbr.rel (%p128) target = $region24
      $region23: #{tpu_custom_call.1} parent=5 // pred_region
        // Predicated region
        $region25: #{tpu_custom_call.1} parent=23 // pred_check
          %p131 = pneg %p32
        $region26: #{tpu_custom_call.1} parent=23 // pred_check_branch
          %133 = sbr.rel (%p131) target = $region28
        $region27: #{tpu_custom_call.1} parent=23 // pred_region
          %p134 = scmp.lt.s32.totalorder %s12, 1
          %s135 = scalar_select %p134, %s12, 1
          %s136 = smul.addr %s135, 54
          %s137 = smul.addr %s136, 8
          %s138 = scalar_lea.vmem %s0, %s137
        $region28: #{tpu_custom_call.1} parent=23 // pred_fallthru
          _
      $region24: #{tpu_custom_call.1} parent=5 // pred_fallthru
        _
      %p139 = scmp.le.s32.totalorder 1, %s12
      %p140 = scmp.lt.s32.totalorder %s12, 3
      %p141 = pnand %p139, %p140
      %p142 = pneg %p141
      // Predicated region
      $region29: #{tpu_custom_call.1} parent=5 // pred_check
        _
      $region30: #{tpu_custom_call.1} parent=5 // pred_check_branch
        %144 = sbr.rel (%p141) target = $region32
      $region31: #{tpu_custom_call.1} parent=5 // pred_region
        %s145 = ssub.s32 %s12, 1
        %p146 = scmp.lt.s32.totalorder %s17, 1
        %s147 = scalar_select %p146, %s17, 1
        %s148 = smul.addr %s147, 54
        %s149 = smul.addr %s148, 8
        %s150 = scalar_lea.vmem %s0, %s149
        %p151 = pneg %p38
        %p152 = pneg %p35
        %p153 = pneg %p59
        %p154 = pneg %p56
        %p155 = pneg %p80
        %p156 = pneg %p77
        %p157 = pneg %p106
        %p158 = pneg %p103
        %s159 = sand.u32 %s93, 1
        %s160 = scalar_lea.sflag [#allocation4], %s159
        %s161 = sand.u32 %s93, 1
        %s162 = smul.addr %s161, 256
        %s163 = scalar_lea.vmem [#allocation3], %s162
        %p164 = scmp.lt.s32.totalorder %s17, 1
        %s165 = scalar_select %p164, %s17, 1
        %s166 = smul.addr %s165, 54
        %s167 = smul.addr %s166, 8
        %s168 = scalar_lea.vmem %s0, %s167
        %v169 = vld [vmem:[%s2] sm:$0x1]
        %v171 = vlaneseq
        %v172 = vshrl.u32 %v171, 7
        %v173 = vsub.s32 0, %v172
        %v174 = vrot.slane %v169, %v173
        %176 = vst [vmem:[#allocation2] sm:$0xff] %v174
        %177 = vst [vmem:[#allocation2 + $0x8] sm:$0xff] %v174
        %178 = vst [vmem:[#allocation2 + $0x10] sm:$0xff] %v174
        %179 = vst [vmem:[#allocation2 + $0x18] sm:$0xff] %v174
        %180 = vst [vmem:[#allocation2 + $0x20] sm:$0xff] %v174
        %181 = vst [vmem:[#allocation2 + $0x28] sm:$0xff] %v174
        %182 = vst [vmem:[#allocation2 + $0x30] sm:$0xff] %v174
        %183 = vst [vmem:[#allocation2 + $0x38] sm:$0xff] %v174
        %184 = vst [vmem:[#allocation2 + $0x40] sm:$0xff] %v174
        %185 = vst [vmem:[#allocation2 + $0x48] sm:$0xff] %v174
        %186 = vst [vmem:[#allocation2 + $0x50] sm:$0xff] %v174
        %187 = vst [vmem:[#allocation2 + $0x58] sm:$0xff] %v174
        %188 = vst [vmem:[#allocation2 + $0x60] sm:$0xff] %v174
        %189 = vst [vmem:[#allocation2 + $0x68] sm:$0xff] %v174
        %190 = vst [vmem:[#allocation2 + $0x70] sm:$0xff] %v174
        %191 = vst [vmem:[#allocation2 + $0x78] sm:$0xff] %v174
        %192 = vst [vmem:[#allocation2 + $0x80] sm:$0xff] %v174
        %193 = vst [vmem:[#allocation2 + $0x88] sm:$0xff] %v174
        %194 = vst [vmem:[#allocation2 + $0x90] sm:$0xff] %v174
        %195 = vst [vmem:[#allocation2 + $0x98] sm:$0xff] %v174
        %196 = vst [vmem:[#allocation2 + $0xa0] sm:$0xff] %v174
        %197 = vst [vmem:[#allocation2 + $0xa8] sm:$0xff] %v174
        %198 = vst [vmem:[#allocation2 + $0xb0] sm:$0xff] %v174
        %199 = vst [vmem:[#allocation2 + $0xb8] sm:$0xff] %v174
        %200 = vst [vmem:[#allocation2 + $0xc0] sm:$0xff] %v174
        %201 = vst [vmem:[#allocation2 + $0xc8] sm:$0xff] %v174
        %202 = vst [vmem:[#allocation2 + $0xd0] sm:$0xff] %v174
        %203 = vst [vmem:[#allocation2 + $0xd8] sm:$0xff] %v174
        %204 = vst [vmem:[#allocation2 + $0xe0] sm:$0xff] %v174
        %205 = vst [vmem:[#allocation2 + $0xe8] sm:$0xff] %v174
        %206 = vst [vmem:[#allocation2 + $0xf0] sm:$0xff] %v174
        %207 = vst [vmem:[#allocation2 + $0xf8] sm:$0xff] %v174
        %v208 = vld [vmem:[%s168] sm:$0xff]
        %v209 = vld [vmem:[%s168 + $0x8] sm:$0xff]
        %v210 = vld [vmem:[%s168 + $0x18] sm:$0xff]
        %v211 = vld [vmem:[%s168 + $0x20] sm:$0xff]
        %v212 = vld [vmem:[%s168 + $0x30] sm:$0xff]
        %v213 = vld [vmem:[%s168 + $0x38] sm:$0xff]
        %v214 = vld [vmem:[%s168 + $0x48] sm:$0xff]
        %v215 = vld [vmem:[%s168 + $0x50] sm:$0xff]
        %v216 = vld [vmem:[%s168 + $0x60] sm:$0xff]
        %v217 = vld [vmem:[%s168 + $0x68] sm:$0xff]
        %v218 = vld [vmem:[%s168 + $0x78] sm:$0xff]
        %v219 = vld [vmem:[%s168 + $0x80] sm:$0xff]
        %v220 = vld [vmem:[%s168 + $0x90] sm:$0xff]
        %v221 = vld [vmem:[%s168 + $0x98] sm:$0xff]
        %v222 = vld [vmem:[%s168 + $0xa8] sm:$0xff]
        %v223 = vld [vmem:[%s168 + $0xb0] sm:$0xff]
        %v224 = vld [vmem:[%s168 + $0xc0] sm:$0xff]
        %v225 = vld [vmem:[%s168 + $0xc8] sm:$0xff]
        %v226 = vld [vmem:[%s168 + $0xd8] sm:$0xff]
        %v227 = vld [vmem:[%s168 + $0xe0] sm:$0xff]
        %v228 = vld [vmem:[%s168 + $0xf0] sm:$0xff]
        %v229 = vld [vmem:[%s168 + $0xf8] sm:$0xff]
        %v230 = vld [vmem:[%s168 + $0x108] sm:$0xff]
        %v231 = vld [vmem:[%s168 + $0x110] sm:$0xff]
        %v232 = vld [vmem:[%s168 + $0x120] sm:$0xff]
        %v233 = vld [vmem:[%s168 + $0x128] sm:$0xff]
        %v234 = vld [vmem:[%s168 + $0x138] sm:$0xff]
        %v235 = vld [vmem:[%s168 + $0x140] sm:$0xff]
        %v236 = vld [vmem:[%s168 + $0x150] sm:$0xff]
        %v237 = vld [vmem:[%s168 + $0x158] sm:$0xff]
        %v238 = vld [vmem:[%s168 + $0x168] sm:$0xff]
        %v239 = vld [vmem:[%s168 + $0x170] sm:$0xff]
        %v240 = vld [vmem:[#allocation2] sm:$0xff]
        %v241 = vld [vmem:[#allocation2 + $0x8] sm:$0xff]
        %v242 = vld [vmem:[#allocation2 + $0x10] sm:$0xff]
        %v243 = vld [vmem:[#allocation2 + $0x18] sm:$0xff]
        %v244 = vld [vmem:[#allocation2 + $0x20] sm:$0xff]
        %v245 = vld [vmem:[#allocation2 + $0x28] sm:$0xff]
        %v246 = vld [vmem:[#allocation2 + $0x30] sm:$0xff]
        %v247 = vld [vmem:[#allocation2 + $0x38] sm:$0xff]
        %v248 = vld [vmem:[#allocation2 + $0x40] sm:$0xff]
        %v249 = vld [vmem:[#allocation2 + $0x48] sm:$0xff]
        %v250 = vld [vmem:[#allocation2 + $0x50] sm:$0xff]
        %v251 = vld [vmem:[#allocation2 + $0x58] sm:$0xff]
        %v252 = vld [vmem:[#allocation2 + $0x60] sm:$0xff]
        %v253 = vld [vmem:[#allocation2 + $0x68] sm:$0xff]
        %v254 = vld [vmem:[#allocation2 + $0x70] sm:$0xff]
        %v255 = vld [vmem:[#allocation2 + $0x78] sm:$0xff]
        %v256 = vld [vmem:[#allocation2 + $0x80] sm:$0xff]
        %v257 = vld [vmem:[#allocation2 + $0x88] sm:$0xff]
        %v258 = vld [vmem:[#allocation2 + $0x90] sm:$0xff]
        %v259 = vld [vmem:[#allocation2 + $0x98] sm:$0xff]
        %v260 = vld [vmem:[#allocation2 + $0xa0] sm:$0xff]
        %v261 = vld [vmem:[#allocation2 + $0xa8] sm:$0xff]
        %v262 = vld [vmem:[#allocation2 + $0xb0] sm:$0xff]
        %v263 = vld [vmem:[#allocation2 + $0xb8] sm:$0xff]
        %v264 = vld [vmem:[#allocation2 + $0xc0] sm:$0xff]
        %v265 = vld [vmem:[#allocation2 + $0xc8] sm:$0xff]
        %v266 = vld [vmem:[#allocation2 + $0xd0] sm:$0xff]
        %v267 = vld [vmem:[#allocation2 + $0xd8] sm:$0xff]
        %v268 = vld [vmem:[#allocation2 + $0xe0] sm:$0xff]
        %v269 = vld [vmem:[#allocation2 + $0xe8] sm:$0xff]
        %v270 = vld [vmem:[#allocation2 + $0xf0] sm:$0xff]
        %v271 = vld [vmem:[#allocation2 + $0xf8] sm:$0xff]
        %v272 = vld [vmem:[%s1] sm:$0xf]
        %vm273 = vcmask 31744
        %v275 = vsel %vm273, %v208, 0
        %v278 = vsel %vm273, %v209, 0
        %v281 = vsel %vm273, %v210, 0
        %v284 = vsel %vm273, %v211, 0
        %v287 = vsel %vm273, %v212, 0
        %v290 = vsel %vm273, %v213, 0
        %v293 = vsel %vm273, %v214, 0
        %v296 = vsel %vm273, %v215, 0
        %v299 = vsel %vm273, %v216, 0
        %v302 = vsel %vm273, %v217, 0
        %v305 = vsel %vm273, %v218, 0
        %v308 = vsel %vm273, %v219, 0
        %v311 = vsel %vm273, %v220, 0
        %v314 = vsel %vm273, %v221, 0
        %v317 = vsel %vm273, %v222, 0
        %v320 = vsel %vm273, %v223, 0
        %v323 = vsel %vm273, %v224, 0
        %v326 = vsel %vm273, %v225, 0
        %v329 = vsel %vm273, %v226, 0
        %v332 = vsel %vm273, %v227, 0
        %v335 = vsel %vm273, %v228, 0
        %v338 = vsel %vm273, %v229, 0
        %v341 = vsel %vm273, %v230, 0
        %v344 = vsel %vm273, %v231, 0
        %v347 = vsel %vm273, %v232, 0
        %v350 = vsel %vm273, %v233, 0
        %v353 = vsel %vm273, %v234, 0
        %v356 = vsel %vm273, %v235, 0
        %v359 = vsel %vm273, %v236, 0
        %v362 = vsel %vm273, %v237, 0
        %v365 = vsel %vm273, %v238, 0
        %v368 = vsel %vm273, %v239, 0
        %vm370 = vcmask 1043456
        %v372 = vsel %vm370, %v272, 0
        %374 = vmatprep.subr.mxu0 0.0
        %375 = vmatpush1.msra.mxu0 %v372
        %376 = vmatprep.subr.mxu0 0.0
        %377 = vmatpush1.msra.mxu0 0.0
        %378 = vmatprep.subr.mxu0 0.0
        %379 = vmatpush1.msra.mxu0 0.0
        %380 = vmatprep.subr.mxu0 0.0
        %381 = vmatpush1.msra.mxu0 0.0
        %382 = vmatprep.subr.mxu0 0.0
        %383 = vmatpush1.msra.mxu0 0.0
        %384 = vmatprep.subr.mxu0 0.0
        %385 = vmatpush1.msra.mxu0 0.0
        %386 = vmatprep.subr.mxu0 0.0
        %387 = vmatpush1.msra.mxu0 0.0
        %388 = vmatprep.subr.mxu0 0.0
        %389 = vmatpush1.msra.mxu0 0.0
        %390 = vmatprep.subr.mxu0 0.0
        %391 = vmatpush1.msra.mxu0 0.0
        %392 = vmatprep.subr.mxu0 0.0
        %393 = vmatpush1.msra.mxu0 0.0
        %394 = vmatprep.subr.mxu0 0.0
        %395 = vmatpush1.msra.mxu0 0.0
        %396 = vmatprep.subr.mxu0 0.0
        %397 = vmatpush1.msra.mxu0 0.0
        %398 = vmatprep.subr.mxu0 0.0
        %399 = vmatpush1.msra.mxu0 0.0
        %400 = vmatprep.subr.mxu0 0.0
        %401 = vmatpush1.msra.mxu0 0.0
        %402 = vmatprep.subr.mxu0 0.0
        %403 = vmatpush1.msra.mxu0 0.0
        %404 = vmatprep.subr.mxu0 0.0
        %405 = vmatpush1.msra.mxu0 0.0
        %406 = vmatprep.subr.mxu0 0.0
        %407 = vmatpush1.msra.mxu0 0.0
        %408 = vmatprep.subr.mxu0 0.0
        %409 = vmatpush1.msra.mxu0 0.0
        %410 = vmatprep.subr.mxu0 0.0
        %411 = vmatpush1.msra.mxu0 0.0
        %412 = vmatprep.subr.mxu0 0.0
        %413 = vmatpush1.msra.mxu0 0.0
        %414 = vmatprep.subr.mxu0 0.0
        %415 = vmatpush1.msra.mxu0 0.0
        %416 = vmatprep.subr.mxu0 0.0
        %417 = vmatpush1.msra.mxu0 0.0
        %418 = vmatprep.subr.mxu0 0.0
        %419 = vmatpush1.msra.mxu0 0.0
        %420 = vmatprep.subr.mxu0 0.0
        %421 = vmatpush1.msra.mxu0 0.0
        %422 = vmatprep.subr.mxu0 0.0
        %423 = vmatpush1.msra.mxu0 0.0
        %424 = vmatprep.subr.mxu0 0.0
        %425 = vmatpush1.msra.mxu0 0.0
        %426 = vmatprep.subr.mxu0 0.0
        %427 = vmatpush1.msra.mxu0 0.0
        %428 = vmatprep.subr.mxu0 0.0
        %429 = vmatpush1.msra.mxu0 0.0
        %430 = vmatprep.subr.mxu0 0.0
        %431 = vmatpush1.msra.mxu0 0.0
        %432 = vmatprep.subr.mxu0 0.0
        %433 = vmatpush1.msra.mxu0 0.0
        %434 = vmatprep.subr.mxu0 0.0
        %435 = vmatpush1.msra.mxu0 0.0
        %436 = vmatprep.subr.mxu0 0.0
        %437 = vmatpush1.msra.mxu0 0.0
        %438 = vmatprep.mubr.f32.mxu0 0.0
        %439 = vmatmul.mubr.f32.gmra.mrb[0].mxu0 %v275
        %v440 = vpop.f32.mrb[0].mxu0
        %v441 = vadd.f32 0.0, %v440
        %v442 = vpop.f32.mrb[0].mxu0
        %443 = vmatprep.mubr.f32.mxu0 0.0
        %444 = vmatmul.mubr.f32.gmra.mrb[0].mxu0 %v278
        %v445 = vpop.f32.mrb[0].mxu0
        %v446 = vadd.f32 0.0, %v445
        %v447 = vpop.f32.mrb[0].mxu0
        %448 = vmatprep.mubr.f32.mxu0 0.0
        %449 = vmatmul.mubr.f32.gmra.mrb[0].mxu0 %v281
        %v450 = vpop.f32.mrb[0].mxu0
        %v451 = vadd.f32 0.0, %v450
        %v452 = vpop.f32.mrb[0].mxu0
        %453 = vmatprep.mubr.f32.mxu0 0.0
        %454 = vmatmul.mubr.f32.gmra.mrb[0].mxu0 %v284
        %v455 = vpop.f32.mrb[0].mxu0
        %v456 = vadd.f32 0.0, %v455
        %v457 = vpop.f32.mrb[0].mxu0
        %458 = vmatprep.mubr.f32.mxu0 0.0
        %459 = vmatmul.mubr.f32.gmra.mrb[0].mxu0 %v287
        %v460 = vpop.f32.mrb[0].mxu0
        %v461 = vadd.f32 0.0, %v460
        %v462 = vpop.f32.mrb[0].mxu0
        %463 = vmatprep.mubr.f32.mxu0 0.0
        %464 = vmatmul.mubr.f32.gmra.mrb[0].mxu0 %v290
        %v465 = vpop.f32.mrb[0].mxu0
        %v466 = vadd.f32 0.0, %v465
        %v467 = vpop.f32.mrb[0].mxu0
        %468 = vmatprep.mubr.f32.mxu0 0.0
        %469 = vmatmul.mubr.f32.gmra.mrb[0].mxu0 %v293
        %v470 = vpop.f32.mrb[0].mxu0
        %v471 = vadd.f32 0.0, %v470
        %v472 = vpop.f32.mrb[0].mxu0
        %473 = vmatprep.mubr.f32.mxu0 0.0
        %474 = vmatmul.mubr.f32.gmra.mrb[0].mxu0 %v296
        %v475 = vpop.f32.mrb[0].mxu0
        %v476 = vadd.f32 0.0, %v475
        %v477 = vpop.f32.mrb[0].mxu0
        %478 = vmatprep.mubr.f32.mxu0 0.0
        %479 = vmatmul.mubr.f32.gmra.mrb[0].mxu0 %v299
        %v480 = vpop.f32.mrb[0].mxu0
        %v481 = vadd.f32 0.0, %v480
        %v482 = vpop.f32.mrb[0].mxu0
        %483 = vmatprep.mubr.f32.mxu0 0.0
        %484 = vmatmul.mubr.f32.gmra.mrb[0].mxu0 %v302
        %v485 = vpop.f32.mrb[0].mxu0
        %v486 = vadd.f32 0.0, %v485
        %v487 = vpop.f32.mrb[0].mxu0
        %488 = vmatprep.mubr.f32.mxu0 0.0
        %489 = vmatmul.mubr.f32.gmra.mrb[0].mxu0 %v305
        %v490 = vpop.f32.mrb[0].mxu0
        %v491 = vadd.f32 0.0, %v490
        %v492 = vpop.f32.mrb[0].mxu0
        %493 = vmatprep.mubr.f32.mxu0 0.0
        %494 = vmatmul.mubr.f32.gmra.mrb[0].mxu0 %v308
        %v495 = vpop.f32.mrb[0].mxu0
        %v496 = vadd.f32 0.0, %v495
        %v497 = vpop.f32.mrb[0].mxu0
        %498 = vmatprep.mubr.f32.mxu0 0.0
        %499 = vmatmul.mubr.f32.gmra.mrb[0].mxu0 %v311
        %v500 = vpop.f32.mrb[0].mxu0
        %v501 = vadd.f32 0.0, %v500
        %v502 = vpop.f32.mrb[0].mxu0
        %503 = vmatprep.mubr.f32.mxu0 0.0
        %504 = vmatmul.mubr.f32.gmra.mrb[0].mxu0 %v314
        %v505 = vpop.f32.mrb[0].mxu0
        %v506 = vadd.f32 0.0, %v505
        %v507 = vpop.f32.mrb[0].mxu0
        %508 = vmatprep.mubr.f32.mxu0 0.0
        %509 = vmatmul.mubr.f32.gmra.mrb[0].mxu0 %v317
        %v510 = vpop.f32.mrb[0].mxu0
        %v511 = vadd.f32 0.0, %v510
        %v512 = vpop.f32.mrb[0].mxu0
        %513 = vmatprep.mubr.f32.mxu0 0.0
        %514 = vmatmul.mubr.f32.gmra.mrb[0].mxu0 %v320
        %v515 = vpop.f32.mrb[0].mxu0
        %v516 = vadd.f32 0.0, %v515
        %v517 = vpop.f32.mrb[0].mxu0
        %518 = vmatprep.mubr.f32.mxu0 0.0
        %519 = vmatmul.mubr.f32.gmra.mrb[0].mxu0 %v323
        %v520 = vpop.f32.mrb[0].mxu0
        %v521 = vadd.f32 0.0, %v520
        %v522 = vpop.f32.mrb[0].mxu0
        %523 = vmatprep.mubr.f32.mxu0 0.0
        %524 = vmatmul.mubr.f32.gmra.mrb[0].mxu0 %v326
        %v525 = vpop.f32.mrb[0].mxu0
        %v526 = vadd.f32 0.0, %v525
        %v527 = vpop.f32.mrb[0].mxu0
        %528 = vmatprep.mubr.f32.mxu0 0.0
        %529 = vmatmul.mubr.f32.gmra.mrb[0].mxu0 %v329
        %v530 = vpop.f32.mrb[0].mxu0
        %v531 = vadd.f32 0.0, %v530
        %v532 = vpop.f32.mrb[0].mxu0
        %533 = vmatprep.mubr.f32.mxu0 0.0
        %534 = vmatmul.mubr.f32.gmra.mrb[0].mxu0 %v332
        %v535 = vpop.f32.mrb[0].mxu0
        %v536 = vadd.f32 0.0, %v535
        %v537 = vpop.f32.mrb[0].mxu0
        %538 = vmatprep.mubr.f32.mxu0 0.0
        %539 = vmatmul.mubr.f32.gmra.mrb[0].mxu0 %v335
        %v540 = vpop.f32.mrb[0].mxu0
        %v541 = vadd.f32 0.0, %v540
        %v542 = vpop.f32.mrb[0].mxu0
        %543 = vmatprep.mubr.f32.mxu0 0.0
        %544 = vmatmul.mubr.f32.gmra.mrb[0].mxu0 %v338
        %v545 = vpop.f32.mrb[0].mxu0
        %v546 = vadd.f32 0.0, %v545
        %v547 = vpop.f32.mrb[0].mxu0
        %548 = vmatprep.mubr.f32.mxu0 0.0
        %549 = vmatmul.mubr.f32.gmra.mrb[0].mxu0 %v341
        %v550 = vpop.f32.mrb[0].mxu0
        %v551 = vadd.f32 0.0, %v550
        %v552 = vpop.f32.mrb[0].mxu0
        %553 = vmatprep.mubr.f32.mxu0 0.0
        %554 = vmatmul.mubr.f32.gmra.mrb[0].mxu0 %v344
        %v555 = vpop.f32.mrb[0].mxu0
        %v556 = vadd.f32 0.0, %v555
        %v557 = vpop.f32.mrb[0].mxu0
        %558 = vmatprep.mubr.f32.mxu0 0.0
        %559 = vmatmul.mubr.f32.gmra.mrb[0].mxu0 %v347
        %v560 = vpop.f32.mrb[0].mxu0
        %v561 = vadd.f32 0.0, %v560
        %v562 = vpop.f32.mrb[0].mxu0
        %563 = vmatprep.mubr.f32.mxu0 0.0
        %564 = vmatmul.mubr.f32.gmra.mrb[0].mxu0 %v350
        %v565 = vpop.f32.mrb[0].mxu0
        %v566 = vadd.f32 0.0, %v565
        %v567 = vpop.f32.mrb[0].mxu0
        %568 = vmatprep.mubr.f32.mxu0 0.0
        %569 = vmatmul.mubr.f32.gmra.mrb[0].mxu0 %v353
        %v570 = vpop.f32.mrb[0].mxu0
        %v571 = vadd.f32 0.0, %v570
        %v572 = vpop.f32.mrb[0].mxu0
        %573 = vmatprep.mubr.f32.mxu0 0.0
        %574 = vmatmul.mubr.f32.gmra.mrb[0].mxu0 %v356
        %v575 = vpop.f32.mrb[0].mxu0
        %v576 = vadd.f32 0.0, %v575
        %v577 = vpop.f32.mrb[0].mxu0
        %578 = vmatprep.mubr.f32.mxu0 0.0
        %579 = vmatmul.mubr.f32.gmra.mrb[0].mxu0 %v359
        %v580 = vpop.f32.mrb[0].mxu0
        %v581 = vadd.f32 0.0, %v580
        %v582 = vpop.f32.mrb[0].mxu0
        %583 = vmatprep.mubr.f32.mxu0 0.0
        %584 = vmatmul.mubr.f32.gmra.mrb[0].mxu0 %v362
        %v585 = vpop.f32.mrb[0].mxu0
        %v586 = vadd.f32 0.0, %v585
        %v587 = vpop.f32.mrb[0].mxu0
        %588 = vmatprep.mubr.f32.mxu0 0.0
        %589 = vmatmul.mubr.f32.gmra.mrb[0].mxu0 %v365
        %v590 = vpop.f32.mrb[0].mxu0
        %v591 = vadd.f32 0.0, %v590
        %v592 = vpop.f32.mrb[0].mxu0
        %593 = vmatprep.mubr.f32.mxu0 0.0
        %594 = vmatmul.mubr.f32.gmra.mrb[0].mxu0 %v368
        %v595 = vpop.f32.mrb[0].mxu0
        %v596 = vadd.f32 0.0, %v595
        %v597 = vpop.f32.mrb[0].mxu0
        %598 = vdwg.mxu0
        %v599 = vadd.f32 %v240, %v441
        %v600 = vadd.f32 %v241, %v446
        %v601 = vadd.f32 %v242, %v451
        %v602 = vadd.f32 %v243, %v456
        %v603 = vadd.f32 %v244, %v461
        %v604 = vadd.f32 %v245, %v466
        %v605 = vadd.f32 %v246, %v471
        %v606 = vadd.f32 %v247, %v476
        %v607 = vadd.f32 %v248, %v481
        %v608 = vadd.f32 %v249, %v486
        %v609 = vadd.f32 %v250, %v491
        %v610 = vadd.f32 %v251, %v496
        %v611 = vadd.f32 %v252, %v501
        %v612 = vadd.f32 %v253, %v506
        %v613 = vadd.f32 %v254, %v511
        %v614 = vadd.f32 %v255, %v516
        %v615 = vadd.f32 %v256, %v521
        %v616 = vadd.f32 %v257, %v526
        %v617 = vadd.f32 %v258, %v531
        %v618 = vadd.f32 %v259, %v536
        %v619 = vadd.f32 %v260, %v541
        %v620 = vadd.f32 %v261, %v546
        %v621 = vadd.f32 %v262, %v551
        %v622 = vadd.f32 %v263, %v556
        %v623 = vadd.f32 %v264, %v561
        %v624 = vadd.f32 %v265, %v566
        %v625 = vadd.f32 %v266, %v571
        %v626 = vadd.f32 %v267, %v576
        %v627 = vadd.f32 %v268, %v581
        %v628 = vadd.f32 %v269, %v586
        %v629 = vadd.f32 %v270, %v591
        %v630 = vadd.f32 %v271, %v596
        %631 = vst [vmem:[#allocation2] sm:$0xff] %v599
        %632 = vst [vmem:[#allocation2 + $0x8] sm:$0xff] %v600
        %633 = vst [vmem:[#allocation2 + $0x10] sm:$0xff] %v601
        %634 = vst [vmem:[#allocation2 + $0x18] sm:$0xff] %v602
        %635 = vst [vmem:[#allocation2 + $0x20] sm:$0xff] %v603
        %636 = vst [vmem:[#allocation2 + $0x28] sm:$0xff] %v604
        %637 = vst [vmem:[#allocation2 + $0x30] sm:$0xff] %v605
        %638 = vst [vmem:[#allocation2 + $0x38] sm:$0xff] %v606
        %639 = vst [vmem:[#allocation2 + $0x40] sm:$0xff] %v607
        %640 = vst [vmem:[#allocation2 + $0x48] sm:$0xff] %v608
        %641 = vst [vmem:[#allocation2 + $0x50] sm:$0xff] %v609
        %642 = vst [vmem:[#allocation2 + $0x58] sm:$0xff] %v610
        %643 = vst [vmem:[#allocation2 + $0x60] sm:$0xff] %v611
        %644 = vst [vmem:[#allocation2 + $0x68] sm:$0xff] %v612
        %645 = vst [vmem:[#allocation2 + $0x70] sm:$0xff] %v613
        %646 = vst [vmem:[#allocation2 + $0x78] sm:$0xff] %v614
        %647 = vst [vmem:[#allocation2 + $0x80] sm:$0xff] %v615
        %648 = vst [vmem:[#allocation2 + $0x88] sm:$0xff] %v616
        %649 = vst [vmem:[#allocation2 + $0x90] sm:$0xff] %v617
        %650 = vst [vmem:[#allocation2 + $0x98] sm:$0xff] %v618
        %651 = vst [vmem:[#allocation2 + $0xa0] sm:$0xff] %v619
        %652 = vst [vmem:[#allocation2 + $0xa8] sm:$0xff] %v620
        %653 = vst [vmem:[#allocation2 + $0xb0] sm:$0xff] %v621
        %654 = vst [vmem:[#allocation2 + $0xb8] sm:$0xff] %v622
        %655 = vst [vmem:[#allocation2 + $0xc0] sm:$0xff] %v623
        %656 = vst [vmem:[#allocation2 + $0xc8] sm:$0xff] %v624
        %657 = vst [vmem:[#allocation2 + $0xd0] sm:$0xff] %v625
        %658 = vst [vmem:[#allocation2 + $0xd8] sm:$0xff] %v626
        %659 = vst [vmem:[#allocation2 + $0xe0] sm:$0xff] %v627
        %660 = vst [vmem:[#allocation2 + $0xe8] sm:$0xff] %v628
        %661 = vst [vmem:[#allocation2 + $0xf0] sm:$0xff] %v629
        %662 = vst [vmem:[#allocation2 + $0xf8] sm:$0xff] %v630
        %v663 = vld [vmem:[%s168 + $0x1] sm:$0xff]
        %v664 = vld [vmem:[%s168 + $0x9] sm:$0xff]
        %v665 = vld [vmem:[%s168 + $0x19] sm:$0xff]
        %v666 = vld [vmem:[%s168 + $0x21] sm:$0xff]
        %v667 = vld [vmem:[%s168 + $0x31] sm:$0xff]
        %v668 = vld [vmem:[%s168 + $0x39] sm:$0xff]
        %v669 = vld [vmem:[%s168 + $0x49] sm:$0xff]
        %v670 = vld [vmem:[%s168 + $0x51] sm:$0xff]
        %v671 = vld [vmem:[%s168 + $0x61] sm:$0xff]
        %v672 = vld [vmem:[%s168 + $0x69] sm:$0xff]
        %v673 = vld [vmem:[%s168 + $0x79] sm:$0xff]
        %v674 = vld [vmem:[%s168 + $0x81] sm:$0xff]
        %v675 = vld [vmem:[%s168 + $0x91] sm:$0xff]
        %v676 = vld [vmem:[%s168 + $0x99] sm:$0xff]
        %v677 = vld [vmem:[%s168 + $0xa9] sm:$0xff]
        %v678 = vld [vmem:[%s168 + $0xb1] sm:$0xff]
        %v679 = vld [vmem:[%s168 + $0xc1] sm:$0xff]
        %v680 = vld [vmem:[%s168 + $0xc9] sm:$0xff]
        %v681 = vld [vmem:[%s168 + $0xd9] sm:$0xff]
        %v682 = vld [vmem:[%s168 + $0xe1] sm:$0xff]
        %v683 = vld [vmem:[%s168 + $0xf1] sm:$0xff]
        %v684 = vld [vmem:[%s168 + $0xf9] sm:$0xff]
        %v685 = vld [vmem:[%s168 + $0x109] sm:$0xff]
        %v686 = vld [vmem:[%s168 + $0x111] sm:$0xff]
        %v687 = vld [vmem:[%s168 + $0x121] sm:$0xff]
        %v688 = vld [vmem:[%s168 + $0x129] sm:$0xff]
        %v689 = vld [vmem:[%s168 + $0x139] sm:$0xff]
        %v690 = vld [vmem:[%s168 + $0x141] sm:$0xff]
        %v691 = vld [vmem:[%s168 + $0x151] sm:$0xff]
        %v692 = vld [vmem:[%s168 + $0x159] sm:$0xff]
        %v693 = vld [vmem:[%s168 + $0x169] sm:$0xff]
        %v694 = vld [vmem:[%s168 + $0x171] sm:$0xff]
        %v695 = vld [vmem:[#allocation2] sm:$0xff]
        %v696 = vld [vmem:[#allocation2 + $0x8] sm:$0xff]
        %v697 = vld [vmem:[#allocation2 + $0x10] sm:$0xff]
        %v698 = vld [vmem:[#allocation2 + $0x18] sm:$0xff]
        %v699 = vld [vmem:[#allocation2 + $0x20] sm:$0xff]
        %v700 = vld [vmem:[#allocation2 + $0x28] sm:$0xff]
        %v701 = vld [vmem:[#allocation2 + $0x30] sm:$0xff]
        %v702 = vld [vmem:[#allocation2 + $0x38] sm:$0xff]
        %v703 = vld [vmem:[#allocation2 + $0x40] sm:$0xff]
        %v704 = vld [vmem:[#allocation2 + $0x48] sm:$0xff]
        %v705 = vld [vmem:[#allocation2 + $0x50] sm:$0xff]
        %v706 = vld [vmem:[#allocation2 + $0x58] sm:$0xff]
        %v707 = vld [vmem:[#allocation2 + $0x60] sm:$0xff]
        %v708 = vld [vmem:[#allocation2 + $0x68] sm:$0xff]
        %v709 = vld [vmem:[#allocation2 + $0x70] sm:$0xff]
        %v710 = vld [vmem:[#allocation2 + $0x78] sm:$0xff]
        %v711 = vld [vmem:[#allocation2 + $0x80] sm:$0xff]
        %v712 = vld [vmem:[#allocation2 + $0x88] sm:$0xff]
        %v713 = vld [vmem:[#allocation2 + $0x90] sm:$0xff]
        %v714 = vld [vmem:[#allocation2 + $0x98] sm:$0xff]
        %v715 = vld [vmem:[#allocation2 + $0xa0] sm:$0xff]
        %v716 = vld [vmem:[#allocation2 + $0xa8] sm:$0xff]
        %v717 = vld [vmem:[#allocation2 + $0xb0] sm:$0xff]
        %v718 = vld [vmem:[#allocation2 + $0xb8] sm:$0xff]
        %v719 = vld [vmem:[#allocation2 + $0xc0] sm:$0xff]
        %v720 = vld [vmem:[#allocation2 + $0xc8] sm:$0xff]
        %v721 = vld [vmem:[#allocation2 + $0xd0] sm:$0xff]
        %v722 = vld [vmem:[#allocation2 + $0xd8] sm:$0xff]
        %v723 = vld [vmem:[#allocation2 + $0xe0] sm:$0xff]
        %v724 = vld [vmem:[#allocation2 + $0xe8] sm:$0xff]
        %v725 = vld [vmem:[#allocation2 + $0xf0] sm:$0xff]
        %v726 = vld [vmem:[#allocation2 + $0xf8] sm:$0xff]
        %s727 = scalar_lea.vmem %s1, 4
        %v728 = vld [vmem:[%s727] sm:$0xf]
        %v730 = vsel %vm273, %v663, 0
        %v733 = vsel %vm273, %v664, 0
        %v736 = vsel %vm273, %v665, 0
        %v739 = vsel %vm273, %v666, 0
        %v742 = vsel %vm273, %v667, 0
        %v745 = vsel %vm273, %v668, 0
        %v748 = vsel %vm273, %v669, 0
        %v751 = vsel %vm273, %v670, 0
        %v754 = vsel %vm273, %v671, 0
        %v757 = vsel %vm273, %v672, 0
        %v760 = vsel %vm273, %v673, 0
        %v763 = vsel %vm273, %v674, 0
        %v766 = vsel %vm273, %v675, 0
        %v769 = vsel %vm273, %v676, 0
        %v772 = vsel %vm273, %v677, 0
        %v775 = vsel %vm273, %v678, 0
        %v778 = vsel %vm273, %v679, 0
        %v781 = vsel %vm273, %v680, 0
        %v784 = vsel %vm273, %v681, 0
        %v787 = vsel %vm273, %v682, 0
        %v790 = vsel %vm273, %v683, 0
        %v793 = vsel %vm273, %v684, 0
        %v796 = vsel %vm273, %v685, 0
        %v799 = vsel %vm273, %v686, 0
        %v802 = vsel %vm273, %v687, 0
        %v805 = vsel %vm273, %v688, 0
        %v808 = vsel %vm273, %v689, 0
        %v811 = vsel %vm273, %v690, 0
        %v814 = vsel %vm273, %v691, 0
        %v817 = vsel %vm273, %v692, 0
        %v820 = vsel %vm273, %v693, 0
        %v823 = vsel %vm273, %v694, 0
        %v826 = vsel %vm370, %v728, 0
        %828 = vmatprep.subr.mxu0 0.0
        %829 = vmatpush1.msra.mxu0 %v826
        %830 = vmatprep.subr.mxu0 0.0
        %831 = vmatpush1.msra.mxu0 0.0
        %832 = vmatprep.subr.mxu0 0.0
        %833 = vmatpush1.msra.mxu0 0.0
        %834 = vmatprep.subr.mxu0 0.0
        %835 = vmatpush1.msra.mxu0 0.0
        %836 = vmatprep.subr.mxu0 0.0
        %837 = vmatpush1.msra.mxu0 0.0
        %838 = vmatprep.subr.mxu0 0.0
        %839 = vmatpush1.msra.mxu0 0.0
        %840 = vmatprep.subr.mxu0 0.0
        %841 = vmatpush1.msra.mxu0 0.0
        %842 = vmatprep.subr.mxu0 0.0
        %843 = vmatpush1.msra.mxu0 0.0
        %844 = vmatprep.subr.mxu0 0.0
        %845 = vmatpush1.msra.mxu0 0.0
        %846 = vmatprep.subr.mxu0 0.0
        %847 = vmatpush1.msra.mxu0 0.0
        %848 = vmatprep.subr.mxu0 0.0
        %849 = vmatpush1.msra.mxu0 0.0
        %850 = vmatprep.subr.mxu0 0.0
        %851 = vmatpush1.msra.mxu0 0.0
        %852 = vmatprep.subr.mxu0 0.0
        %853 = vmatpush1.msra.mxu0 0.0
        %854 = vmatprep.subr.mxu0 0.0
        %855 = vmatpush1.msra.mxu0 0.0
        %856 = vmatprep.subr.mxu0 0.0
        %857 = vmatpush1.msra.mxu0 0.0
        %858 = vmatprep.subr.mxu0 0.0
        %859 = vmatpush1.msra.mxu0 0.0
        %860 = vmatprep.subr.mxu0 0.0
        %861 = vmatpush1.msra.mxu0 0.0
        %862 = vmatprep.subr.mxu0 0.0
        %863 = vmatpush1.msra.mxu0 0.0
        %864 = vmatprep.subr.mxu0 0.0
        %865 = vmatpush1.msra.mxu0 0.0
        %866 = vmatprep.subr.mxu0 0.0
        %867 = vmatpush1.msra.mxu0 0.0
        %868 = vmatprep.subr.mxu0 0.0
        %869 = vmatpush1.msra.mxu0 0.0
        %870 = vmatprep.subr.mxu0 0.0
        %871 = vmatpush1.msra.mxu0 0.0
        %872 = vmatprep.subr.mxu0 0.0
        %873 = vmatpush1.msra.mxu0 0.0
        %874 = vmatprep.subr.mxu0 0.0
        %875 = vmatpush1.msra.mxu0 0.0
        %876 = vmatprep.subr.mxu0 0.0
        %877 = vmatpush1.msra.mxu0 0.0
        %878 = vmatprep.subr.mxu0 0.0
        %879 = vmatpush1.msra.mxu0 0.0
        %880 = vmatprep.subr.mxu0 0.0
        %881 = vmatpush1.msra.mxu0 0.0
        %882 = vmatprep.subr.mxu0 0.0
        %883 = vmatpush1.msra.mxu0 0.0
        %884 = vmatprep.subr.mxu0 0.0
        %885 = vmatpush1.msra.mxu0 0.0
        %886 = vmatprep.subr.mxu0 0.0
        %887 = vmatpush1.msra.mxu0 0.0
        %888 = vmatprep.subr.mxu0 0.0
        %889 = vmatpush1.msra.mxu0 0.0
        %890 = vmatprep.subr.mxu0 0.0
        %891 = vmatpush1.msra.mxu0 0.0
        %892 = vmatprep.mubr.f32.mxu0 0.0
        %893 = vmatmul.mubr.f32.gmra.mrb[0].mxu0 %v730
        %v894 = vpop.f32.mrb[0].mxu0
        %v895 = vadd.f32 0.0, %v894
        %v896 = vpop.f32.mrb[0].mxu0
        %897 = vmatprep.mubr.f32.mxu0 0.0
        %898 = vmatmul.mubr.f32.gmra.mrb[0].mxu0 %v733
        %v899 = vpop.f32.mrb[0].mxu0
        %v900 = vadd.f32 0.0, %v899
        %v901 = vpop.f32.mrb[0].mxu0
        %902 = vmatprep.mubr.f32.mxu0 0.0
        %903 = vmatmul.mubr.f32.gmra.mrb[0].mxu0 %v736
        %v904 = vpop.f32.mrb[0].mxu0
        %v905 = vadd.f32 0.0, %v904
        %v906 = vpop.f32.mrb[0].mxu0
        %907 = vmatprep.mubr.f32.mxu0 0.0
        %908 = vmatmul.mubr.f32.gmra.mrb[0].mxu0 %v739
        %v909 = vpop.f32.mrb[0].mxu0
        %v910 = vadd.f32 0.0, %v909
        %v911 = vpop.f32.mrb[0].mxu0
        %912 = vmatprep.mubr.f32.mxu0 0.0
        %913 = vmatmul.mubr.f32.gmra.mrb[0].mxu0 %v742
        %v914 = vpop.f32.mrb[0].mxu0
        %v915 = vadd.f32 0.0, %v914
        %v916 = vpop.f32.mrb[0].mxu0
        %917 = vmatprep.mubr.f32.mxu0 0.0
        %918 = vmatmul.mubr.f32.gmra.mrb[0].mxu0 %v745
        %v919 = vpop.f32.mrb[0].mxu0
        %v920 = vadd.f32 0.0, %v919
        %v921 = vpop.f32.mrb[0].mxu0
        %922 = vmatprep.mubr.f32.mxu0 0.0
        %923 = vmatmul.mubr.f32.gmra.mrb[0].mxu0 %v748
        %v924 = vpop.f32.mrb[0].mxu0
        %v925 = vadd.f32 0.0, %v924
        %v926 = vpop.f32.mrb[0].mxu0
        %927 = vmatprep.mubr.f32.mxu0 0.0
        %928 = vmatmul.mubr.f32.gmra.mrb[0].mxu0 %v751
        %v929 = vpop.f32.mrb[0].mxu0
        %v930 = vadd.f32 0.0, %v929
        %v931 = vpop.f32.mrb[0].mxu0
        %932 = vmatprep.mubr.f32.mxu0 0.0
        %933 = vmatmul.mubr.f32.gmra.mrb[0].mxu0 %v754
        %v934 = vpop.f32.mrb[0].mxu0
        %v935 = vadd.f32 0.0, %v934
        %v936 = vpop.f32.mrb[0].mxu0
        %937 = vmatprep.mubr.f32.mxu0 0.0
        %938 = vmatmul.mubr.f32.gmra.mrb[0].mxu0 %v757
        %v939 = vpop.f32.mrb[0].mxu0
        %v940 = vadd.f32 0.0, %v939
        %v941 = vpop.f32.mrb[0].mxu0
        %942 = vmatprep.mubr.f32.mxu0 0.0
        %943 = vmatmul.mubr.f32.gmra.mrb[0].mxu0 %v760
        %v944 = vpop.f32.mrb[0].mxu0
        %v945 = vadd.f32 0.0, %v944
        %v946 = vpop.f32.mrb[0].mxu0
        %947 = vmatprep.mubr.f32.mxu0 0.0
        %948 = vmatmul.mubr.f32.gmra.mrb[0].mxu0 %v763
        %v949 = vpop.f32.mrb[0].mxu0
        %v950 = vadd.f32 0.0, %v949
        %v951 = vpop.f32.mrb[0].mxu0
        %952 = vmatprep.mubr.f32.mxu0 0.0
        %953 = vmatmul.mubr.f32.gmra.mrb[0].mxu0 %v766
        %v954 = vpop.f32.mrb[0].mxu0
        %v955 = vadd.f32 0.0, %v954
        %v956 = vpop.f32.mrb[0].mxu0
        %957 = vmatprep.mubr.f32.mxu0 0.0
        %958 = vmatmul.mubr.f32.gmra.mrb[0].mxu0 %v769
        %v959 = vpop.f32.mrb[0].mxu0
        %v960 = vadd.f32 0.0, %v959
        %v961 = vpop.f32.mrb[0].mxu0
        %962 = vmatprep.mubr.f32.mxu0 0.0
        %963 = vmatmul.mubr.f32.gmra.mrb[0].mxu0 %v772
        %v964 = vpop.f32.mrb[0].mxu0
        %v965 = vadd.f32 0.0, %v964
        %v966 = vpop.f32.mrb[0].mxu0
        %967 = vmatprep.mubr.f32.mxu0 0.0
        %968 = vmatmul.mubr.f32.gmra.mrb[0].mxu0 %v775
        %v969 = vpop.f32.mrb[0].mxu0
        %v970 = vadd.f32 0.0, %v969
        %v971 = vpop.f32.mrb[0].mxu0
        %972 = vmatprep.mubr.f32.mxu0 0.0
        %973 = vmatmul.mubr.f32.gmra.mrb[0].mxu0 %v778
        %v974 = vpop.f32.mrb[0].mxu0
        %v975 = vadd.f32 0.0, %v974
        %v976 = vpop.f32.mrb[0].mxu0
        %977 = vmatprep.mubr.f32.mxu0 0.0
        %978 = vmatmul.mubr.f32.gmra.mrb[0].mxu0 %v781
        %v979 = vpop.f32.mrb[0].mxu0
        %v980 = vadd.f32 0.0, %v979
        %v981 = vpop.f32.mrb[0].mxu0
        %982 = vmatprep.mubr.f32.mxu0 0.0
        %983 = vmatmul.mubr.f32.gmra.mrb[0].mxu0 %v784
        %v984 = vpop.f32.mrb[0].mxu0
        %v985 = vadd.f32 0.0, %v984
        %v986 = vpop.f32.mrb[0].mxu0
        %987 = vmatprep.mubr.f32.mxu0 0.0
        %988 = vmatmul.mubr.f32.gmra.mrb[0].mxu0 %v787
        %v989 = vpop.f32.mrb[0].mxu0
        %v990 = vadd.f32 0.0, %v989
        %v991 = vpop.f32.mrb[0].mxu0
        %992 = vmatprep.mubr.f32.mxu0 0.0
        %993 = vmatmul.mubr.f32.gmra.mrb[0].mxu0 %v790
        %v994 = vpop.f32.mrb[0].mxu0
        %v995 = vadd.f32 0.0, %v994
        %v996 = vpop.f32.mrb[0].mxu0
        %997 = vmatprep.mubr.f32.mxu0 0.0
        %998 = vmatmul.mubr.f32.gmra.mrb[0].mxu0 %v793
        %v999 = vpop.f32.mrb[0].mxu0
        %v1000 = vadd.f32 0.0, %v999
        %v1001 = vpop.f32.mrb[0].mxu0
        %1002 = vmatprep.mubr.f32.mxu0 0.0
        %1003 = vmatmul.mubr.f32.gmra.mrb[0].mxu0 %v796
        %v1004 = vpop.f32.mrb[0].mxu0
        %v1005 = vadd.f32 0.0, %v1004
        %v1006 = vpop.f32.mrb[0].mxu0
        %1007 = vmatprep.mubr.f32.mxu0 0.0
        %1008 = vmatmul.mubr.f32.gmra.mrb[0].mxu0 %v799
        %v1009 = vpop.f32.mrb[0].mxu0
        %v1010 = vadd.f32 0.0, %v1009
        %v1011 = vpop.f32.mrb[0].mxu0
        %1012 = vmatprep.mubr.f32.mxu0 0.0
        %1013 = vmatmul.mubr.f32.gmra.mrb[0].mxu0 %v802
        %v1014 = vpop.f32.mrb[0].mxu0
        %v1015 = vadd.f32 0.0, %v1014
        %v1016 = vpop.f32.mrb[0].mxu0
        %1017 = vmatprep.mubr.f32.mxu0 0.0
        %1018 = vmatmul.mubr.f32.gmra.mrb[0].mxu0 %v805
        %v1019 = vpop.f32.mrb[0].mxu0
        %v1020 = vadd.f32 0.0, %v1019
        %v1021 = vpop.f32.mrb[0].mxu0
        %1022 = vmatprep.mubr.f32.mxu0 0.0
        %1023 = vmatmul.mubr.f32.gmra.mrb[0].mxu0 %v808
        %v1024 = vpop.f32.mrb[0].mxu0
        %v1025 = vadd.f32 0.0, %v1024
        %v1026 = vpop.f32.mrb[0].mxu0
        %1027 = vmatprep.mubr.f32.mxu0 0.0
        %1028 = vmatmul.mubr.f32.gmra.mrb[0].mxu0 %v811
        %v1029 = vpop.f32.mrb[0].mxu0
        %v1030 = vadd.f32 0.0, %v1029
        %v1031 = vpop.f32.mrb[0].mxu0
        %1032 = vmatprep.mubr.f32.mxu0 0.0
        %1033 = vmatmul.mubr.f32.gmra.mrb[0].mxu0 %v814
        %v1034 = vpop.f32.mrb[0].mxu0
        %v1035 = vadd.f32 0.0, %v1034
        %v1036 = vpop.f32.mrb[0].mxu0
        %1037 = vmatprep.mubr.f32.mxu0 0.0
        %1038 = vmatmul.mubr.f32.gmra.mrb[0].mxu0 %v817
        %v1039 = vpop.f32.mrb[0].mxu0
        %v1040 = vadd.f32 0.0, %v1039
        %v1041 = vpop.f32.mrb[0].mxu0
        %1042 = vmatprep.mubr.f32.mxu0 0.0
        %1043 = vmatmul.mubr.f32.gmra.mrb[0].mxu0 %v820
        %v1044 = vpop.f32.mrb[0].mxu0
        %v1045 = vadd.f32 0.0, %v1044
        %v1046 = vpop.f32.mrb[0].mxu0
        %1047 = vmatprep.mubr.f32.mxu0 0.0
        %1048 = vmatmul.mubr.f32.gmra.mrb[0].mxu0 %v823
        %v1049 = vpop.f32.mrb[0].mxu0
        %v1050 = vadd.f32 0.0, %v1049
        %v1051 = vpop.f32.mrb[0].mxu0
        %1052 = vdwg.mxu0
        %v1053 = vadd.f32 %v695, %v895
        %v1054 = vadd.f32 %v696, %v900
        %v1055 = vadd.f32 %v697, %v905
        %v1056 = vadd.f32 %v698, %v910
        %v1057 = vadd.f32 %v699, %v915
        %v1058 = vadd.f32 %v700, %v920
        %v1059 = vadd.f32 %v701, %v925
        %v1060 = vadd.f32 %v702, %v930
        %v1061 = vadd.f32 %v703, %v935
        %v1062 = vadd.f32 %v704, %v940
        %v1063 = vadd.f32 %v705, %v945
        %v1064 = vadd.f32 %v706, %v950
        %v1065 = vadd.f32 %v707, %v955
        %v1066 = vadd.f32 %v708, %v960
        %v1067 = vadd.f32 %v709, %v965
        %v1068 = vadd.f32 %v710, %v970
        %v1069 = vadd.f32 %v711, %v975
        %v1070 = vadd.f32 %v712, %v980
        %v1071 = vadd.f32 %v713, %v985
        %v1072 = vadd.f32 %v714, %v990
        %v1073 = vadd.f32 %v715, %v995
        %v1074 = vadd.f32 %v716, %v1000
        %v1075 = vadd.f32 %v717, %v1005
        %v1076 = vadd.f32 %v718, %v1010
        %v1077 = vadd.f32 %v719, %v1015
        %v1078 = vadd.f32 %v720, %v1020
        %v1079 = vadd.f32 %v721, %v1025
        %v1080 = vadd.f32 %v722, %v1030
        %v1081 = vadd.f32 %v723, %v1035
        %v1082 = vadd.f32 %v724, %v1040
        %v1083 = vadd.f32 %v725, %v1045
        %v1084 = vadd.f32 %v726, %v1050
        %1085 = vst [vmem:[#allocation2] sm:$0xff] %v1053
        %1086 = vst [vmem:[#allocation2 + $0x8] sm:$0xff] %v1054
        %1087 = vst [vmem:[#allocation2 + $0x10] sm:$0xff] %v1055
        %1088 = vst [vmem:[#allocation2 + $0x18] sm:$0xff] %v1056
        %1089 = vst [vmem:[#allocation2 + $0x20] sm:$0xff] %v1057
        %1090 = vst [vmem:[#allocation2 + $0x28] sm:$0xff] %v1058
        %1091 = vst [vmem:[#allocation2 + $0x30] sm:$0xff] %v1059
        %1092 = vst [vmem:[#allocation2 + $0x38] sm:$0xff] %v1060
        %1093 = vst [vmem:[#allocation2 + $0x40] sm:$0xff] %v1061
        %1094 = vst [vmem:[#allocation2 + $0x48] sm:$0xff] %v1062
        %1095 = vst [vmem:[#allocation2 + $0x50] sm:$0xff] %v1063
        %1096 = vst [vmem:[#allocation2 + $0x58] sm:$0xff] %v1064
        %1097 = vst [vmem:[#allocation2 + $0x60] sm:$0xff] %v1065
        %1098 = vst [vmem:[#allocation2 + $0x68] sm:$0xff] %v1066
        %1099 = vst [vmem:[#allocation2 + $0x70] sm:$0xff] %v1067
        %1100 = vst [vmem:[#allocation2 + $0x78] sm:$0xff] %v1068
        %1101 = vst [vmem:[#allocation2 + $0x80] sm:$0xff] %v1069
        %1102 = vst [vmem:[#allocation2 + $0x88] sm:$0xff] %v1070
        %1103 = vst [vmem:[#allocation2 + $0x90] sm:$0xff] %v1071
        %1104 = vst [vmem:[#allocation2 + $0x98] sm:$0xff] %v1072
        %1105 = vst [vmem:[#allocation2 + $0xa0] sm:$0xff] %v1073
        %1106 = vst [vmem:[#allocation2 + $0xa8] sm:$0xff] %v1074
        %1107 = vst [vmem:[#allocation2 + $0xb0] sm:$0xff] %v1075
        %1108 = vst [vmem:[#allocation2 + $0xb8] sm:$0xff] %v1076
        %1109 = vst [vmem:[#allocation2 + $0xc0] sm:$0xff] %v1077
        %1110 = vst [vmem:[#allocation2 + $0xc8] sm:$0xff] %v1078
        %1111 = vst [vmem:[#allocation2 + $0xd0] sm:$0xff] %v1079
        %1112 = vst [vmem:[#allocation2 + $0xd8] sm:$0xff] %v1080
        %1113 = vst [vmem:[#allocation2 + $0xe0] sm:$0xff] %v1081
        %1114 = vst [vmem:[#allocation2 + $0xe8] sm:$0xff] %v1082
        %1115 = vst [vmem:[#allocation2 + $0xf0] sm:$0xff] %v1083
        %1116 = vst [vmem:[#allocation2 + $0xf8] sm:$0xff] %v1084
        %v1117 = vld [vmem:[%s168 + $0x2] sm:$0xff]
        %v1118 = vld [vmem:[%s168 + $0xa] sm:$0xff]
        %v1119 = vld [vmem:[%s168 + $0x1a] sm:$0xff]
        %v1120 = vld [vmem:[%s168 + $0x22] sm:$0xff]
        %v1121 = vld [vmem:[%s168 + $0x32] sm:$0xff]
        %v1122 = vld [vmem:[%s168 + $0x3a] sm:$0xff]
        %v1123 = vld [vmem:[%s168 + $0x4a] sm:$0xff]
        %v1124 = vld [vmem:[%s168 + $0x52] sm:$0xff]
        %v1125 = vld [vmem:[%s168 + $0x62] sm:$0xff]
        %v1126 = vld [vmem:[%s168 + $0x6a] sm:$0xff]
        %v1127 = vld [vmem:[%s168 + $0x7a] sm:$0xff]
        %v1128 = vld [vmem:[%s168 + $0x82] sm:$0xff]
        %v1129 = vld [vmem:[%s168 + $0x92] sm:$0xff]
        %v1130 = vld [vmem:[%s168 + $0x9a] sm:$0xff]
        %v1131 = vld [vmem:[%s168 + $0xaa] sm:$0xff]
        %v1132 = vld [vmem:[%s168 + $0xb2] sm:$0xff]
        %v1133 = vld [vmem:[%s168 + $0xc2] sm:$0xff]
        %v1134 = vld [vmem:[%s168 + $0xca] sm:$0xff]
        %v1135 = vld [vmem:[%s168 + $0xda] sm:$0xff]
        %v1136 = vld [vmem:[%s168 + $0xe2] sm:$0xff]
        %v1137 = vld [vmem:[%s168 + $0xf2] sm:$0xff]
        %v1138 = vld [vmem:[%s168 + $0xfa] sm:$0xff]
        %v1139 = vld [vmem:[%s168 + $0x10a] sm:$0xff]
        %v1140 = vld [vmem:[%s168 + $0x112] sm:$0xff]
        %v1141 = vld [vmem:[%s168 + $0x122] sm:$0xff]
        %v1142 = vld [vmem:[%s168 + $0x12a] sm:$0xff]
        %v1143 = vld [vmem:[%s168 + $0x13a] sm:$0xff]
        %v1144 = vld [vmem:[%s168 + $0x142] sm:$0xff]
        %v1145 = vld [vmem:[%s168 + $0x152] sm:$0xff]
        %v1146 = vld [vmem:[%s168 + $0x15a] sm:$0xff]
        %v1147 = vld [vmem:[%s168 + $0x16a] sm:$0xff]
        %v1148 = vld [vmem:[%s168 + $0x172] sm:$0xff]
        %v1149 = vld [vmem:[#allocation2] sm:$0xff]
        %v1150 = vld [vmem:[#allocation2 + $0x8] sm:$0xff]
        %v1151 = vld [vmem:[#allocation2 + $0x10] sm:$0xff]
        %v1152 = vld [vmem:[#allocation2 + $0x18] sm:$0xff]
        %v1153 = vld [vmem:[#allocation2 + $0x20] sm:$0xff]
        %v1154 = vld [vmem:[#allocation2 + $0x28] sm:$0xff]
        %v1155 = vld [vmem:[#allocation2 + $0x30] sm:$0xff]
        %v1156 = vld [vmem:[#allocation2 + $0x38] sm:$0xff]
        %v1157 = vld [vmem:[#allocation2 + $0x40] sm:$0xff]
        %v1158 = vld [vmem:[#allocation2 + $0x48] sm:$0xff]
        %v1159 = vld [vmem:[#allocation2 + $0x50] sm:$0xff]
        %v1160 = vld [vmem:[#allocation2 + $0x58] sm:$0xff]
        %v1161 = vld [vmem:[#allocation2 + $0x60] sm:$0xff]
        %v1162 = vld [vmem:[#allocation2 + $0x68] sm:$0xff]
        %v1163 = vld [vmem:[#allocation2 + $0x70] sm:$0xff]
        %v1164 = vld [vmem:[#allocation2 + $0x78] sm:$0xff]
        %v1165 = vld [vmem:[#allocation2 + $0x80] sm:$0xff]
        %v1166 = vld [vmem:[#allocation2 + $0x88] sm:$0xff]
        %v1167 = vld [vmem:[#allocation2 + $0x90] sm:$0xff]
        %v1168 = vld [vmem:[#allocation2 + $0x98] sm:$0xff]
        %v1169 = vld [vmem:[#allocation2 + $0xa0] sm:$0xff]
        %v1170 = vld [vmem:[#allocation2 + $0xa8] sm:$0xff]
        %v1171 = vld [vmem:[#allocation2 + $0xb0] sm:$0xff]
        %v1172 = vld [vmem:[#allocation2 + $0xb8] sm:$0xff]
        %v1173 = vld [vmem:[#allocation2 + $0xc0] sm:$0xff]
        %v1174 = vld [vmem:[#allocation2 + $0xc8] sm:$0xff]
        %v1175 = vld [vmem:[#allocation2 + $0xd0] sm:$0xff]
        %v1176 = vld [vmem:[#allocation2 + $0xd8] sm:$0xff]
        %v1177 = vld [vmem:[#allocation2 + $0xe0] sm:$0xff]
        %v1178 = vld [vmem:[#allocation2 + $0xe8] sm:$0xff]
        %v1179 = vld [vmem:[#allocation2 + $0xf0] sm:$0xff]
        %v1180 = vld [vmem:[#allocation2 + $0xf8] sm:$0xff]
        %s1181 = scalar_lea.vmem %s1, 8
        %v1182 = vld [vmem:[%s1181] sm:$0xf]
        %v1184 = vsel %vm273, %v1117, 0
        %v1187 = vsel %vm273, %v1118, 0
        %v1190 = vsel %vm273, %v1119, 0
        %v1193 = vsel %vm273, %v1120, 0
        %v1196 = vsel %vm273, %v1121, 0
        %v1199 = vsel %vm273, %v1122, 0
        %v1202 = vsel %vm273, %v1123, 0
        %v1205 = vsel %vm273, %v1124, 0
        %v1208 = vsel %vm273, %v1125, 0
        %v1211 = vsel %vm273, %v1126, 0
        %v1214 = vsel %vm273, %v1127, 0
        %v1217 = vsel %vm273, %v1128, 0
        %v1220 = vsel %vm273, %v1129, 0
        %v1223 = vsel %vm273, %v1130, 0
        %v1226 = vsel %vm273, %v1131, 0
        %v1229 = vsel %vm273, %v1132, 0
        %v1232 = vsel %vm273, %v1133, 0
        %v1235 = vsel %vm273, %v1134, 0
        %v1238 = vsel %vm273, %v1135, 0
        %v1241 = vsel %vm273, %v1136, 0
        %v1244 = vsel %vm273, %v1137, 0
        %v1247 = vsel %vm273, %v1138, 0
        %v1250 = vsel %vm273, %v1139, 0
        %v1253 = vsel %vm273, %v1140, 0
        %v1256 = vsel %vm273, %v1141, 0
        %v1259 = vsel %vm273, %v1142, 0
        %v1262 = vsel %vm273, %v1143, 0
        %v1265 = vsel %vm273, %v1144, 0
        %v1268 = vsel %vm273, %v1145, 0
        %v1271 = vsel %vm273, %v1146, 0
        %v1274 = vsel %vm273, %v1147, 0
        %v1277 = vsel %vm273, %v1148, 0
        %v1280 = vsel %vm370, %v1182, 0
        %1282 = vmatprep.subr.mxu0 0.0
        %1283 = vmatpush1.msra.mxu0 %v1280
        %1284 = vmatprep.subr.mxu0 0.0
        %1285 = vmatpush1.msra.mxu0 0.0
        %1286 = vmatprep.subr.mxu0 0.0
        %1287 = vmatpush1.msra.mxu0 0.0
        %1288 = vmatprep.subr.mxu0 0.0
        %1289 = vmatpush1.msra.mxu0 0.0
        %1290 = vmatprep.subr.mxu0 0.0
        %1291 = vmatpush1.msra.mxu0 0.0
        %1292 = vmatprep.subr.mxu0 0.0
        %1293 = vmatpush1.msra.mxu0 0.0
        %1294 = vmatprep.subr.mxu0 0.0
        %1295 = vmatpush1.msra.mxu0 0.0
        %1296 = vmatprep.subr.mxu0 0.0
        %1297 = vmatpush1.msra.mxu0 0.0
        %1298 = vmatprep.subr.mxu0 0.0
        %1299 = vmatpush1.msra.mxu0 0.0
        %1300 = vmatprep.subr.mxu0 0.0
        %1301 = vmatpush1.msra.mxu0 0.0
        %1302 = vmatprep.subr.mxu0 0.0
        %1303 = vmatpush1.msra.mxu0 0.0
        %1304 = vmatprep.subr.mxu0 0.0
        %1305 = vmatpush1.msra.mxu0 0.0
        %1306 = vmatprep.subr.mxu0 0.0
        %1307 = vmatpush1.msra.mxu0 0.0
        %1308 = vmatprep.subr.mxu0 0.0
        %1309 = vmatpush1.msra.mxu0 0.0
        %1310 = vmatprep.subr.mxu0 0.0
        %1311 = vmatpush1.msra.mxu0 0.0
        %1312 = vmatprep.subr.mxu0 0.0
        %1313 = vmatpush1.msra.mxu0 0.0
        %1314 = vmatprep.subr.mxu0 0.0
        %1315 = vmatpush1.msra.mxu0 0.0
        %1316 = vmatprep.subr.mxu0 0.0
        %1317 = vmatpush1.msra.mxu0 0.0
        %1318 = vmatprep.subr.mxu0 0.0
        %1319 = vmatpush1.msra.mxu0 0.0
        %1320 = vmatprep.subr.mxu0 0.0
        %1321 = vmatpush1.msra.mxu0 0.0
        %1322 = vmatprep.subr.mxu0 0.0
        %1323 = vmatpush1.msra.mxu0 0.0
        %1324 = vmatprep.subr.mxu0 0.0
        %1325 = vmatpush1.msra.mxu0 0.0
        %1326 = vmatprep.subr.mxu0 0.0
        %1327 = vmatpush1.msra.mxu0 0.0
        %1328 = vmatprep.subr.mxu0 0.0
        %1329 = vmatpush1.msra.mxu0 0.0
        %1330 = vmatprep.subr.mxu0 0.0
        %1331 = vmatpush1.msra.mxu0 0.0
        %1332 = vmatprep.subr.mxu0 0.0
        %1333 = vmatpush1.msra.mxu0 0.0
        %1334 = vmatprep.subr.mxu0 0.0
        %1335 = vmatpush1.msra.mxu0 0.0
        %1336 = vmatprep.subr.mxu0 0.0
        %1337 = vmatpush1.msra.mxu0 0.0
        %1338 = vmatprep.subr.mxu0 0.0
        %1339 = vmatpush1.msra.mxu0 0.0
        %1340 = vmatprep.subr.mxu0 0.0
        %1341 = vmatpush1.msra.mxu0 0.0
        %1342 = vmatprep.subr.mxu0 0.0
        %1343 = vmatpush1.msra.mxu0 0.0
        %1344 = vmatprep.subr.mxu0 0.0
        %1345 = vmatpush1.msra.mxu0 0.0
        %1346 = vmatprep.mubr.f32.mxu0 0.0
        %1347 = vmatmul.mubr.f32.gmra.mrb[0].mxu0 %v1184
        %v1348 = vpop.f32.mrb[0].mxu0
        %v1349 = vadd.f32 0.0, %v1348
        %v1350 = vpop.f32.mrb[0].mxu0
        %1351 = vmatprep.mubr.f32.mxu0 0.0
        %1352 = vmatmul.mubr.f32.gmra.mrb[0].mxu0 %v1187
        %v1353 = vpop.f32.mrb[0].mxu0
        %v1354 = vadd.f32 0.0, %v1353
        %v1355 = vpop.f32.mrb[0].mxu0
        %1356 = vmatprep.mubr.f32.mxu0 0.0
        %1357 = vmatmul.mubr.f32.gmra.mrb[0].mxu0 %v1190
        %v1358 = vpop.f32.mrb[0].mxu0
        %v1359 = vadd.f32 0.0, %v1358
        %v1360 = vpop.f32.mrb[0].mxu0
        %1361 = vmatprep.mubr.f32.mxu0 0.0
        %1362 = vmatmul.mubr.f32.gmra.mrb[0].mxu0 %v1193
        %v1363 = vpop.f32.mrb[0].mxu0
        %v1364 = vadd.f32 0.0, %v1363
        %v1365 = vpop.f32.mrb[0].mxu0
        %1366 = vmatprep.mubr.f32.mxu0 0.0
        %1367 = vmatmul.mubr.f32.gmra.mrb[0].mxu0 %v1196
        %v1368 = vpop.f32.mrb[0].mxu0
        %v1369 = vadd.f32 0.0, %v1368
        %v1370 = vpop.f32.mrb[0].mxu0
        %1371 = vmatprep.mubr.f32.mxu0 0.0
        %1372 = vmatmul.mubr.f32.gmra.mrb[0].mxu0 %v1199
        %v1373 = vpop.f32.mrb[0].mxu0
        %v1374 = vadd.f32 0.0, %v1373
        %v1375 = vpop.f32.mrb[0].mxu0
        %1376 = vmatprep.mubr.f32.mxu0 0.0
        %1377 = vmatmul.mubr.f32.gmra.mrb[0].mxu0 %v1202
        %v1378 = vpop.f32.mrb[0].mxu0
        %v1379 = vadd.f32 0.0, %v1378
        %v1380 = vpop.f32.mrb[0].mxu0
        %1381 = vmatprep.mubr.f32.mxu0 0.0
        %1382 = vmatmul.mubr.f32.gmra.mrb[0].mxu0 %v1205
        %v1383 = vpop.f32.mrb[0].mxu0
        %v1384 = vadd.f32 0.0, %v1383
        %v1385 = vpop.f32.mrb[0].mxu0
        %1386 = vmatprep.mubr.f32.mxu0 0.0
        %1387 = vmatmul.mubr.f32.gmra.mrb[0].mxu0 %v1208
        %v1388 = vpop.f32.mrb[0].mxu0
        %v1389 = vadd.f32 0.0, %v1388
        %v1390 = vpop.f32.mrb[0].mxu0
        %1391 = vmatprep.mubr.f32.mxu0 0.0
        %1392 = vmatmul.mubr.f32.gmra.mrb[0].mxu0 %v1211
        %v1393 = vpop.f32.mrb[0].mxu0
        %v1394 = vadd.f32 0.0, %v1393
        %v1395 = vpop.f32.mrb[0].mxu0
        %1396 = vmatprep.mubr.f32.mxu0 0.0
        %1397 = vmatmul.mubr.f32.gmra.mrb[0].mxu0 %v1214
        %v1398 = vpop.f32.mrb[0].mxu0
        %v1399 = vadd.f32 0.0, %v1398
        %v1400 = vpop.f32.mrb[0].mxu0
        %1401 = vmatprep.mubr.f32.mxu0 0.0
        %1402 = vmatmul.mubr.f32.gmra.mrb[0].mxu0 %v1217
        %v1403 = vpop.f32.mrb[0].mxu0
        %v1404 = vadd.f32 0.0, %v1403
        %v1405 = vpop.f32.mrb[0].mxu0
        %1406 = vmatprep.mubr.f32.mxu0 0.0
        %1407 = vmatmul.mubr.f32.gmra.mrb[0].mxu0 %v1220
        %v1408 = vpop.f32.mrb[0].mxu0
        %v1409 = vadd.f32 0.0, %v1408
        %v1410 = vpop.f32.mrb[0].mxu0
        %1411 = vmatprep.mubr.f32.mxu0 0.0
        %1412 = vmatmul.mubr.f32.gmra.mrb[0].mxu0 %v1223
        %v1413 = vpop.f32.mrb[0].mxu0
        %v1414 = vadd.f32 0.0, %v1413
        %v1415 = vpop.f32.mrb[0].mxu0
        %1416 = vmatprep.mubr.f32.mxu0 0.0
        %1417 = vmatmul.mubr.f32.gmra.mrb[0].mxu0 %v1226
        %v1418 = vpop.f32.mrb[0].mxu0
        %v1419 = vadd.f32 0.0, %v1418
        %v1420 = vpop.f32.mrb[0].mxu0
        %1421 = vmatprep.mubr.f32.mxu0 0.0
        %1422 = vmatmul.mubr.f32.gmra.mrb[0].mxu0 %v1229
        %v1423 = vpop.f32.mrb[0].mxu0
        %v1424 = vadd.f32 0.0, %v1423
        %v1425 = vpop.f32.mrb[0].mxu0
        %1426 = vmatprep.mubr.f32.mxu0 0.0
        %1427 = vmatmul.mubr.f32.gmra.mrb[0].mxu0 %v1232
        %v1428 = vpop.f32.mrb[0].mxu0
        %v1429 = vadd.f32 0.0, %v1428
        %v1430 = vpop.f32.mrb[0].mxu0
        %1431 = vmatprep.mubr.f32.mxu0 0.0
        %1432 = vmatmul.mubr.f32.gmra.mrb[0].mxu0 %v1235
        %v1433 = vpop.f32.mrb[0].mxu0
        %v1434 = vadd.f32 0.0, %v1433
        %v1435 = vpop.f32.mrb[0].mxu0
        %1436 = vmatprep.mubr.f32.mxu0 0.0
        %1437 = vmatmul.mubr.f32.gmra.mrb[0].mxu0 %v1238
        %v1438 = vpop.f32.mrb[0].mxu0
        %v1439 = vadd.f32 0.0, %v1438
        %v1440 = vpop.f32.mrb[0].mxu0
        %1441 = vmatprep.mubr.f32.mxu0 0.0
        %1442 = vmatmul.mubr.f32.gmra.mrb[0].mxu0 %v1241
        %v1443 = vpop.f32.mrb[0].mxu0
        %v1444 = vadd.f32 0.0, %v1443
        %v1445 = vpop.f32.mrb[0].mxu0
        %1446 = vmatprep.mubr.f32.mxu0 0.0
        %1447 = vmatmul.mubr.f32.gmra.mrb[0].mxu0 %v1244
        %v1448 = vpop.f32.mrb[0].mxu0
        %v1449 = vadd.f32 0.0, %v1448
        %v1450 = vpop.f32.mrb[0].mxu0
        %1451 = vmatprep.mubr.f32.mxu0 0.0
        %1452 = vmatmul.mubr.f32.gmra.mrb[0].mxu0 %v1247
        %v1453 = vpop.f32.mrb[0].mxu0
        %v1454 = vadd.f32 0.0, %v1453
        %v1455 = vpop.f32.mrb[0].mxu0
        %1456 = vmatprep.mubr.f32.mxu0 0.0
        %1457 = vmatmul.mubr.f32.gmra.mrb[0].mxu0 %v1250
        %v1458 = vpop.f32.mrb[0].mxu0
        %v1459 = vadd.f32 0.0, %v1458
        %v1460 = vpop.f32.mrb[0].mxu0
        %1461 = vmatprep.mubr.f32.mxu0 0.0
        %1462 = vmatmul.mubr.f32.gmra.mrb[0].mxu0 %v1253
        %v1463 = vpop.f32.mrb[0].mxu0
        %v1464 = vadd.f32 0.0, %v1463
        %v1465 = vpop.f32.mrb[0].mxu0
        %1466 = vmatprep.mubr.f32.mxu0 0.0
        %1467 = vmatmul.mubr.f32.gmra.mrb[0].mxu0 %v1256
        %v1468 = vpop.f32.mrb[0].mxu0
        %v1469 = vadd.f32 0.0, %v1468
        %v1470 = vpop.f32.mrb[0].mxu0
        %1471 = vmatprep.mubr.f32.mxu0 0.0
        %1472 = vmatmul.mubr.f32.gmra.mrb[0].mxu0 %v1259
        %v1473 = vpop.f32.mrb[0].mxu0
        %v1474 = vadd.f32 0.0, %v1473
        %v1475 = vpop.f32.mrb[0].mxu0
        %1476 = vmatprep.mubr.f32.mxu0 0.0
        %1477 = vmatmul.mubr.f32.gmra.mrb[0].mxu0 %v1262
        %v1478 = vpop.f32.mrb[0].mxu0
        %v1479 = vadd.f32 0.0, %v1478
        %v1480 = vpop.f32.mrb[0].mxu0
        %1481 = vmatprep.mubr.f32.mxu0 0.0
        %1482 = vmatmul.mubr.f32.gmra.mrb[0].mxu0 %v1265
        %v1483 = vpop.f32.mrb[0].mxu0
        %v1484 = vadd.f32 0.0, %v1483
        %v1485 = vpop.f32.mrb[0].mxu0
        %1486 = vmatprep.mubr.f32.mxu0 0.0
        %1487 = vmatmul.mubr.f32.gmra.mrb[0].mxu0 %v1268
        %v1488 = vpop.f32.mrb[0].mxu0
        %v1489 = vadd.f32 0.0, %v1488
        %v1490 = vpop.f32.mrb[0].mxu0
        %1491 = vmatprep.mubr.f32.mxu0 0.0
        %1492 = vmatmul.mubr.f32.gmra.mrb[0].mxu0 %v1271
        %v1493 = vpop.f32.mrb[0].mxu0
        %v1494 = vadd.f32 0.0, %v1493
        %v1495 = vpop.f32.mrb[0].mxu0
        %1496 = vmatprep.mubr.f32.mxu0 0.0
        %1497 = vmatmul.mubr.f32.gmra.mrb[0].mxu0 %v1274
        %v1498 = vpop.f32.mrb[0].mxu0
        %v1499 = vadd.f32 0.0, %v1498
        %v1500 = vpop.f32.mrb[0].mxu0
        %1501 = vmatprep.mubr.f32.mxu0 0.0
        %1502 = vmatmul.mubr.f32.gmra.mrb[0].mxu0 %v1277
        %v1503 = vpop.f32.mrb[0].mxu0
        %v1504 = vadd.f32 0.0, %v1503
        %v1505 = vpop.f32.mrb[0].mxu0
        %1506 = vdwg.mxu0
        %v1507 = vadd.f32 %v1149, %v1349
        %v1508 = vadd.f32 %v1150, %v1354
        %v1509 = vadd.f32 %v1151, %v1359
        %v1510 = vadd.f32 %v1152, %v1364
        %v1511 = vadd.f32 %v1153, %v1369
        %v1512 = vadd.f32 %v1154, %v1374
        %v1513 = vadd.f32 %v1155, %v1379
        %v1514 = vadd.f32 %v1156, %v1384
        %v1515 = vadd.f32 %v1157, %v1389
        %v1516 = vadd.f32 %v1158, %v1394
        %v1517 = vadd.f32 %v1159, %v1399
        %v1518 = vadd.f32 %v1160, %v1404
        %v1519 = vadd.f32 %v1161, %v1409
        %v1520 = vadd.f32 %v1162, %v1414
        %v1521 = vadd.f32 %v1163, %v1419
        %v1522 = vadd.f32 %v1164, %v1424
        %v1523 = vadd.f32 %v1165, %v1429
        %v1524 = vadd.f32 %v1166, %v1434
        %v1525 = vadd.f32 %v1167, %v1439
        %v1526 = vadd.f32 %v1168, %v1444
        %v1527 = vadd.f32 %v1169, %v1449
        %v1528 = vadd.f32 %v1170, %v1454
        %v1529 = vadd.f32 %v1171, %v1459
        %v1530 = vadd.f32 %v1172, %v1464
        %v1531 = vadd.f32 %v1173, %v1469
        %v1532 = vadd.f32 %v1174, %v1474
        %v1533 = vadd.f32 %v1175, %v1479
        %v1534 = vadd.f32 %v1176, %v1484
        %v1535 = vadd.f32 %v1177, %v1489
        %v1536 = vadd.f32 %v1178, %v1494
        %v1537 = vadd.f32 %v1179, %v1499
        %v1538 = vadd.f32 %v1180, %v1504
        %1539 = vst [vmem:[#allocation2] sm:$0xff] %v1507
        %1540 = vst [vmem:[#allocation2 + $0x8] sm:$0xff] %v1508
        %1541 = vst [vmem:[#allocation2 + $0x10] sm:$0xff] %v1509
        %1542 = vst [vmem:[#allocation2 + $0x18] sm:$0xff] %v1510
        %1543 = vst [vmem:[#allocation2 + $0x20] sm:$0xff] %v1511
        %1544 = vst [vmem:[#allocation2 + $0x28] sm:$0xff] %v1512
        %1545 = vst [vmem:[#allocation2 + $0x30] sm:$0xff] %v1513
        %1546 = vst [vmem:[#allocation2 + $0x38] sm:$0xff] %v1514
        %1547 = vst [vmem:[#allocation2 + $0x40] sm:$0xff] %v1515
        %1548 = vst [vmem:[#allocation2 + $0x48] sm:$0xff] %v1516
        %1549 = vst [vmem:[#allocation2 + $0x50] sm:$0xff] %v1517
        %1550 = vst [vmem:[#allocation2 + $0x58] sm:$0xff] %v1518
        %1551 = vst [vmem:[#allocation2 + $0x60] sm:$0xff] %v1519
        %1552 = vst [vmem:[#allocation2 + $0x68] sm:$0xff] %v1520
        %1553 = vst [vmem:[#allocation2 + $0x70] sm:$0xff] %v1521
        %1554 = vst [vmem:[#allocation2 + $0x78] sm:$0xff] %v1522
        %1555 = vst [vmem:[#allocation2 + $0x80] sm:$0xff] %v1523
        %1556 = vst [vmem:[#allocation2 + $0x88] sm:$0xff] %v1524
        %1557 = vst [vmem:[#allocation2 + $0x90] sm:$0xff] %v1525
        %1558 = vst [vmem:[#allocation2 + $0x98] sm:$0xff] %v1526
        %1559 = vst [vmem:[#allocation2 + $0xa0] sm:$0xff] %v1527
        %1560 = vst [vmem:[#allocation2 + $0xa8] sm:$0xff] %v1528
        %1561 = vst [vmem:[#allocation2 + $0xb0] sm:$0xff] %v1529
        %1562 = vst [vmem:[#allocation2 + $0xb8] sm:$0xff] %v1530
        %1563 = vst [vmem:[#allocation2 + $0xc0] sm:$0xff] %v1531
        %1564 = vst [vmem:[#allocation2 + $0xc8] sm:$0xff] %v1532
        %1565 = vst [vmem:[#allocation2 + $0xd0] sm:$0xff] %v1533
        %1566 = vst [vmem:[#allocation2 + $0xd8] sm:$0xff] %v1534
        %1567 = vst [vmem:[#allocation2 + $0xe0] sm:$0xff] %v1535
        %1568 = vst [vmem:[#allocation2 + $0xe8] sm:$0xff] %v1536
        %1569 = vst [vmem:[#allocation2 + $0xf0] sm:$0xff] %v1537
        %1570 = vst [vmem:[#allocation2 + $0xf8] sm:$0xff] %v1538
        %s1571 = scalar_lea.vmem %s168, 24
        %v1572 = vld [vmem:[%s1571] sm:$0xff]
        %v1573 = vld [vmem:[%s1571 + $0x8] sm:$0xff]
        %v1574 = vld [vmem:[%s1571 + $0x18] sm:$0xff]
        %v1575 = vld [vmem:[%s1571 + $0x20] sm:$0xff]
        %v1576 = vld [vmem:[%s1571 + $0x30] sm:$0xff]
        %v1577 = vld [vmem:[%s1571 + $0x38] sm:$0xff]
        %v1578 = vld [vmem:[%s1571 + $0x48] sm:$0xff]
        %v1579 = vld [vmem:[%s1571 + $0x50] sm:$0xff]
        %v1580 = vld [vmem:[%s1571 + $0x60] sm:$0xff]
        %v1581 = vld [vmem:[%s1571 + $0x68] sm:$0xff]
        %v1582 = vld [vmem:[%s1571 + $0x78] sm:$0xff]
        %v1583 = vld [vmem:[%s1571 + $0x80] sm:$0xff]
        %v1584 = vld [vmem:[%s1571 + $0x90] sm:$0xff]
        %v1585 = vld [vmem:[%s1571 + $0x98] sm:$0xff]
        %v1586 = vld [vmem:[%s1571 + $0xa8] sm:$0xff]
        %v1587 = vld [vmem:[%s1571 + $0xb0] sm:$0xff]
        %v1588 = vld [vmem:[%s1571 + $0xc0] sm:$0xff]
        %v1589 = vld [vmem:[%s1571 + $0xc8] sm:$0xff]
        %v1590 = vld [vmem:[%s1571 + $0xd8] sm:$0xff]
        %v1591 = vld [vmem:[%s1571 + $0xe0] sm:$0xff]
        %v1592 = vld [vmem:[%s1571 + $0xf0] sm:$0xff]
        %v1593 = vld [vmem:[%s1571 + $0xf8] sm:$0xff]
        %v1594 = vld [vmem:[%s1571 + $0x108] sm:$0xff]
        %v1595 = vld [vmem:[%s1571 + $0x110] sm:$0xff]
        %v1596 = vld [vmem:[%s1571 + $0x120] sm:$0xff]
        %v1597 = vld [vmem:[%s1571 + $0x128] sm:$0xff]
        %v1598 = vld [vmem:[%s1571 + $0x138] sm:$0xff]
        %v1599 = vld [vmem:[%s1571 + $0x140] sm:$0xff]
        %v1600 = vld [vmem:[%s1571 + $0x150] sm:$0xff]
        %v1601 = vld [vmem:[%s1571 + $0x158] sm:$0xff]
        %v1602 = vld [vmem:[%s1571 + $0x168] sm:$0xff]
        %v1603 = vld [vmem:[%s1571 + $0x170] sm:$0xff]
        %v1604 = vld [vmem:[#allocation2] sm:$0xff]
        %v1605 = vld [vmem:[#allocation2 + $0x8] sm:$0xff]
        %v1606 = vld [vmem:[#allocation2 + $0x10] sm:$0xff]
        %v1607 = vld [vmem:[#allocation2 + $0x18] sm:$0xff]
        %v1608 = vld [vmem:[#allocation2 + $0x20] sm:$0xff]
        %v1609 = vld [vmem:[#allocation2 + $0x28] sm:$0xff]
        %v1610 = vld [vmem:[#allocation2 + $0x30] sm:$0xff]
        %v1611 = vld [vmem:[#allocation2 + $0x38] sm:$0xff]
        %v1612 = vld [vmem:[#allocation2 + $0x40] sm:$0xff]
        %v1613 = vld [vmem:[#allocation2 + $0x48] sm:$0xff]
        %v1614 = vld [vmem:[#allocation2 + $0x50] sm:$0xff]
        %v1615 = vld [vmem:[#allocation2 + $0x58] sm:$0xff]
        %v1616 = vld [vmem:[#allocation2 + $0x60] sm:$0xff]
        %v1617 = vld [vmem:[#allocation2 + $0x68] sm:$0xff]
        %v1618 = vld [vmem:[#allocation2 + $0x70] sm:$0xff]
        %v1619 = vld [vmem:[#allocation2 + $0x78] sm:$0xff]
        %v1620 = vld [vmem:[#allocation2 + $0x80] sm:$0xff]
        %v1621 = vld [vmem:[#allocation2 + $0x88] sm:$0xff]
        %v1622 = vld [vmem:[#allocation2 + $0x90] sm:$0xff]
        %v1623 = vld [vmem:[#allocation2 + $0x98] sm:$0xff]
        %v1624 = vld [vmem:[#allocation2 + $0xa0] sm:$0xff]
        %v1625 = vld [vmem:[#allocation2 + $0xa8] sm:$0xff]
        %v1626 = vld [vmem:[#allocation2 + $0xb0] sm:$0xff]
        %v1627 = vld [vmem:[#allocation2 + $0xb8] sm:$0xff]
        %v1628 = vld [vmem:[#allocation2 + $0xc0] sm:$0xff]
        %v1629 = vld [vmem:[#allocation2 + $0xc8] sm:$0xff]
        %v1630 = vld [vmem:[#allocation2 + $0xd0] sm:$0xff]
        %v1631 = vld [vmem:[#allocation2 + $0xd8] sm:$0xff]
        %v1632 = vld [vmem:[#allocation2 + $0xe0] sm:$0xff]
        %v1633 = vld [vmem:[#allocation2 + $0xe8] sm:$0xff]
        %v1634 = vld [vmem:[#allocation2 + $0xf0] sm:$0xff]
        %v1635 = vld [vmem:[#allocation2 + $0xf8] sm:$0xff]
        %s1636 = scalar_lea.vmem %s1, 12
        %v1637 = vld [vmem:[%s1636] sm:$0xf]
        %v1639 = vsel %vm273, %v1572, 0
        %v1642 = vsel %vm273, %v1573, 0
        %v1645 = vsel %vm273, %v1574, 0
        %v1648 = vsel %vm273, %v1575, 0
        %v1651 = vsel %vm273, %v1576, 0
        %v1654 = vsel %vm273, %v1577, 0
        %v1657 = vsel %vm273, %v1578, 0
        %v1660 = vsel %vm273, %v1579, 0
        %v1663 = vsel %vm273, %v1580, 0
        %v1666 = vsel %vm273, %v1581, 0
        %v1669 = vsel %vm273, %v1582, 0
        %v1672 = vsel %vm273, %v1583, 0
        %v1675 = vsel %vm273, %v1584, 0
        %v1678 = vsel %vm273, %v1585, 0
        %v1681 = vsel %vm273, %v1586, 0
        %v1684 = vsel %vm273, %v1587, 0
        %v1687 = vsel %vm273, %v1588, 0
        %v1690 = vsel %vm273, %v1589, 0
        %v1693 = vsel %vm273, %v1590, 0
        %v1696 = vsel %vm273, %v1591, 0
        %v1699 = vsel %vm273, %v1592, 0
        %v1702 = vsel %vm273, %v1593, 0
        %v1705 = vsel %vm273, %v1594, 0
        %v1708 = vsel %vm273, %v1595, 0
        %v1711 = vsel %vm273, %v1596, 0
        %v1714 = vsel %vm273, %v1597, 0
        %v1717 = vsel %vm273, %v1598, 0
        %v1720 = vsel %vm273, %v1599, 0
        %v1723 = vsel %vm273, %v1600, 0
        %v1726 = vsel %vm273, %v1601, 0
        %v1729 = vsel %vm273, %v1602, 0
        %v1732 = vsel %vm273, %v1603, 0
        %v1735 = vsel %vm370, %v1637, 0
        %1737 = vmatprep.subr.mxu0 0.0
        %1738 = vmatpush1.msra.mxu0 %v1735
        %1739 = vmatprep.subr.mxu0 0.0
        %1740 = vmatpush1.msra.mxu0 0.0
        %1741 = vmatprep.subr.mxu0 0.0
        %1742 = vmatpush1.msra.mxu0 0.0
        %1743 = vmatprep.subr.mxu0 0.0
        %1744 = vmatpush1.msra.mxu0 0.0
        %1745 = vmatprep.subr.mxu0 0.0
        %1746 = vmatpush1.msra.mxu0 0.0
        %1747 = vmatprep.subr.mxu0 0.0
        %1748 = vmatpush1.msra.mxu0 0.0
        %1749 = vmatprep.subr.mxu0 0.0
        %1750 = vmatpush1.msra.mxu0 0.0
        %1751 = vmatprep.subr.mxu0 0.0
        %1752 = vmatpush1.msra.mxu0 0.0
        %1753 = vmatprep.subr.mxu0 0.0
        %1754 = vmatpush1.msra.mxu0 0.0
        %1755 = vmatprep.subr.mxu0 0.0
        %1756 = vmatpush1.msra.mxu0 0.0
        %1757 = vmatprep.subr.mxu0 0.0
        %1758 = vmatpush1.msra.mxu0 0.0
        %1759 = vmatprep.subr.mxu0 0.0
        %1760 = vmatpush1.msra.mxu0 0.0
        %1761 = vmatprep.subr.mxu0 0.0
        %1762 = vmatpush1.msra.mxu0 0.0
        %1763 = vmatprep.subr.mxu0 0.0
        %1764 = vmatpush1.msra.mxu0 0.0
        %1765 = vmatprep.subr.mxu0 0.0
        %1766 = vmatpush1.msra.mxu0 0.0
        %1767 = vmatprep.subr.mxu0 0.0
        %1768 = vmatpush1.msra.mxu0 0.0
        %1769 = vmatprep.subr.mxu0 0.0
        %1770 = vmatpush1.msra.mxu0 0.0
        %1771 = vmatprep.subr.mxu0 0.0
        %1772 = vmatpush1.msra.mxu0 0.0
        %1773 = vmatprep.subr.mxu0 0.0
        %1774 = vmatpush1.msra.mxu0 0.0
        %1775 = vmatprep.subr.mxu0 0.0
        %1776 = vmatpush1.msra.mxu0 0.0
        %1777 = vmatprep.subr.mxu0 0.0
        %1778 = vmatpush1.msra.mxu0 0.0
        %1779 = vmatprep.subr.mxu0 0.0
        %1780 = vmatpush1.msra.mxu0 0.0
        %1781 = vmatprep.subr.mxu0 0.0
        %1782 = vmatpush1.msra.mxu0 0.0
        %1783 = vmatprep.subr.mxu0 0.0
        %1784 = vmatpush1.msra.mxu0 0.0
        %1785 = vmatprep.subr.mxu0 0.0
        %1786 = vmatpush1.msra.mxu0 0.0
        %1787 = vmatprep.subr.mxu0 0.0
        %1788 = vmatpush1.msra.mxu0 0.0
        %1789 = vmatprep.subr.mxu0 0.0
        %1790 = vmatpush1.msra.mxu0 0.0
        %1791 = vmatprep.subr.mxu0 0.0
        %1792 = vmatpush1.msra.mxu0 0.0
        %1793 = vmatprep.subr.mxu0 0.0
        %1794 = vmatpush1.msra.mxu0 0.0
        %1795 = vmatprep.subr.mxu0 0.0
        %1796 = vmatpush1.msra.mxu0 0.0
        %1797 = vmatprep.subr.mxu0 0.0
        %1798 = vmatpush1.msra.mxu0 0.0
        %1799 = vmatprep.subr.mxu0 0.0
        %1800 = vmatpush1.msra.mxu0 0.0
        %1801 = vmatprep.mubr.f32.mxu0 0.0
        %1802 = vmatmul.mubr.f32.gmra.mrb[0].mxu0 %v1639
        %v1803 = vpop.f32.mrb[0].mxu0
        %v1804 = vadd.f32 0.0, %v1803
        %v1805 = vpop.f32.mrb[0].mxu0
        %1806 = vmatprep.mubr.f32.mxu0 0.0
        %1807 = vmatmul.mubr.f32.gmra.mrb[0].mxu0 %v1642
        %v1808 = vpop.f32.mrb[0].mxu0
        %v1809 = vadd.f32 0.0, %v1808
        %v1810 = vpop.f32.mrb[0].mxu0
        %1811 = vmatprep.mubr.f32.mxu0 0.0
        %1812 = vmatmul.mubr.f32.gmra.mrb[0].mxu0 %v1645
        %v1813 = vpop.f32.mrb[0].mxu0
        %v1814 = vadd.f32 0.0, %v1813
        %v1815 = vpop.f32.mrb[0].mxu0
        %1816 = vmatprep.mubr.f32.mxu0 0.0
        %1817 = vmatmul.mubr.f32.gmra.mrb[0].mxu0 %v1648
        %v1818 = vpop.f32.mrb[0].mxu0
        %v1819 = vadd.f32 0.0, %v1818
        %v1820 = vpop.f32.mrb[0].mxu0
        %1821 = vmatprep.mubr.f32.mxu0 0.0
        %1822 = vmatmul.mubr.f32.gmra.mrb[0].mxu0 %v1651
        %v1823 = vpop.f32.mrb[0].mxu0
        %v1824 = vadd.f32 0.0, %v1823
        %v1825 = vpop.f32.mrb[0].mxu0
        %1826 = vmatprep.mubr.f32.mxu0 0.0
        %1827 = vmatmul.mubr.f32.gmra.mrb[0].mxu0 %v1654
        %v1828 = vpop.f32.mrb[0].mxu0
        %v1829 = vadd.f32 0.0, %v1828
        %v1830 = vpop.f32.mrb[0].mxu0
        %1831 = vmatprep.mubr.f32.mxu0 0.0
        %1832 = vmatmul.mubr.f32.gmra.mrb[0].mxu0 %v1657
        %v1833 = vpop.f32.mrb[0].mxu0
        %v1834 = vadd.f32 0.0, %v1833
        %v1835 = vpop.f32.mrb[0].mxu0
        %1836 = vmatprep.mubr.f32.mxu0 0.0
        %1837 = vmatmul.mubr.f32.gmra.mrb[0].mxu0 %v1660
        %v1838 = vpop.f32.mrb[0].mxu0
        %v1839 = vadd.f32 0.0, %v1838
        %v1840 = vpop.f32.mrb[0].mxu0
        %1841 = vmatprep.mubr.f32.mxu0 0.0
        %1842 = vmatmul.mubr.f32.gmra.mrb[0].mxu0 %v1663
        %v1843 = vpop.f32.mrb[0].mxu0
        %v1844 = vadd.f32 0.0, %v1843
        %v1845 = vpop.f32.mrb[0].mxu0
        %1846 = vmatprep.mubr.f32.mxu0 0.0
        %1847 = vmatmul.mubr.f32.gmra.mrb[0].mxu0 %v1666
        %v1848 = vpop.f32.mrb[0].mxu0
        %v1849 = vadd.f32 0.0, %v1848
        %v1850 = vpop.f32.mrb[0].mxu0
        %1851 = vmatprep.mubr.f32.mxu0 0.0
        %1852 = vmatmul.mubr.f32.gmra.mrb[0].mxu0 %v1669
        %v1853 = vpop.f32.mrb[0].mxu0
        %v1854 = vadd.f32 0.0, %v1853
        %v1855 = vpop.f32.mrb[0].mxu0
        %1856 = vmatprep.mubr.f32.mxu0 0.0
        %1857 = vmatmul.mubr.f32.gmra.mrb[0].mxu0 %v1672
        %v1858 = vpop.f32.mrb[0].mxu0
        %v1859 = vadd.f32 0.0, %v1858
        %v1860 = vpop.f32.mrb[0].mxu0
        %1861 = vmatprep.mubr.f32.mxu0 0.0
        %1862 = vmatmul.mubr.f32.gmra.mrb[0].mxu0 %v1675
        %v1863 = vpop.f32.mrb[0].mxu0
        %v1864 = vadd.f32 0.0, %v1863
        %v1865 = vpop.f32.mrb[0].mxu0
        %1866 = vmatprep.mubr.f32.mxu0 0.0
        %1867 = vmatmul.mubr.f32.gmra.mrb[0].mxu0 %v1678
        %v1868 = vpop.f32.mrb[0].mxu0
        %v1869 = vadd.f32 0.0, %v1868
        %v1870 = vpop.f32.mrb[0].mxu0
        %1871 = vmatprep.mubr.f32.mxu0 0.0
        %1872 = vmatmul.mubr.f32.gmra.mrb[0].mxu0 %v1681
        %v1873 = vpop.f32.mrb[0].mxu0
        %v1874 = vadd.f32 0.0, %v1873
        %v1875 = vpop.f32.mrb[0].mxu0
        %1876 = vmatprep.mubr.f32.mxu0 0.0
        %1877 = vmatmul.mubr.f32.gmra.mrb[0].mxu0 %v1684
        %v1878 = vpop.f32.mrb[0].mxu0
        %v1879 = vadd.f32 0.0, %v1878
        %v1880 = vpop.f32.mrb[0].mxu0
        %1881 = vmatprep.mubr.f32.mxu0 0.0
        %1882 = vmatmul.mubr.f32.gmra.mrb[0].mxu0 %v1687
        %v1883 = vpop.f32.mrb[0].mxu0
        %v1884 = vadd.f32 0.0, %v1883
        %v1885 = vpop.f32.mrb[0].mxu0
        %1886 = vmatprep.mubr.f32.mxu0 0.0
        %1887 = vmatmul.mubr.f32.gmra.mrb[0].mxu0 %v1690
        %v1888 = vpop.f32.mrb[0].mxu0
        %v1889 = vadd.f32 0.0, %v1888
        %v1890 = vpop.f32.mrb[0].mxu0
        %1891 = vmatprep.mubr.f32.mxu0 0.0
        %1892 = vmatmul.mubr.f32.gmra.mrb[0].mxu0 %v1693
        %v1893 = vpop.f32.mrb[0].mxu0
        %v1894 = vadd.f32 0.0, %v1893
        %v1895 = vpop.f32.mrb[0].mxu0
        %1896 = vmatprep.mubr.f32.mxu0 0.0
        %1897 = vmatmul.mubr.f32.gmra.mrb[0].mxu0 %v1696
        %v1898 = vpop.f32.mrb[0].mxu0
        %v1899 = vadd.f32 0.0, %v1898
        %v1900 = vpop.f32.mrb[0].mxu0
        %1901 = vmatprep.mubr.f32.mxu0 0.0
        %1902 = vmatmul.mubr.f32.gmra.mrb[0].mxu0 %v1699
        %v1903 = vpop.f32.mrb[0].mxu0
        %v1904 = vadd.f32 0.0, %v1903
        %v1905 = vpop.f32.mrb[0].mxu0
        %1906 = vmatprep.mubr.f32.mxu0 0.0
        %1907 = vmatmul.mubr.f32.gmra.mrb[0].mxu0 %v1702
        %v1908 = vpop.f32.mrb[0].mxu0
        %v1909 = vadd.f32 0.0, %v1908
        %v1910 = vpop.f32.mrb[0].mxu0
        %1911 = vmatprep.mubr.f32.mxu0 0.0
        %1912 = vmatmul.mubr.f32.gmra.mrb[0].mxu0 %v1705
        %v1913 = vpop.f32.mrb[0].mxu0
        %v1914 = vadd.f32 0.0, %v1913
        %v1915 = vpop.f32.mrb[0].mxu0
        %1916 = vmatprep.mubr.f32.mxu0 0.0
        %1917 = vmatmul.mubr.f32.gmra.mrb[0].mxu0 %v1708
        %v1918 = vpop.f32.mrb[0].mxu0
        %v1919 = vadd.f32 0.0, %v1918
        %v1920 = vpop.f32.mrb[0].mxu0
        %1921 = vmatprep.mubr.f32.mxu0 0.0
        %1922 = vmatmul.mubr.f32.gmra.mrb[0].mxu0 %v1711
        %v1923 = vpop.f32.mrb[0].mxu0
        %v1924 = vadd.f32 0.0, %v1923
        %v1925 = vpop.f32.mrb[0].mxu0
        %1926 = vmatprep.mubr.f32.mxu0 0.0
        %1927 = vmatmul.mubr.f32.gmra.mrb[0].mxu0 %v1714
        %v1928 = vpop.f32.mrb[0].mxu0
        %v1929 = vadd.f32 0.0, %v1928
        %v1930 = vpop.f32.mrb[0].mxu0
        %1931 = vmatprep.mubr.f32.mxu0 0.0
        %1932 = vmatmul.mubr.f32.gmra.mrb[0].mxu0 %v1717
        %v1933 = vpop.f32.mrb[0].mxu0
        %v1934 = vadd.f32 0.0, %v1933
        %v1935 = vpop.f32.mrb[0].mxu0
        %1936 = vmatprep.mubr.f32.mxu0 0.0
        %1937 = vmatmul.mubr.f32.gmra.mrb[0].mxu0 %v1720
        %v1938 = vpop.f32.mrb[0].mxu0
        %v1939 = vadd.f32 0.0, %v1938
        %v1940 = vpop.f32.mrb[0].mxu0
        %1941 = vmatprep.mubr.f32.mxu0 0.0
        %1942 = vmatmul.mubr.f32.gmra.mrb[0].mxu0 %v1723
        %v1943 = vpop.f32.mrb[0].mxu0
        %v1944 = vadd.f32 0.0, %v1943
        %v1945 = vpop.f32.mrb[0].mxu0
        %1946 = vmatprep.mubr.f32.mxu0 0.0
        %1947 = vmatmul.mubr.f32.gmra.mrb[0].mxu0 %v1726
        %v1948 = vpop.f32.mrb[0].mxu0
        %v1949 = vadd.f32 0.0, %v1948
        %v1950 = vpop.f32.mrb[0].mxu0
        %1951 = vmatprep.mubr.f32.mxu0 0.0
        %1952 = vmatmul.mubr.f32.gmra.mrb[0].mxu0 %v1729
        %v1953 = vpop.f32.mrb[0].mxu0
        %v1954 = vadd.f32 0.0, %v1953
        %v1955 = vpop.f32.mrb[0].mxu0
        %1956 = vmatprep.mubr.f32.mxu0 0.0
        %1957 = vmatmul.mubr.f32.gmra.mrb[0].mxu0 %v1732
        %v1958 = vpop.f32.mrb[0].mxu0
        %v1959 = vadd.f32 0.0, %v1958
        %v1960 = vpop.f32.mrb[0].mxu0
        %1961 = vdwg.mxu0
        %v1962 = vadd.f32 %v1604, %v1804
        %v1963 = vadd.f32 %v1605, %v1809
        %v1964 = vadd.f32 %v1606, %v1814
        %v1965 = vadd.f32 %v1607, %v1819
        %v1966 = vadd.f32 %v1608, %v1824
        %v1967 = vadd.f32 %v1609, %v1829
        %v1968 = vadd.f32 %v1610, %v1834
        %v1969 = vadd.f32 %v1611, %v1839
        %v1970 = vadd.f32 %v1612, %v1844
        %v1971 = vadd.f32 %v1613, %v1849
        %v1972 = vadd.f32 %v1614, %v1854
        %v1973 = vadd.f32 %v1615, %v1859
        %v1974 = vadd.f32 %v1616, %v1864
        %v1975 = vadd.f32 %v1617, %v1869
        %v1976 = vadd.f32 %v1618, %v1874
        %v1977 = vadd.f32 %v1619, %v1879
        %v1978 = vadd.f32 %v1620, %v1884
        %v1979 = vadd.f32 %v1621, %v1889
        %v1980 = vadd.f32 %v1622, %v1894
        %v1981 = vadd.f32 %v1623, %v1899
        %v1982 = vadd.f32 %v1624, %v1904
        %v1983 = vadd.f32 %v1625, %v1909
        %v1984 = vadd.f32 %v1626, %v1914
        %v1985 = vadd.f32 %v1627, %v1919
        %v1986 = vadd.f32 %v1628, %v1924
        %v1987 = vadd.f32 %v1629, %v1929
        %v1988 = vadd.f32 %v1630, %v1934
        %v1989 = vadd.f32 %v1631, %v1939
        %v1990 = vadd.f32 %v1632, %v1944
        %v1991 = vadd.f32 %v1633, %v1949
        %v1992 = vadd.f32 %v1634, %v1954
        %v1993 = vadd.f32 %v1635, %v1959
        %1994 = vst [vmem:[#allocation2] sm:$0xff] %v1962
        %1995 = vst [vmem:[#allocation2 + $0x8] sm:$0xff] %v1963
        %1996 = vst [vmem:[#allocation2 + $0x10] sm:$0xff] %v1964
        %1997 = vst [vmem:[#allocation2 + $0x18] sm:$0xff] %v1965
        %1998 = vst [vmem:[#allocation2 + $0x20] sm:$0xff] %v1966
        %1999 = vst [vmem:[#allocation2 + $0x28] sm:$0xff] %v1967
        %2000 = vst [vmem:[#allocation2 + $0x30] sm:$0xff] %v1968
        %2001 = vst [vmem:[#allocation2 + $0x38] sm:$0xff] %v1969
        %2002 = vst [vmem:[#allocation2 + $0x40] sm:$0xff] %v1970
        %2003 = vst [vmem:[#allocation2 + $0x48] sm:$0xff] %v1971
        %2004 = vst [vmem:[#allocation2 + $0x50] sm:$0xff] %v1972
        %2005 = vst [vmem:[#allocation2 + $0x58] sm:$0xff] %v1973
        %2006 = vst [vmem:[#allocation2 + $0x60] sm:$0xff] %v1974
        %2007 = vst [vmem:[#allocation2 + $0x68] sm:$0xff] %v1975
        %2008 = vst [vmem:[#allocation2 + $0x70] sm:$0xff] %v1976
        %2009 = vst [vmem:[#allocation2 + $0x78] sm:$0xff] %v1977
        %2010 = vst [vmem:[#allocation2 + $0x80] sm:$0xff] %v1978
        %2011 = vst [vmem:[#allocation2 + $0x88] sm:$0xff] %v1979
        %2012 = vst [vmem:[#allocation2 + $0x90] sm:$0xff] %v1980
        %2013 = vst [vmem:[#allocation2 + $0x98] sm:$0xff] %v1981
        %2014 = vst [vmem:[#allocation2 + $0xa0] sm:$0xff] %v1982
        %2015 = vst [vmem:[#allocation2 + $0xa8] sm:$0xff] %v1983
        %2016 = vst [vmem:[#allocation2 + $0xb0] sm:$0xff] %v1984
        %2017 = vst [vmem:[#allocation2 + $0xb8] sm:$0xff] %v1985
        %2018 = vst [vmem:[#allocation2 + $0xc0] sm:$0xff] %v1986
        %2019 = vst [vmem:[#allocation2 + $0xc8] sm:$0xff] %v1987
        %2020 = vst [vmem:[#allocation2 + $0xd0] sm:$0xff] %v1988
        %2021 = vst [vmem:[#allocation2 + $0xd8] sm:$0xff] %v1989
        %2022 = vst [vmem:[#allocation2 + $0xe0] sm:$0xff] %v1990
        %2023 = vst [vmem:[#allocation2 + $0xe8] sm:$0xff] %v1991
        %2024 = vst [vmem:[#allocation2 + $0xf0] sm:$0xff] %v1992
        %2025 = vst [vmem:[#allocation2 + $0xf8] sm:$0xff] %v1993
        %v2026 = vld [vmem:[%s1571 + $0x1] sm:$0xff]
        %v2027 = vld [vmem:[%s1571 + $0x9] sm:$0xff]
        %v2028 = vld [vmem:[%s1571 + $0x19] sm:$0xff]
        %v2029 = vld [vmem:[%s1571 + $0x21] sm:$0xff]
        %v2030 = vld [vmem:[%s1571 + $0x31] sm:$0xff]
        %v2031 = vld [vmem:[%s1571 + $0x39] sm:$0xff]
        %v2032 = vld [vmem:[%s1571 + $0x49] sm:$0xff]
        %v2033 = vld [vmem:[%s1571 + $0x51] sm:$0xff]
        %v2034 = vld [vmem:[%s1571 + $0x61] sm:$0xff]
        %v2035 = vld [vmem:[%s1571 + $0x69] sm:$0xff]
        %v2036 = vld [vmem:[%s1571 + $0x79] sm:$0xff]
        %v2037 = vld [vmem:[%s1571 + $0x81] sm:$0xff]
        %v2038 = vld [vmem:[%s1571 + $0x91] sm:$0xff]
        %v2039 = vld [vmem:[%s1571 + $0x99] sm:$0xff]
        %v2040 = vld [vmem:[%s1571 + $0xa9] sm:$0xff]
        %v2041 = vld [vmem:[%s1571 + $0xb1] sm:$0xff]
        %v2042 = vld [vmem:[%s1571 + $0xc1] sm:$0xff]
        %v2043 = vld [vmem:[%s1571 + $0xc9] sm:$0xff]
        %v2044 = vld [vmem:[%s1571 + $0xd9] sm:$0xff]
        %v2045 = vld [vmem:[%s1571 + $0xe1] sm:$0xff]
        %v2046 = vld [vmem:[%s1571 + $0xf1] sm:$0xff]
        %v2047 = vld [vmem:[%s1571 + $0xf9] sm:$0xff]
        %v2048 = vld [vmem:[%s1571 + $0x109] sm:$0xff]
        %v2049 = vld [vmem:[%s1571 + $0x111] sm:$0xff]
        %v2050 = vld [vmem:[%s1571 + $0x121] sm:$0xff]
        %v2051 = vld [vmem:[%s1571 + $0x129] sm:$0xff]
        %v2052 = vld [vmem:[%s1571 + $0x139] sm:$0xff]
        %v2053 = vld [vmem:[%s1571 + $0x141] sm:$0xff]
        %v2054 = vld [vmem:[%s1571 + $0x151] sm:$0xff]
        %v2055 = vld [vmem:[%s1571 + $0x159] sm:$0xff]
        %v2056 = vld [vmem:[%s1571 + $0x169] sm:$0xff]
        %v2057 = vld [vmem:[%s1571 + $0x171] sm:$0xff]
        %v2058 = vld [vmem:[#allocation2] sm:$0xff]
        %v2059 = vld [vmem:[#allocation2 + $0x8] sm:$0xff]
        %v2060 = vld [vmem:[#allocation2 + $0x10] sm:$0xff]
        %v2061 = vld [vmem:[#allocation2 + $0x18] sm:$0xff]
        %v2062 = vld [vmem:[#allocation2 + $0x20] sm:$0xff]
        %v2063 = vld [vmem:[#allocation2 + $0x28] sm:$0xff]
        %v2064 = vld [vmem:[#allocation2 + $0x30] sm:$0xff]
        %v2065 = vld [vmem:[#allocation2 + $0x38] sm:$0xff]
        %v2066 = vld [vmem:[#allocation2 + $0x40] sm:$0xff]
        %v2067 = vld [vmem:[#allocation2 + $0x48] sm:$0xff]
        %v2068 = vld [vmem:[#allocation2 + $0x50] sm:$0xff]
        %v2069 = vld [vmem:[#allocation2 + $0x58] sm:$0xff]
        %v2070 = vld [vmem:[#allocation2 + $0x60] sm:$0xff]
        %v2071 = vld [vmem:[#allocation2 + $0x68] sm:$0xff]
        %v2072 = vld [vmem:[#allocation2 + $0x70] sm:$0xff]
        %v2073 = vld [vmem:[#allocation2 + $0x78] sm:$0xff]
        %v2074 = vld [vmem:[#allocation2 + $0x80] sm:$0xff]
        %v2075 = vld [vmem:[#allocation2 + $0x88] sm:$0xff]
        %v2076 = vld [vmem:[#allocation2 + $0x90] sm:$0xff]
        %v2077 = vld [vmem:[#allocation2 + $0x98] sm:$0xff]
        %v2078 = vld [vmem:[#allocation2 + $0xa0] sm:$0xff]
        %v2079 = vld [vmem:[#allocation2 + $0xa8] sm:$0xff]
        %v2080 = vld [vmem:[#allocation2 + $0xb0] sm:$0xff]
        %v2081 = vld [vmem:[#allocation2 + $0xb8] sm:$0xff]
        %v2082 = vld [vmem:[#allocation2 + $0xc0] sm:$0xff]
        %v2083 = vld [vmem:[#allocation2 + $0xc8] sm:$0xff]
        %v2084 = vld [vmem:[#allocation2 + $0xd0] sm:$0xff]
        %v2085 = vld [vmem:[#allocation2 + $0xd8] sm:$0xff]
        %v2086 = vld [vmem:[#allocation2 + $0xe0] sm:$0xff]
        %v2087 = vld [vmem:[#allocation2 + $0xe8] sm:$0xff]
        %v2088 = vld [vmem:[#allocation2 + $0xf0] sm:$0xff]
        %v2089 = vld [vmem:[#allocation2 + $0xf8] sm:$0xff]
        %s2090 = scalar_lea.vmem %s1, 16
        %v2091 = vld [vmem:[%s2090] sm:$0xf]
        %v2093 = vsel %vm273, %v2026, 0
        %v2096 = vsel %vm273, %v2027, 0
        %v2099 = vsel %vm273, %v2028, 0
        %v2102 = vsel %vm273, %v2029, 0
        %v2105 = vsel %vm273, %v2030, 0
        %v2108 = vsel %vm273, %v2031, 0
        %v2111 = vsel %vm273, %v2032, 0
        %v2114 = vsel %vm273, %v2033, 0
        %v2117 = vsel %vm273, %v2034, 0
        %v2120 = vsel %vm273, %v2035, 0
        %v2123 = vsel %vm273, %v2036, 0
        %v2126 = vsel %vm273, %v2037, 0
        %v2129 = vsel %vm273, %v2038, 0
        %v2132 = vsel %vm273, %v2039, 0
        %v2135 = vsel %vm273, %v2040, 0
        %v2138 = vsel %vm273, %v2041, 0
        %v2141 = vsel %vm273, %v2042, 0
        %v2144 = vsel %vm273, %v2043, 0
        %v2147 = vsel %vm273, %v2044, 0
        %v2150 = vsel %vm273, %v2045, 0
        %v2153 = vsel %vm273, %v2046, 0
        %v2156 = vsel %vm273, %v2047, 0
        %v2159 = vsel %vm273, %v2048, 0
        %v2162 = vsel %vm273, %v2049, 0
        %v2165 = vsel %vm273, %v2050, 0
        %v2168 = vsel %vm273, %v2051, 0
        %v2171 = vsel %vm273, %v2052, 0
        %v2174 = vsel %vm273, %v2053, 0
        %v2177 = vsel %vm273, %v2054, 0
        %v2180 = vsel %vm273, %v2055, 0
        %v2183 = vsel %vm273, %v2056, 0
        %v2186 = vsel %vm273, %v2057, 0
        %v2189 = vsel %vm370, %v2091, 0
        %2191 = vmatprep.subr.mxu0 0.0
        %2192 = vmatpush1.msra.mxu0 %v2189
        %2193 = vmatprep.subr.mxu0 0.0
        %2194 = vmatpush1.msra.mxu0 0.0
        %2195 = vmatprep.subr.mxu0 0.0
        %2196 = vmatpush1.msra.mxu0 0.0
        %2197 = vmatprep.subr.mxu0 0.0
        %2198 = vmatpush1.msra.mxu0 0.0
        %2199 = vmatprep.subr.mxu0 0.0
        %2200 = vmatpush1.msra.mxu0 0.0
        %2201 = vmatprep.subr.mxu0 0.0
        %2202 = vmatpush1.msra.mxu0 0.0
        %2203 = vmatprep.subr.mxu0 0.0
        %2204 = vmatpush1.msra.mxu0 0.0
        %2205 = vmatprep.subr.mxu0 0.0
        %2206 = vmatpush1.msra.mxu0 0.0
        %2207 = vmatprep.subr.mxu0 0.0
        %2208 = vmatpush1.msra.mxu0 0.0
        %2209 = vmatprep.subr.mxu0 0.0
        %2210 = vmatpush1.msra.mxu0 0.0
        %2211 = vmatprep.subr.mxu0 0.0
        %2212 = vmatpush1.msra.mxu0 0.0
        %2213 = vmatprep.subr.mxu0 0.0
        %2214 = vmatpush1.msra.mxu0 0.0
        %2215 = vmatprep.subr.mxu0 0.0
        %2216 = vmatpush1.msra.mxu0 0.0
        %2217 = vmatprep.subr.mxu0 0.0
        %2218 = vmatpush1.msra.mxu0 0.0
        %2219 = vmatprep.subr.mxu0 0.0
        %2220 = vmatpush1.msra.mxu0 0.0
        %2221 = vmatprep.subr.mxu0 0.0
        %2222 = vmatpush1.msra.mxu0 0.0
        %2223 = vmatprep.subr.mxu0 0.0
        %2224 = vmatpush1.msra.mxu0 0.0
        %2225 = vmatprep.subr.mxu0 0.0
        %2226 = vmatpush1.msra.mxu0 0.0
        %2227 = vmatprep.subr.mxu0 0.0
        %2228 = vmatpush1.msra.mxu0 0.0
        %2229 = vmatprep.subr.mxu0 0.0
        %2230 = vmatpush1.msra.mxu0 0.0
        %2231 = vmatprep.subr.mxu0 0.0
        %2232 = vmatpush1.msra.mxu0 0.0
        %2233 = vmatprep.subr.mxu0 0.0
        %2234 = vmatpush1.msra.mxu0 0.0
        %2235 = vmatprep.subr.mxu0 0.0
        %2236 = vmatpush1.msra.mxu0 0.0
        %2237 = vmatprep.subr.mxu0 0.0
        %2238 = vmatpush1.msra.mxu0 0.0
        %2239 = vmatprep.subr.mxu0 0.0
        %2240 = vmatpush1.msra.mxu0 0.0
        %2241 = vmatprep.subr.mxu0 0.0
        %2242 = vmatpush1.msra.mxu0 0.0
        %2243 = vmatprep.subr.mxu0 0.0
        %2244 = vmatpush1.msra.mxu0 0.0
        %2245 = vmatprep.subr.mxu0 0.0
        %2246 = vmatpush1.msra.mxu0 0.0
        %2247 = vmatprep.subr.mxu0 0.0
        %2248 = vmatpush1.msra.mxu0 0.0
        %2249 = vmatprep.subr.mxu0 0.0
        %2250 = vmatpush1.msra.mxu0 0.0
        %2251 = vmatprep.subr.mxu0 0.0
        %2252 = vmatpush1.msra.mxu0 0.0
        %2253 = vmatprep.subr.mxu0 0.0
        %2254 = vmatpush1.msra.mxu0 0.0
        %2255 = vmatprep.mubr.f32.mxu0 0.0
        %2256 = vmatmul.mubr.f32.gmra.mrb[0].mxu0 %v2093
        %v2257 = vpop.f32.mrb[0].mxu0
        %v2258 = vadd.f32 0.0, %v2257
        %v2259 = vpop.f32.mrb[0].mxu0
        %2260 = vmatprep.mubr.f32.mxu0 0.0
        %2261 = vmatmul.mubr.f32.gmra.mrb[0].mxu0 %v2096
        %v2262 = vpop.f32.mrb[0].mxu0
        %v2263 = vadd.f32 0.0, %v2262
        %v2264 = vpop.f32.mrb[0].mxu0
        %2265 = vmatprep.mubr.f32.mxu0 0.0
        %2266 = vmatmul.mubr.f32.gmra.mrb[0].mxu0 %v2099
        %v2267 = vpop.f32.mrb[0].mxu0
        %v2268 = vadd.f32 0.0, %v2267
        %v2269 = vpop.f32.mrb[0].mxu0
        %2270 = vmatprep.mubr.f32.mxu0 0.0
        %2271 = vmatmul.mubr.f32.gmra.mrb[0].mxu0 %v2102
        %v2272 = vpop.f32.mrb[0].mxu0
        %v2273 = vadd.f32 0.0, %v2272
        %v2274 = vpop.f32.mrb[0].mxu0
        %2275 = vmatprep.mubr.f32.mxu0 0.0
        %2276 = vmatmul.mubr.f32.gmra.mrb[0].mxu0 %v2105
        %v2277 = vpop.f32.mrb[0].mxu0
        %v2278 = vadd.f32 0.0, %v2277
        %v2279 = vpop.f32.mrb[0].mxu0
        %2280 = vmatprep.mubr.f32.mxu0 0.0
        %2281 = vmatmul.mubr.f32.gmra.mrb[0].mxu0 %v2108
        %v2282 = vpop.f32.mrb[0].mxu0
        %v2283 = vadd.f32 0.0, %v2282
        %v2284 = vpop.f32.mrb[0].mxu0
        %2285 = vmatprep.mubr.f32.mxu0 0.0
        %2286 = vmatmul.mubr.f32.gmra.mrb[0].mxu0 %v2111
        %v2287 = vpop.f32.mrb[0].mxu0
        %v2288 = vadd.f32 0.0, %v2287
        %v2289 = vpop.f32.mrb[0].mxu0
        %2290 = vmatprep.mubr.f32.mxu0 0.0
        %2291 = vmatmul.mubr.f32.gmra.mrb[0].mxu0 %v2114
        %v2292 = vpop.f32.mrb[0].mxu0
        %v2293 = vadd.f32 0.0, %v2292
        %v2294 = vpop.f32.mrb[0].mxu0
        %2295 = vmatprep.mubr.f32.mxu0 0.0
        %2296 = vmatmul.mubr.f32.gmra.mrb[0].mxu0 %v2117
        %v2297 = vpop.f32.mrb[0].mxu0
        %v2298 = vadd.f32 0.0, %v2297
        %v2299 = vpop.f32.mrb[0].mxu0
        %2300 = vmatprep.mubr.f32.mxu0 0.0
        %2301 = vmatmul.mubr.f32.gmra.mrb[0].mxu0 %v2120
        %v2302 = vpop.f32.mrb[0].mxu0
        %v2303 = vadd.f32 0.0, %v2302
        %v2304 = vpop.f32.mrb[0].mxu0
        %2305 = vmatprep.mubr.f32.mxu0 0.0
        %2306 = vmatmul.mubr.f32.gmra.mrb[0].mxu0 %v2123
        %v2307 = vpop.f32.mrb[0].mxu0
        %v2308 = vadd.f32 0.0, %v2307
        %v2309 = vpop.f32.mrb[0].mxu0
        %2310 = vmatprep.mubr.f32.mxu0 0.0
        %2311 = vmatmul.mubr.f32.gmra.mrb[0].mxu0 %v2126
        %v2312 = vpop.f32.mrb[0].mxu0
        %v2313 = vadd.f32 0.0, %v2312
        %v2314 = vpop.f32.mrb[0].mxu0
        %2315 = vmatprep.mubr.f32.mxu0 0.0
        %2316 = vmatmul.mubr.f32.gmra.mrb[0].mxu0 %v2129
        %v2317 = vpop.f32.mrb[0].mxu0
        %v2318 = vadd.f32 0.0, %v2317
        %v2319 = vpop.f32.mrb[0].mxu0
        %2320 = vmatprep.mubr.f32.mxu0 0.0
        %2321 = vmatmul.mubr.f32.gmra.mrb[0].mxu0 %v2132
        %v2322 = vpop.f32.mrb[0].mxu0
        %v2323 = vadd.f32 0.0, %v2322
        %v2324 = vpop.f32.mrb[0].mxu0
        %2325 = vmatprep.mubr.f32.mxu0 0.0
        %2326 = vmatmul.mubr.f32.gmra.mrb[0].mxu0 %v2135
        %v2327 = vpop.f32.mrb[0].mxu0
        %v2328 = vadd.f32 0.0, %v2327
        %v2329 = vpop.f32.mrb[0].mxu0
        %2330 = vmatprep.mubr.f32.mxu0 0.0
        %2331 = vmatmul.mubr.f32.gmra.mrb[0].mxu0 %v2138
        %v2332 = vpop.f32.mrb[0].mxu0
        %v2333 = vadd.f32 0.0, %v2332
        %v2334 = vpop.f32.mrb[0].mxu0
        %2335 = vmatprep.mubr.f32.mxu0 0.0
        %2336 = vmatmul.mubr.f32.gmra.mrb[0].mxu0 %v2141
        %v2337 = vpop.f32.mrb[0].mxu0
        %v2338 = vadd.f32 0.0, %v2337
        %v2339 = vpop.f32.mrb[0].mxu0
        %2340 = vmatprep.mubr.f32.mxu0 0.0
        %2341 = vmatmul.mubr.f32.gmra.mrb[0].mxu0 %v2144
        %v2342 = vpop.f32.mrb[0].mxu0
        %v2343 = vadd.f32 0.0, %v2342
        %v2344 = vpop.f32.mrb[0].mxu0
        %2345 = vmatprep.mubr.f32.mxu0 0.0
        %2346 = vmatmul.mubr.f32.gmra.mrb[0].mxu0 %v2147
        %v2347 = vpop.f32.mrb[0].mxu0
        %v2348 = vadd.f32 0.0, %v2347
        %v2349 = vpop.f32.mrb[0].mxu0
        %2350 = vmatprep.mubr.f32.mxu0 0.0
        %2351 = vmatmul.mubr.f32.gmra.mrb[0].mxu0 %v2150
        %v2352 = vpop.f32.mrb[0].mxu0
        %v2353 = vadd.f32 0.0, %v2352
        %v2354 = vpop.f32.mrb[0].mxu0
        %2355 = vmatprep.mubr.f32.mxu0 0.0
        %2356 = vmatmul.mubr.f32.gmra.mrb[0].mxu0 %v2153
        %v2357 = vpop.f32.mrb[0].mxu0
        %v2358 = vadd.f32 0.0, %v2357
        %v2359 = vpop.f32.mrb[0].mxu0
        %2360 = vmatprep.mubr.f32.mxu0 0.0
        %2361 = vmatmul.mubr.f32.gmra.mrb[0].mxu0 %v2156
        %v2362 = vpop.f32.mrb[0].mxu0
        %v2363 = vadd.f32 0.0, %v2362
        %v2364 = vpop.f32.mrb[0].mxu0
        %2365 = vmatprep.mubr.f32.mxu0 0.0
        %2366 = vmatmul.mubr.f32.gmra.mrb[0].mxu0 %v2159
        %v2367 = vpop.f32.mrb[0].mxu0
        %v2368 = vadd.f32 0.0, %v2367
        %v2369 = vpop.f32.mrb[0].mxu0
        %2370 = vmatprep.mubr.f32.mxu0 0.0
        %2371 = vmatmul.mubr.f32.gmra.mrb[0].mxu0 %v2162
        %v2372 = vpop.f32.mrb[0].mxu0
        %v2373 = vadd.f32 0.0, %v2372
        %v2374 = vpop.f32.mrb[0].mxu0
        %2375 = vmatprep.mubr.f32.mxu0 0.0
        %2376 = vmatmul.mubr.f32.gmra.mrb[0].mxu0 %v2165
        %v2377 = vpop.f32.mrb[0].mxu0
        %v2378 = vadd.f32 0.0, %v2377
        %v2379 = vpop.f32.mrb[0].mxu0
        %2380 = vmatprep.mubr.f32.mxu0 0.0
        %2381 = vmatmul.mubr.f32.gmra.mrb[0].mxu0 %v2168
        %v2382 = vpop.f32.mrb[0].mxu0
        %v2383 = vadd.f32 0.0, %v2382
        %v2384 = vpop.f32.mrb[0].mxu0
        %2385 = vmatprep.mubr.f32.mxu0 0.0
        %2386 = vmatmul.mubr.f32.gmra.mrb[0].mxu0 %v2171
        %v2387 = vpop.f32.mrb[0].mxu0
        %v2388 = vadd.f32 0.0, %v2387
        %v2389 = vpop.f32.mrb[0].mxu0
        %2390 = vmatprep.mubr.f32.mxu0 0.0
        %2391 = vmatmul.mubr.f32.gmra.mrb[0].mxu0 %v2174
        %v2392 = vpop.f32.mrb[0].mxu0
        %v2393 = vadd.f32 0.0, %v2392
        %v2394 = vpop.f32.mrb[0].mxu0
        %2395 = vmatprep.mubr.f32.mxu0 0.0
        %2396 = vmatmul.mubr.f32.gmra.mrb[0].mxu0 %v2177
        %v2397 = vpop.f32.mrb[0].mxu0
        %v2398 = vadd.f32 0.0, %v2397
        %v2399 = vpop.f32.mrb[0].mxu0
        %2400 = vmatprep.mubr.f32.mxu0 0.0
        %2401 = vmatmul.mubr.f32.gmra.mrb[0].mxu0 %v2180
        %v2402 = vpop.f32.mrb[0].mxu0
        %v2403 = vadd.f32 0.0, %v2402
        %v2404 = vpop.f32.mrb[0].mxu0
        %2405 = vmatprep.mubr.f32.mxu0 0.0
        %2406 = vmatmul.mubr.f32.gmra.mrb[0].mxu0 %v2183
        %v2407 = vpop.f32.mrb[0].mxu0
        %v2408 = vadd.f32 0.0, %v2407
        %v2409 = vpop.f32.mrb[0].mxu0
        %2410 = vmatprep.mubr.f32.mxu0 0.0
        %2411 = vmatmul.mubr.f32.gmra.mrb[0].mxu0 %v2186
        %v2412 = vpop.f32.mrb[0].mxu0
        %v2413 = vadd.f32 0.0, %v2412
        %v2414 = vpop.f32.mrb[0].mxu0
        %2415 = vdwg.mxu0
        %v2416 = vadd.f32 %v2058, %v2258
        %v2417 = vadd.f32 %v2059, %v2263
        %v2418 = vadd.f32 %v2060, %v2268
        %v2419 = vadd.f32 %v2061, %v2273
        %v2420 = vadd.f32 %v2062, %v2278
        %v2421 = vadd.f32 %v2063, %v2283
        %v2422 = vadd.f32 %v2064, %v2288
        %v2423 = vadd.f32 %v2065, %v2293
        %v2424 = vadd.f32 %v2066, %v2298
        %v2425 = vadd.f32 %v2067, %v2303
        %v2426 = vadd.f32 %v2068, %v2308
        %v2427 = vadd.f32 %v2069, %v2313
        %v2428 = vadd.f32 %v2070, %v2318
        %v2429 = vadd.f32 %v2071, %v2323
        %v2430 = vadd.f32 %v2072, %v2328
        %v2431 = vadd.f32 %v2073, %v2333
        %v2432 = vadd.f32 %v2074, %v2338
        %v2433 = vadd.f32 %v2075, %v2343
        %v2434 = vadd.f32 %v2076, %v2348
        %v2435 = vadd.f32 %v2077, %v2353
        %v2436 = vadd.f32 %v2078, %v2358
        %v2437 = vadd.f32 %v2079, %v2363
        %v2438 = vadd.f32 %v2080, %v2368
        %v2439 = vadd.f32 %v2081, %v2373
        %v2440 = vadd.f32 %v2082, %v2378
        %v2441 = vadd.f32 %v2083, %v2383
        %v2442 = vadd.f32 %v2084, %v2388
        %v2443 = vadd.f32 %v2085, %v2393
        %v2444 = vadd.f32 %v2086, %v2398
        %v2445 = vadd.f32 %v2087, %v2403
        %v2446 = vadd.f32 %v2088, %v2408
        %v2447 = vadd.f32 %v2089, %v2413
        %2448 = vst [vmem:[#allocation2] sm:$0xff] %v2416
        %2449 = vst [vmem:[#allocation2 + $0x8] sm:$0xff] %v2417
        %2450 = vst [vmem:[#allocation2 + $0x10] sm:$0xff] %v2418
        %2451 = vst [vmem:[#allocation2 + $0x18] sm:$0xff] %v2419
        %2452 = vst [vmem:[#allocation2 + $0x20] sm:$0xff] %v2420
        %2453 = vst [vmem:[#allocation2 + $0x28] sm:$0xff] %v2421
        %2454 = vst [vmem:[#allocation2 + $0x30] sm:$0xff] %v2422
        %2455 = vst [vmem:[#allocation2 + $0x38] sm:$0xff] %v2423
        %2456 = vst [vmem:[#allocation2 + $0x40] sm:$0xff] %v2424
        %2457 = vst [vmem:[#allocation2 + $0x48] sm:$0xff] %v2425
        %2458 = vst [vmem:[#allocation2 + $0x50] sm:$0xff] %v2426
        %2459 = vst [vmem:[#allocation2 + $0x58] sm:$0xff] %v2427
        %2460 = vst [vmem:[#allocation2 + $0x60] sm:$0xff] %v2428
        %2461 = vst [vmem:[#allocation2 + $0x68] sm:$0xff] %v2429
        %2462 = vst [vmem:[#allocation2 + $0x70] sm:$0xff] %v2430
        %2463 = vst [vmem:[#allocation2 + $0x78] sm:$0xff] %v2431
        %2464 = vst [vmem:[#allocation2 + $0x80] sm:$0xff] %v2432
        %2465 = vst [vmem:[#allocation2 + $0x88] sm:$0xff] %v2433
        %2466 = vst [vmem:[#allocation2 + $0x90] sm:$0xff] %v2434
        %2467 = vst [vmem:[#allocation2 + $0x98] sm:$0xff] %v2435
        %2468 = vst [vmem:[#allocation2 + $0xa0] sm:$0xff] %v2436
        %2469 = vst [vmem:[#allocation2 + $0xa8] sm:$0xff] %v2437
        %2470 = vst [vmem:[#allocation2 + $0xb0] sm:$0xff] %v2438
        %2471 = vst [vmem:[#allocation2 + $0xb8] sm:$0xff] %v2439
        %2472 = vst [vmem:[#allocation2 + $0xc0] sm:$0xff] %v2440
        %2473 = vst [vmem:[#allocation2 + $0xc8] sm:$0xff] %v2441
        %2474 = vst [vmem:[#allocation2 + $0xd0] sm:$0xff] %v2442
        %2475 = vst [vmem:[#allocation2 + $0xd8] sm:$0xff] %v2443
        %2476 = vst [vmem:[#allocation2 + $0xe0] sm:$0xff] %v2444
        %2477 = vst [vmem:[#allocation2 + $0xe8] sm:$0xff] %v2445
        %2478 = vst [vmem:[#allocation2 + $0xf0] sm:$0xff] %v2446
        %2479 = vst [vmem:[#allocation2 + $0xf8] sm:$0xff] %v2447
        %v2480 = vld [vmem:[%s1571 + $0x2] sm:$0xff]
        %v2481 = vld [vmem:[%s1571 + $0xa] sm:$0xff]
        %v2482 = vld [vmem:[%s1571 + $0x1a] sm:$0xff]
        %v2483 = vld [vmem:[%s1571 + $0x22] sm:$0xff]
        %v2484 = vld [vmem:[%s1571 + $0x32] sm:$0xff]
        %v2485 = vld [vmem:[%s1571 + $0x3a] sm:$0xff]
        %v2486 = vld [vmem:[%s1571 + $0x4a] sm:$0xff]
        %v2487 = vld [vmem:[%s1571 + $0x52] sm:$0xff]
        %v2488 = vld [vmem:[%s1571 + $0x62] sm:$0xff]
        %v2489 = vld [vmem:[%s1571 + $0x6a] sm:$0xff]
        %v2490 = vld [vmem:[%s1571 + $0x7a] sm:$0xff]
        %v2491 = vld [vmem:[%s1571 + $0x82] sm:$0xff]
        %v2492 = vld [vmem:[%s1571 + $0x92] sm:$0xff]
        %v2493 = vld [vmem:[%s1571 + $0x9a] sm:$0xff]
        %v2494 = vld [vmem:[%s1571 + $0xaa] sm:$0xff]
        %v2495 = vld [vmem:[%s1571 + $0xb2] sm:$0xff]
        %v2496 = vld [vmem:[%s1571 + $0xc2] sm:$0xff]
        %v2497 = vld [vmem:[%s1571 + $0xca] sm:$0xff]
        %v2498 = vld [vmem:[%s1571 + $0xda] sm:$0xff]
        %v2499 = vld [vmem:[%s1571 + $0xe2] sm:$0xff]
        %v2500 = vld [vmem:[%s1571 + $0xf2] sm:$0xff]
        %v2501 = vld [vmem:[%s1571 + $0xfa] sm:$0xff]
        %v2502 = vld [vmem:[%s1571 + $0x10a] sm:$0xff]
        %v2503 = vld [vmem:[%s1571 + $0x112] sm:$0xff]
        %v2504 = vld [vmem:[%s1571 + $0x122] sm:$0xff]
        %v2505 = vld [vmem:[%s1571 + $0x12a] sm:$0xff]
        %v2506 = vld [vmem:[%s1571 + $0x13a] sm:$0xff]
        %v2507 = vld [vmem:[%s1571 + $0x142] sm:$0xff]
        %v2508 = vld [vmem:[%s1571 + $0x152] sm:$0xff]
        %v2509 = vld [vmem:[%s1571 + $0x15a] sm:$0xff]
        %v2510 = vld [vmem:[%s1571 + $0x16a] sm:$0xff]
        %v2511 = vld [vmem:[%s1571 + $0x172] sm:$0xff]
        %v2512 = vld [vmem:[#allocation2] sm:$0xff]
        %v2513 = vld [vmem:[#allocation2 + $0x8] sm:$0xff]
        %v2514 = vld [vmem:[#allocation2 + $0x10] sm:$0xff]
        %v2515 = vld [vmem:[#allocation2 + $0x18] sm:$0xff]
        %v2516 = vld [vmem:[#allocation2 + $0x20] sm:$0xff]
        %v2517 = vld [vmem:[#allocation2 + $0x28] sm:$0xff]
        %v2518 = vld [vmem:[#allocation2 + $0x30] sm:$0xff]
        %v2519 = vld [vmem:[#allocation2 + $0x38] sm:$0xff]
        %v2520 = vld [vmem:[#allocation2 + $0x40] sm:$0xff]
        %v2521 = vld [vmem:[#allocation2 + $0x48] sm:$0xff]
        %v2522 = vld [vmem:[#allocation2 + $0x50] sm:$0xff]
        %v2523 = vld [vmem:[#allocation2 + $0x58] sm:$0xff]
        %v2524 = vld [vmem:[#allocation2 + $0x60] sm:$0xff]
        %v2525 = vld [vmem:[#allocation2 + $0x68] sm:$0xff]
        %v2526 = vld [vmem:[#allocation2 + $0x70] sm:$0xff]
        %v2527 = vld [vmem:[#allocation2 + $0x78] sm:$0xff]
        %v2528 = vld [vmem:[#allocation2 + $0x80] sm:$0xff]
        %v2529 = vld [vmem:[#allocation2 + $0x88] sm:$0xff]
        %v2530 = vld [vmem:[#allocation2 + $0x90] sm:$0xff]
        %v2531 = vld [vmem:[#allocation2 + $0x98] sm:$0xff]
        %v2532 = vld [vmem:[#allocation2 + $0xa0] sm:$0xff]
        %v2533 = vld [vmem:[#allocation2 + $0xa8] sm:$0xff]
        %v2534 = vld [vmem:[#allocation2 + $0xb0] sm:$0xff]
        %v2535 = vld [vmem:[#allocation2 + $0xb8] sm:$0xff]
        %v2536 = vld [vmem:[#allocation2 + $0xc0] sm:$0xff]
        %v2537 = vld [vmem:[#allocation2 + $0xc8] sm:$0xff]
        %v2538 = vld [vmem:[#allocation2 + $0xd0] sm:$0xff]
        %v2539 = vld [vmem:[#allocation2 + $0xd8] sm:$0xff]
        %v2540 = vld [vmem:[#allocation2 + $0xe0] sm:$0xff]
        %v2541 = vld [vmem:[#allocation2 + $0xe8] sm:$0xff]
        %v2542 = vld [vmem:[#allocation2 + $0xf0] sm:$0xff]
        %v2543 = vld [vmem:[#allocation2 + $0xf8] sm:$0xff]
        %s2544 = scalar_lea.vmem %s1, 20
        %v2545 = vld [vmem:[%s2544] sm:$0xf]
        %v2547 = vsel %vm273, %v2480, 0
        %v2550 = vsel %vm273, %v2481, 0
        %v2553 = vsel %vm273, %v2482, 0
        %v2556 = vsel %vm273, %v2483, 0
        %v2559 = vsel %vm273, %v2484, 0
        %v2562 = vsel %vm273, %v2485, 0
        %v2565 = vsel %vm273, %v2486, 0
        %v2568 = vsel %vm273, %v2487, 0
        %v2571 = vsel %vm273, %v2488, 0
        %v2574 = vsel %vm273, %v2489, 0
        %v2577 = vsel %vm273, %v2490, 0
        %v2580 = vsel %vm273, %v2491, 0
        %v2583 = vsel %vm273, %v2492, 0
        %v2586 = vsel %vm273, %v2493, 0
        %v2589 = vsel %vm273, %v2494, 0
        %v2592 = vsel %vm273, %v2495, 0
        %v2595 = vsel %vm273, %v2496, 0
        %v2598 = vsel %vm273, %v2497, 0
        %v2601 = vsel %vm273, %v2498, 0
        %v2604 = vsel %vm273, %v2499, 0
        %v2607 = vsel %vm273, %v2500, 0
        %v2610 = vsel %vm273, %v2501, 0
        %v2613 = vsel %vm273, %v2502, 0
        %v2616 = vsel %vm273, %v2503, 0
        %v2619 = vsel %vm273, %v2504, 0
        %v2622 = vsel %vm273, %v2505, 0
        %v2625 = vsel %vm273, %v2506, 0
        %v2628 = vsel %vm273, %v2507, 0
        %v2631 = vsel %vm273, %v2508, 0
        %v2634 = vsel %vm273, %v2509, 0
        %v2637 = vsel %vm273, %v2510, 0
        %v2640 = vsel %vm273, %v2511, 0
        %v2643 = vsel %vm370, %v2545, 0
        %2645 = vmatprep.subr.mxu0 0.0
        %2646 = vmatpush1.msra.mxu0 %v2643
        %2647 = vmatprep.subr.mxu0 0.0
        %2648 = vmatpush1.msra.mxu0 0.0
        %2649 = vmatprep.subr.mxu0 0.0
        %2650 = vmatpush1.msra.mxu0 0.0
        %2651 = vmatprep.subr.mxu0 0.0
        %2652 = vmatpush1.msra.mxu0 0.0
        %2653 = vmatprep.subr.mxu0 0.0
        %2654 = vmatpush1.msra.mxu0 0.0
        %2655 = vmatprep.subr.mxu0 0.0
        %2656 = vmatpush1.msra.mxu0 0.0
        %2657 = vmatprep.subr.mxu0 0.0
        %2658 = vmatpush1.msra.mxu0 0.0
        %2659 = vmatprep.subr.mxu0 0.0
        %2660 = vmatpush1.msra.mxu0 0.0
        %2661 = vmatprep.subr.mxu0 0.0
        %2662 = vmatpush1.msra.mxu0 0.0
        %2663 = vmatprep.subr.mxu0 0.0
        %2664 = vmatpush1.msra.mxu0 0.0
        %2665 = vmatprep.subr.mxu0 0.0
        %2666 = vmatpush1.msra.mxu0 0.0
        %2667 = vmatprep.subr.mxu0 0.0
        %2668 = vmatpush1.msra.mxu0 0.0
        %2669 = vmatprep.subr.mxu0 0.0
        %2670 = vmatpush1.msra.mxu0 0.0
        %2671 = vmatprep.subr.mxu0 0.0
        %2672 = vmatpush1.msra.mxu0 0.0
        %2673 = vmatprep.subr.mxu0 0.0
        %2674 = vmatpush1.msra.mxu0 0.0
        %2675 = vmatprep.subr.mxu0 0.0
        %2676 = vmatpush1.msra.mxu0 0.0
        %2677 = vmatprep.subr.mxu0 0.0
        %2678 = vmatpush1.msra.mxu0 0.0
        %2679 = vmatprep.subr.mxu0 0.0
        %2680 = vmatpush1.msra.mxu0 0.0
        %2681 = vmatprep.subr.mxu0 0.0
        %2682 = vmatpush1.msra.mxu0 0.0
        %2683 = vmatprep.subr.mxu0 0.0
        %2684 = vmatpush1.msra.mxu0 0.0
        %2685 = vmatprep.subr.mxu0 0.0
        %2686 = vmatpush1.msra.mxu0 0.0
        %2687 = vmatprep.subr.mxu0 0.0
        %2688 = vmatpush1.msra.mxu0 0.0
        %2689 = vmatprep.subr.mxu0 0.0
        %2690 = vmatpush1.msra.mxu0 0.0
        %2691 = vmatprep.subr.mxu0 0.0
        %2692 = vmatpush1.msra.mxu0 0.0
        %2693 = vmatprep.subr.mxu0 0.0
        %2694 = vmatpush1.msra.mxu0 0.0
        %2695 = vmatprep.subr.mxu0 0.0
        %2696 = vmatpush1.msra.mxu0 0.0
        %2697 = vmatprep.subr.mxu0 0.0
        %2698 = vmatpush1.msra.mxu0 0.0
        %2699 = vmatprep.subr.mxu0 0.0
        %2700 = vmatpush1.msra.mxu0 0.0
        %2701 = vmatprep.subr.mxu0 0.0
        %2702 = vmatpush1.msra.mxu0 0.0
        %2703 = vmatprep.subr.mxu0 0.0
        %2704 = vmatpush1.msra.mxu0 0.0
        %2705 = vmatprep.subr.mxu0 0.0
        %2706 = vmatpush1.msra.mxu0 0.0
        %2707 = vmatprep.subr.mxu0 0.0
        %2708 = vmatpush1.msra.mxu0 0.0
        %2709 = vmatprep.mubr.f32.mxu0 0.0
        %2710 = vmatmul.mubr.f32.gmra.mrb[0].mxu0 %v2547
        %v2711 = vpop.f32.mrb[0].mxu0
        %v2712 = vadd.f32 0.0, %v2711
        %v2713 = vpop.f32.mrb[0].mxu0
        %2714 = vmatprep.mubr.f32.mxu0 0.0
        %2715 = vmatmul.mubr.f32.gmra.mrb[0].mxu0 %v2550
        %v2716 = vpop.f32.mrb[0].mxu0
        %v2717 = vadd.f32 0.0, %v2716
        %v2718 = vpop.f32.mrb[0].mxu0
        %2719 = vmatprep.mubr.f32.mxu0 0.0
        %2720 = vmatmul.mubr.f32.gmra.mrb[0].mxu0 %v2553
        %v2721 = vpop.f32.mrb[0].mxu0
        %v2722 = vadd.f32 0.0, %v2721
        %v2723 = vpop.f32.mrb[0].mxu0
        %2724 = vmatprep.mubr.f32.mxu0 0.0
        %2725 = vmatmul.mubr.f32.gmra.mrb[0].mxu0 %v2556
        %v2726 = vpop.f32.mrb[0].mxu0
        %v2727 = vadd.f32 0.0, %v2726
        %v2728 = vpop.f32.mrb[0].mxu0
        %2729 = vmatprep.mubr.f32.mxu0 0.0
        %2730 = vmatmul.mubr.f32.gmra.mrb[0].mxu0 %v2559
        %v2731 = vpop.f32.mrb[0].mxu0
        %v2732 = vadd.f32 0.0, %v2731
        %v2733 = vpop.f32.mrb[0].mxu0
        %2734 = vmatprep.mubr.f32.mxu0 0.0
        %2735 = vmatmul.mubr.f32.gmra.mrb[0].mxu0 %v2562
        %v2736 = vpop.f32.mrb[0].mxu0
        %v2737 = vadd.f32 0.0, %v2736
        %v2738 = vpop.f32.mrb[0].mxu0
        %2739 = vmatprep.mubr.f32.mxu0 0.0
        %2740 = vmatmul.mubr.f32.gmra.mrb[0].mxu0 %v2565
        %v2741 = vpop.f32.mrb[0].mxu0
        %v2742 = vadd.f32 0.0, %v2741
        %v2743 = vpop.f32.mrb[0].mxu0
        %2744 = vmatprep.mubr.f32.mxu0 0.0
        %2745 = vmatmul.mubr.f32.gmra.mrb[0].mxu0 %v2568
        %v2746 = vpop.f32.mrb[0].mxu0
        %v2747 = vadd.f32 0.0, %v2746
        %v2748 = vpop.f32.mrb[0].mxu0
        %2749 = vmatprep.mubr.f32.mxu0 0.0
        %2750 = vmatmul.mubr.f32.gmra.mrb[0].mxu0 %v2571
        %v2751 = vpop.f32.mrb[0].mxu0
        %v2752 = vadd.f32 0.0, %v2751
        %v2753 = vpop.f32.mrb[0].mxu0
        %2754 = vmatprep.mubr.f32.mxu0 0.0
        %2755 = vmatmul.mubr.f32.gmra.mrb[0].mxu0 %v2574
        %v2756 = vpop.f32.mrb[0].mxu0
        %v2757 = vadd.f32 0.0, %v2756
        %v2758 = vpop.f32.mrb[0].mxu0
        %2759 = vmatprep.mubr.f32.mxu0 0.0
        %2760 = vmatmul.mubr.f32.gmra.mrb[0].mxu0 %v2577
        %v2761 = vpop.f32.mrb[0].mxu0
        %v2762 = vadd.f32 0.0, %v2761
        %v2763 = vpop.f32.mrb[0].mxu0
        %2764 = vmatprep.mubr.f32.mxu0 0.0
        %2765 = vmatmul.mubr.f32.gmra.mrb[0].mxu0 %v2580
        %v2766 = vpop.f32.mrb[0].mxu0
        %v2767 = vadd.f32 0.0, %v2766
        %v2768 = vpop.f32.mrb[0].mxu0
        %2769 = vmatprep.mubr.f32.mxu0 0.0
        %2770 = vmatmul.mubr.f32.gmra.mrb[0].mxu0 %v2583
        %v2771 = vpop.f32.mrb[0].mxu0
        %v2772 = vadd.f32 0.0, %v2771
        %v2773 = vpop.f32.mrb[0].mxu0
        %2774 = vmatprep.mubr.f32.mxu0 0.0
        %2775 = vmatmul.mubr.f32.gmra.mrb[0].mxu0 %v2586
        %v2776 = vpop.f32.mrb[0].mxu0
        %v2777 = vadd.f32 0.0, %v2776
        %v2778 = vpop.f32.mrb[0].mxu0
        %2779 = vmatprep.mubr.f32.mxu0 0.0
        %2780 = vmatmul.mubr.f32.gmra.mrb[0].mxu0 %v2589
        %v2781 = vpop.f32.mrb[0].mxu0
        %v2782 = vadd.f32 0.0, %v2781
        %v2783 = vpop.f32.mrb[0].mxu0
        %2784 = vmatprep.mubr.f32.mxu0 0.0
        %2785 = vmatmul.mubr.f32.gmra.mrb[0].mxu0 %v2592
        %v2786 = vpop.f32.mrb[0].mxu0
        %v2787 = vadd.f32 0.0, %v2786
        %v2788 = vpop.f32.mrb[0].mxu0
        %2789 = vmatprep.mubr.f32.mxu0 0.0
        %2790 = vmatmul.mubr.f32.gmra.mrb[0].mxu0 %v2595
        %v2791 = vpop.f32.mrb[0].mxu0
        %v2792 = vadd.f32 0.0, %v2791
        %v2793 = vpop.f32.mrb[0].mxu0
        %2794 = vmatprep.mubr.f32.mxu0 0.0
        %2795 = vmatmul.mubr.f32.gmra.mrb[0].mxu0 %v2598
        %v2796 = vpop.f32.mrb[0].mxu0
        %v2797 = vadd.f32 0.0, %v2796
        %v2798 = vpop.f32.mrb[0].mxu0
        %2799 = vmatprep.mubr.f32.mxu0 0.0
        %2800 = vmatmul.mubr.f32.gmra.mrb[0].mxu0 %v2601
        %v2801 = vpop.f32.mrb[0].mxu0
        %v2802 = vadd.f32 0.0, %v2801
        %v2803 = vpop.f32.mrb[0].mxu0
        %2804 = vmatprep.mubr.f32.mxu0 0.0
        %2805 = vmatmul.mubr.f32.gmra.mrb[0].mxu0 %v2604
        %v2806 = vpop.f32.mrb[0].mxu0
        %v2807 = vadd.f32 0.0, %v2806
        %v2808 = vpop.f32.mrb[0].mxu0
        %2809 = vmatprep.mubr.f32.mxu0 0.0
        %2810 = vmatmul.mubr.f32.gmra.mrb[0].mxu0 %v2607
        %v2811 = vpop.f32.mrb[0].mxu0
        %v2812 = vadd.f32 0.0, %v2811
        %v2813 = vpop.f32.mrb[0].mxu0
        %2814 = vmatprep.mubr.f32.mxu0 0.0
        %2815 = vmatmul.mubr.f32.gmra.mrb[0].mxu0 %v2610
        %v2816 = vpop.f32.mrb[0].mxu0
        %v2817 = vadd.f32 0.0, %v2816
        %v2818 = vpop.f32.mrb[0].mxu0
        %2819 = vmatprep.mubr.f32.mxu0 0.0
        %2820 = vmatmul.mubr.f32.gmra.mrb[0].mxu0 %v2613
        %v2821 = vpop.f32.mrb[0].mxu0
        %v2822 = vadd.f32 0.0, %v2821
        %v2823 = vpop.f32.mrb[0].mxu0
        %2824 = vmatprep.mubr.f32.mxu0 0.0
        %2825 = vmatmul.mubr.f32.gmra.mrb[0].mxu0 %v2616
        %v2826 = vpop.f32.mrb[0].mxu0
        %v2827 = vadd.f32 0.0, %v2826
        %v2828 = vpop.f32.mrb[0].mxu0
        %2829 = vmatprep.mubr.f32.mxu0 0.0
        %2830 = vmatmul.mubr.f32.gmra.mrb[0].mxu0 %v2619
        %v2831 = vpop.f32.mrb[0].mxu0
        %v2832 = vadd.f32 0.0, %v2831
        %v2833 = vpop.f32.mrb[0].mxu0
        %2834 = vmatprep.mubr.f32.mxu0 0.0
        %2835 = vmatmul.mubr.f32.gmra.mrb[0].mxu0 %v2622
        %v2836 = vpop.f32.mrb[0].mxu0
        %v2837 = vadd.f32 0.0, %v2836
        %v2838 = vpop.f32.mrb[0].mxu0
        %2839 = vmatprep.mubr.f32.mxu0 0.0
        %2840 = vmatmul.mubr.f32.gmra.mrb[0].mxu0 %v2625
        %v2841 = vpop.f32.mrb[0].mxu0
        %v2842 = vadd.f32 0.0, %v2841
        %v2843 = vpop.f32.mrb[0].mxu0
        %2844 = vmatprep.mubr.f32.mxu0 0.0
        %2845 = vmatmul.mubr.f32.gmra.mrb[0].mxu0 %v2628
        %v2846 = vpop.f32.mrb[0].mxu0
        %v2847 = vadd.f32 0.0, %v2846
        %v2848 = vpop.f32.mrb[0].mxu0
        %2849 = vmatprep.mubr.f32.mxu0 0.0
        %2850 = vmatmul.mubr.f32.gmra.mrb[0].mxu0 %v2631
        %v2851 = vpop.f32.mrb[0].mxu0
        %v2852 = vadd.f32 0.0, %v2851
        %v2853 = vpop.f32.mrb[0].mxu0
        %2854 = vmatprep.mubr.f32.mxu0 0.0
        %2855 = vmatmul.mubr.f32.gmra.mrb[0].mxu0 %v2634
        %v2856 = vpop.f32.mrb[0].mxu0
        %v2857 = vadd.f32 0.0, %v2856
        %v2858 = vpop.f32.mrb[0].mxu0
        %2859 = vmatprep.mubr.f32.mxu0 0.0
        %2860 = vmatmul.mubr.f32.gmra.mrb[0].mxu0 %v2637
        %v2861 = vpop.f32.mrb[0].mxu0
        %v2862 = vadd.f32 0.0, %v2861
        %v2863 = vpop.f32.mrb[0].mxu0
        %2864 = vmatprep.mubr.f32.mxu0 0.0
        %2865 = vmatmul.mubr.f32.gmra.mrb[0].mxu0 %v2640
        %v2866 = vpop.f32.mrb[0].mxu0
        %v2867 = vadd.f32 0.0, %v2866
        %v2868 = vpop.f32.mrb[0].mxu0
        %2869 = vdwg.mxu0
        %v2870 = vadd.f32 %v2512, %v2712
        %v2871 = vadd.f32 %v2513, %v2717
        %v2872 = vadd.f32 %v2514, %v2722
        %v2873 = vadd.f32 %v2515, %v2727
        %v2874 = vadd.f32 %v2516, %v2732
        %v2875 = vadd.f32 %v2517, %v2737
        %v2876 = vadd.f32 %v2518, %v2742
        %v2877 = vadd.f32 %v2519, %v2747
        %v2878 = vadd.f32 %v2520, %v2752
        %v2879 = vadd.f32 %v2521, %v2757
        %v2880 = vadd.f32 %v2522, %v2762
        %v2881 = vadd.f32 %v2523, %v2767
        %v2882 = vadd.f32 %v2524, %v2772
        %v2883 = vadd.f32 %v2525, %v2777
        %v2884 = vadd.f32 %v2526, %v2782
        %v2885 = vadd.f32 %v2527, %v2787
        %v2886 = vadd.f32 %v2528, %v2792
        %v2887 = vadd.f32 %v2529, %v2797
        %v2888 = vadd.f32 %v2530, %v2802
        %v2889 = vadd.f32 %v2531, %v2807
        %v2890 = vadd.f32 %v2532, %v2812
        %v2891 = vadd.f32 %v2533, %v2817
        %v2892 = vadd.f32 %v2534, %v2822
        %v2893 = vadd.f32 %v2535, %v2827
        %v2894 = vadd.f32 %v2536, %v2832
        %v2895 = vadd.f32 %v2537, %v2837
        %v2896 = vadd.f32 %v2538, %v2842
        %v2897 = vadd.f32 %v2539, %v2847
        %v2898 = vadd.f32 %v2540, %v2852
        %v2899 = vadd.f32 %v2541, %v2857
        %v2900 = vadd.f32 %v2542, %v2862
        %v2901 = vadd.f32 %v2543, %v2867
        %2902 = vst [vmem:[#allocation2] sm:$0xff] %v2870
        %2903 = vst [vmem:[#allocation2 + $0x8] sm:$0xff] %v2871
        %2904 = vst [vmem:[#allocation2 + $0x10] sm:$0xff] %v2872
        %2905 = vst [vmem:[#allocation2 + $0x18] sm:$0xff] %v2873
        %2906 = vst [vmem:[#allocation2 + $0x20] sm:$0xff] %v2874
        %2907 = vst [vmem:[#allocation2 + $0x28] sm:$0xff] %v2875
        %2908 = vst [vmem:[#allocation2 + $0x30] sm:$0xff] %v2876
        %2909 = vst [vmem:[#allocation2 + $0x38] sm:$0xff] %v2877
        %2910 = vst [vmem:[#allocation2 + $0x40] sm:$0xff] %v2878
        %2911 = vst [vmem:[#allocation2 + $0x48] sm:$0xff] %v2879
        %2912 = vst [vmem:[#allocation2 + $0x50] sm:$0xff] %v2880
        %2913 = vst [vmem:[#allocation2 + $0x58] sm:$0xff] %v2881
        %2914 = vst [vmem:[#allocation2 + $0x60] sm:$0xff] %v2882
        %2915 = vst [vmem:[#allocation2 + $0x68] sm:$0xff] %v2883
        %2916 = vst [vmem:[#allocation2 + $0x70] sm:$0xff] %v2884
        %2917 = vst [vmem:[#allocation2 + $0x78] sm:$0xff] %v2885
        %2918 = vst [vmem:[#allocation2 + $0x80] sm:$0xff] %v2886
        %2919 = vst [vmem:[#allocation2 + $0x88] sm:$0xff] %v2887
        %2920 = vst [vmem:[#allocation2 + $0x90] sm:$0xff] %v2888
        %2921 = vst [vmem:[#allocation2 + $0x98] sm:$0xff] %v2889
        %2922 = vst [vmem:[#allocation2 + $0xa0] sm:$0xff] %v2890
        %2923 = vst [vmem:[#allocation2 + $0xa8] sm:$0xff] %v2891
        %2924 = vst [vmem:[#allocation2 + $0xb0] sm:$0xff] %v2892
        %2925 = vst [vmem:[#allocation2 + $0xb8] sm:$0xff] %v2893
        %2926 = vst [vmem:[#allocation2 + $0xc0] sm:$0xff] %v2894
        %2927 = vst [vmem:[#allocation2 + $0xc8] sm:$0xff] %v2895
        %2928 = vst [vmem:[#allocation2 + $0xd0] sm:$0xff] %v2896
        %2929 = vst [vmem:[#allocation2 + $0xd8] sm:$0xff] %v2897
        %2930 = vst [vmem:[#allocation2 + $0xe0] sm:$0xff] %v2898
        %2931 = vst [vmem:[#allocation2 + $0xe8] sm:$0xff] %v2899
        %2932 = vst [vmem:[#allocation2 + $0xf0] sm:$0xff] %v2900
        %2933 = vst [vmem:[#allocation2 + $0xf8] sm:$0xff] %v2901
        %s2934 = scalar_lea.vmem %s168, 48
        %v2935 = vld [vmem:[%s2934] sm:$0xff]
        %v2936 = vld [vmem:[%s2934 + $0x8] sm:$0xff]
        %v2937 = vld [vmem:[%s2934 + $0x18] sm:$0xff]
        %v2938 = vld [vmem:[%s2934 + $0x20] sm:$0xff]
        %v2939 = vld [vmem:[%s2934 + $0x30] sm:$0xff]
        %v2940 = vld [vmem:[%s2934 + $0x38] sm:$0xff]
        %v2941 = vld [vmem:[%s2934 + $0x48] sm:$0xff]
        %v2942 = vld [vmem:[%s2934 + $0x50] sm:$0xff]
        %v2943 = vld [vmem:[%s2934 + $0x60] sm:$0xff]
        %v2944 = vld [vmem:[%s2934 + $0x68] sm:$0xff]
        %v2945 = vld [vmem:[%s2934 + $0x78] sm:$0xff]
        %v2946 = vld [vmem:[%s2934 + $0x80] sm:$0xff]
        %v2947 = vld [vmem:[%s2934 + $0x90] sm:$0xff]
        %v2948 = vld [vmem:[%s2934 + $0x98] sm:$0xff]
        %v2949 = vld [vmem:[%s2934 + $0xa8] sm:$0xff]
        %v2950 = vld [vmem:[%s2934 + $0xb0] sm:$0xff]
        %v2951 = vld [vmem:[%s2934 + $0xc0] sm:$0xff]
        %v2952 = vld [vmem:[%s2934 + $0xc8] sm:$0xff]
        %v2953 = vld [vmem:[%s2934 + $0xd8] sm:$0xff]
        %v2954 = vld [vmem:[%s2934 + $0xe0] sm:$0xff]
        %v2955 = vld [vmem:[%s2934 + $0xf0] sm:$0xff]
        %v2956 = vld [vmem:[%s2934 + $0xf8] sm:$0xff]
        %v2957 = vld [vmem:[%s2934 + $0x108] sm:$0xff]
        %v2958 = vld [vmem:[%s2934 + $0x110] sm:$0xff]
        %v2959 = vld [vmem:[%s2934 + $0x120] sm:$0xff]
        %v2960 = vld [vmem:[%s2934 + $0x128] sm:$0xff]
        %v2961 = vld [vmem:[%s2934 + $0x138] sm:$0xff]
        %v2962 = vld [vmem:[%s2934 + $0x140] sm:$0xff]
        %v2963 = vld [vmem:[%s2934 + $0x150] sm:$0xff]
        %v2964 = vld [vmem:[%s2934 + $0x158] sm:$0xff]
        %v2965 = vld [vmem:[%s2934 + $0x168] sm:$0xff]
        %v2966 = vld [vmem:[%s2934 + $0x170] sm:$0xff]
        %v2967 = vld [vmem:[#allocation2] sm:$0xff]
        %v2968 = vld [vmem:[#allocation2 + $0x8] sm:$0xff]
        %v2969 = vld [vmem:[#allocation2 + $0x10] sm:$0xff]
        %v2970 = vld [vmem:[#allocation2 + $0x18] sm:$0xff]
        %v2971 = vld [vmem:[#allocation2 + $0x20] sm:$0xff]
        %v2972 = vld [vmem:[#allocation2 + $0x28] sm:$0xff]
        %v2973 = vld [vmem:[#allocation2 + $0x30] sm:$0xff]
        %v2974 = vld [vmem:[#allocation2 + $0x38] sm:$0xff]
        %v2975 = vld [vmem:[#allocation2 + $0x40] sm:$0xff]
        %v2976 = vld [vmem:[#allocation2 + $0x48] sm:$0xff]
        %v2977 = vld [vmem:[#allocation2 + $0x50] sm:$0xff]
        %v2978 = vld [vmem:[#allocation2 + $0x58] sm:$0xff]
        %v2979 = vld [vmem:[#allocation2 + $0x60] sm:$0xff]
        %v2980 = vld [vmem:[#allocation2 + $0x68] sm:$0xff]
        %v2981 = vld [vmem:[#allocation2 + $0x70] sm:$0xff]
        %v2982 = vld [vmem:[#allocation2 + $0x78] sm:$0xff]
        %v2983 = vld [vmem:[#allocation2 + $0x80] sm:$0xff]
        %v2984 = vld [vmem:[#allocation2 + $0x88] sm:$0xff]
        %v2985 = vld [vmem:[#allocation2 + $0x90] sm:$0xff]
        %v2986 = vld [vmem:[#allocation2 + $0x98] sm:$0xff]
        %v2987 = vld [vmem:[#allocation2 + $0xa0] sm:$0xff]
        %v2988 = vld [vmem:[#allocation2 + $0xa8] sm:$0xff]
        %v2989 = vld [vmem:[#allocation2 + $0xb0] sm:$0xff]
        %v2990 = vld [vmem:[#allocation2 + $0xb8] sm:$0xff]
        %v2991 = vld [vmem:[#allocation2 + $0xc0] sm:$0xff]
        %v2992 = vld [vmem:[#allocation2 + $0xc8] sm:$0xff]
        %v2993 = vld [vmem:[#allocation2 + $0xd0] sm:$0xff]
        %v2994 = vld [vmem:[#allocation2 + $0xd8] sm:$0xff]
        %v2995 = vld [vmem:[#allocation2 + $0xe0] sm:$0xff]
        %v2996 = vld [vmem:[#allocation2 + $0xe8] sm:$0xff]
        %v2997 = vld [vmem:[#allocation2 + $0xf0] sm:$0xff]
        %v2998 = vld [vmem:[#allocation2 + $0xf8] sm:$0xff]
        %s2999 = scalar_lea.vmem %s1, 24
        %v3000 = vld [vmem:[%s2999] sm:$0xf]
        %v3002 = vsel %vm273, %v2935, 0
        %v3005 = vsel %vm273, %v2936, 0
        %v3008 = vsel %vm273, %v2937, 0
        %v3011 = vsel %vm273, %v2938, 0
        %v3014 = vsel %vm273, %v2939, 0
        %v3017 = vsel %vm273, %v2940, 0
        %v3020 = vsel %vm273, %v2941, 0
        %v3023 = vsel %vm273, %v2942, 0
        %v3026 = vsel %vm273, %v2943, 0
        %v3029 = vsel %vm273, %v2944, 0
        %v3032 = vsel %vm273, %v2945, 0
        %v3035 = vsel %vm273, %v2946, 0
        %v3038 = vsel %vm273, %v2947, 0
        %v3041 = vsel %vm273, %v2948, 0
        %v3044 = vsel %vm273, %v2949, 0
        %v3047 = vsel %vm273, %v2950, 0
        %v3050 = vsel %vm273, %v2951, 0
        %v3053 = vsel %vm273, %v2952, 0
        %v3056 = vsel %vm273, %v2953, 0
        %v3059 = vsel %vm273, %v2954, 0
        %v3062 = vsel %vm273, %v2955, 0
        %v3065 = vsel %vm273, %v2956, 0
        %v3068 = vsel %vm273, %v2957, 0
        %v3071 = vsel %vm273, %v2958, 0
        %v3074 = vsel %vm273, %v2959, 0
        %v3077 = vsel %vm273, %v2960, 0
        %v3080 = vsel %vm273, %v2961, 0
        %v3083 = vsel %vm273, %v2962, 0
        %v3086 = vsel %vm273, %v2963, 0
        %v3089 = vsel %vm273, %v2964, 0
        %v3092 = vsel %vm273, %v2965, 0
        %v3095 = vsel %vm273, %v2966, 0
        %v3098 = vsel %vm370, %v3000, 0
        %3100 = vmatprep.subr.mxu0 0.0
        %3101 = vmatpush1.msra.mxu0 %v3098
        %3102 = vmatprep.subr.mxu0 0.0
        %3103 = vmatpush1.msra.mxu0 0.0
        %3104 = vmatprep.subr.mxu0 0.0
        %3105 = vmatpush1.msra.mxu0 0.0
        %3106 = vmatprep.subr.mxu0 0.0
        %3107 = vmatpush1.msra.mxu0 0.0
        %3108 = vmatprep.subr.mxu0 0.0
        %3109 = vmatpush1.msra.mxu0 0.0
        %3110 = vmatprep.subr.mxu0 0.0
        %3111 = vmatpush1.msra.mxu0 0.0
        %3112 = vmatprep.subr.mxu0 0.0
        %3113 = vmatpush1.msra.mxu0 0.0
        %3114 = vmatprep.subr.mxu0 0.0
        %3115 = vmatpush1.msra.mxu0 0.0
        %3116 = vmatprep.subr.mxu0 0.0
        %3117 = vmatpush1.msra.mxu0 0.0
        %3118 = vmatprep.subr.mxu0 0.0
        %3119 = vmatpush1.msra.mxu0 0.0
        %3120 = vmatprep.subr.mxu0 0.0
        %3121 = vmatpush1.msra.mxu0 0.0
        %3122 = vmatprep.subr.mxu0 0.0
        %3123 = vmatpush1.msra.mxu0 0.0
        %3124 = vmatprep.subr.mxu0 0.0
        %3125 = vmatpush1.msra.mxu0 0.0
        %3126 = vmatprep.subr.mxu0 0.0
        %3127 = vmatpush1.msra.mxu0 0.0
        %3128 = vmatprep.subr.mxu0 0.0
        %3129 = vmatpush1.msra.mxu0 0.0
        %3130 = vmatprep.subr.mxu0 0.0
        %3131 = vmatpush1.msra.mxu0 0.0
        %3132 = vmatprep.subr.mxu0 0.0
        %3133 = vmatpush1.msra.mxu0 0.0
        %3134 = vmatprep.subr.mxu0 0.0
        %3135 = vmatpush1.msra.mxu0 0.0
        %3136 = vmatprep.subr.mxu0 0.0
        %3137 = vmatpush1.msra.mxu0 0.0
        %3138 = vmatprep.subr.mxu0 0.0
        %3139 = vmatpush1.msra.mxu0 0.0
        %3140 = vmatprep.subr.mxu0 0.0
        %3141 = vmatpush1.msra.mxu0 0.0
        %3142 = vmatprep.subr.mxu0 0.0
        %3143 = vmatpush1.msra.mxu0 0.0
        %3144 = vmatprep.subr.mxu0 0.0
        %3145 = vmatpush1.msra.mxu0 0.0
        %3146 = vmatprep.subr.mxu0 0.0
        %3147 = vmatpush1.msra.mxu0 0.0
        %3148 = vmatprep.subr.mxu0 0.0
        %3149 = vmatpush1.msra.mxu0 0.0
        %3150 = vmatprep.subr.mxu0 0.0
        %3151 = vmatpush1.msra.mxu0 0.0
        %3152 = vmatprep.subr.mxu0 0.0
        %3153 = vmatpush1.msra.mxu0 0.0
        %3154 = vmatprep.subr.mxu0 0.0
        %3155 = vmatpush1.msra.mxu0 0.0
        %3156 = vmatprep.subr.mxu0 0.0
        %3157 = vmatpush1.msra.mxu0 0.0
        %3158 = vmatprep.subr.mxu0 0.0
        %3159 = vmatpush1.msra.mxu0 0.0
        %3160 = vmatprep.subr.mxu0 0.0
        %3161 = vmatpush1.msra.mxu0 0.0
        %3162 = vmatprep.subr.mxu0 0.0
        %3163 = vmatpush1.msra.mxu0 0.0
        %3164 = vmatprep.mubr.f32.mxu0 0.0
        %3165 = vmatmul.mubr.f32.gmra.mrb[0].mxu0 %v3002
        %v3166 = vpop.f32.mrb[0].mxu0
        %v3167 = vadd.f32 0.0, %v3166
        %v3168 = vpop.f32.mrb[0].mxu0
        %3169 = vmatprep.mubr.f32.mxu0 0.0
        %3170 = vmatmul.mubr.f32.gmra.mrb[0].mxu0 %v3005
        %v3171 = vpop.f32.mrb[0].mxu0
        %v3172 = vadd.f32 0.0, %v3171
        %v3173 = vpop.f32.mrb[0].mxu0
        %3174 = vmatprep.mubr.f32.mxu0 0.0
        %3175 = vmatmul.mubr.f32.gmra.mrb[0].mxu0 %v3008
        %v3176 = vpop.f32.mrb[0].mxu0
        %v3177 = vadd.f32 0.0, %v3176
        %v3178 = vpop.f32.mrb[0].mxu0
        %3179 = vmatprep.mubr.f32.mxu0 0.0
        %3180 = vmatmul.mubr.f32.gmra.mrb[0].mxu0 %v3011
        %v3181 = vpop.f32.mrb[0].mxu0
        %v3182 = vadd.f32 0.0, %v3181
        %v3183 = vpop.f32.mrb[0].mxu0
        %3184 = vmatprep.mubr.f32.mxu0 0.0
        %3185 = vmatmul.mubr.f32.gmra.mrb[0].mxu0 %v3014
        %v3186 = vpop.f32.mrb[0].mxu0
        %v3187 = vadd.f32 0.0, %v3186
        %v3188 = vpop.f32.mrb[0].mxu0
        %3189 = vmatprep.mubr.f32.mxu0 0.0
        %3190 = vmatmul.mubr.f32.gmra.mrb[0].mxu0 %v3017
        %v3191 = vpop.f32.mrb[0].mxu0
        %v3192 = vadd.f32 0.0, %v3191
        %v3193 = vpop.f32.mrb[0].mxu0
        %3194 = vmatprep.mubr.f32.mxu0 0.0
        %3195 = vmatmul.mubr.f32.gmra.mrb[0].mxu0 %v3020
        %v3196 = vpop.f32.mrb[0].mxu0
        %v3197 = vadd.f32 0.0, %v3196
        %v3198 = vpop.f32.mrb[0].mxu0
        %3199 = vmatprep.mubr.f32.mxu0 0.0
        %3200 = vmatmul.mubr.f32.gmra.mrb[0].mxu0 %v3023
        %v3201 = vpop.f32.mrb[0].mxu0
        %v3202 = vadd.f32 0.0, %v3201
        %v3203 = vpop.f32.mrb[0].mxu0
        %3204 = vmatprep.mubr.f32.mxu0 0.0
        %3205 = vmatmul.mubr.f32.gmra.mrb[0].mxu0 %v3026
        %v3206 = vpop.f32.mrb[0].mxu0
        %v3207 = vadd.f32 0.0, %v3206
        %v3208 = vpop.f32.mrb[0].mxu0
        %3209 = vmatprep.mubr.f32.mxu0 0.0
        %3210 = vmatmul.mubr.f32.gmra.mrb[0].mxu0 %v3029
        %v3211 = vpop.f32.mrb[0].mxu0
        %v3212 = vadd.f32 0.0, %v3211
        %v3213 = vpop.f32.mrb[0].mxu0
        %3214 = vmatprep.mubr.f32.mxu0 0.0
        %3215 = vmatmul.mubr.f32.gmra.mrb[0].mxu0 %v3032
        %v3216 = vpop.f32.mrb[0].mxu0
        %v3217 = vadd.f32 0.0, %v3216
        %v3218 = vpop.f32.mrb[0].mxu0
        %3219 = vmatprep.mubr.f32.mxu0 0.0
        %3220 = vmatmul.mubr.f32.gmra.mrb[0].mxu0 %v3035
        %v3221 = vpop.f32.mrb[0].mxu0
        %v3222 = vadd.f32 0.0, %v3221
        %v3223 = vpop.f32.mrb[0].mxu0
        %3224 = vmatprep.mubr.f32.mxu0 0.0
        %3225 = vmatmul.mubr.f32.gmra.mrb[0].mxu0 %v3038
        %v3226 = vpop.f32.mrb[0].mxu0
        %v3227 = vadd.f32 0.0, %v3226
        %v3228 = vpop.f32.mrb[0].mxu0
        %3229 = vmatprep.mubr.f32.mxu0 0.0
        %3230 = vmatmul.mubr.f32.gmra.mrb[0].mxu0 %v3041
        %v3231 = vpop.f32.mrb[0].mxu0
        %v3232 = vadd.f32 0.0, %v3231
        %v3233 = vpop.f32.mrb[0].mxu0
        %3234 = vmatprep.mubr.f32.mxu0 0.0
        %3235 = vmatmul.mubr.f32.gmra.mrb[0].mxu0 %v3044
        %v3236 = vpop.f32.mrb[0].mxu0
        %v3237 = vadd.f32 0.0, %v3236
        %v3238 = vpop.f32.mrb[0].mxu0
        %3239 = vmatprep.mubr.f32.mxu0 0.0
        %3240 = vmatmul.mubr.f32.gmra.mrb[0].mxu0 %v3047
        %v3241 = vpop.f32.mrb[0].mxu0
        %v3242 = vadd.f32 0.0, %v3241
        %v3243 = vpop.f32.mrb[0].mxu0
        %3244 = vmatprep.mubr.f32.mxu0 0.0
        %3245 = vmatmul.mubr.f32.gmra.mrb[0].mxu0 %v3050
        %v3246 = vpop.f32.mrb[0].mxu0
        %v3247 = vadd.f32 0.0, %v3246
        %v3248 = vpop.f32.mrb[0].mxu0
        %3249 = vmatprep.mubr.f32.mxu0 0.0
        %3250 = vmatmul.mubr.f32.gmra.mrb[0].mxu0 %v3053
        %v3251 = vpop.f32.mrb[0].mxu0
        %v3252 = vadd.f32 0.0, %v3251
        %v3253 = vpop.f32.mrb[0].mxu0
        %3254 = vmatprep.mubr.f32.mxu0 0.0
        %3255 = vmatmul.mubr.f32.gmra.mrb[0].mxu0 %v3056
        %v3256 = vpop.f32.mrb[0].mxu0
        %v3257 = vadd.f32 0.0, %v3256
        %v3258 = vpop.f32.mrb[0].mxu0
        %3259 = vmatprep.mubr.f32.mxu0 0.0
        %3260 = vmatmul.mubr.f32.gmra.mrb[0].mxu0 %v3059
        %v3261 = vpop.f32.mrb[0].mxu0
        %v3262 = vadd.f32 0.0, %v3261
        %v3263 = vpop.f32.mrb[0].mxu0
        %3264 = vmatprep.mubr.f32.mxu0 0.0
        %3265 = vmatmul.mubr.f32.gmra.mrb[0].mxu0 %v3062
        %v3266 = vpop.f32.mrb[0].mxu0
        %v3267 = vadd.f32 0.0, %v3266
        %v3268 = vpop.f32.mrb[0].mxu0
        %3269 = vmatprep.mubr.f32.mxu0 0.0
        %3270 = vmatmul.mubr.f32.gmra.mrb[0].mxu0 %v3065
        %v3271 = vpop.f32.mrb[0].mxu0
        %v3272 = vadd.f32 0.0, %v3271
        %v3273 = vpop.f32.mrb[0].mxu0
        %3274 = vmatprep.mubr.f32.mxu0 0.0
        %3275 = vmatmul.mubr.f32.gmra.mrb[0].mxu0 %v3068
        %v3276 = vpop.f32.mrb[0].mxu0
        %v3277 = vadd.f32 0.0, %v3276
        %v3278 = vpop.f32.mrb[0].mxu0
        %3279 = vmatprep.mubr.f32.mxu0 0.0
        %3280 = vmatmul.mubr.f32.gmra.mrb[0].mxu0 %v3071
        %v3281 = vpop.f32.mrb[0].mxu0
        %v3282 = vadd.f32 0.0, %v3281
        %v3283 = vpop.f32.mrb[0].mxu0
        %3284 = vmatprep.mubr.f32.mxu0 0.0
        %3285 = vmatmul.mubr.f32.gmra.mrb[0].mxu0 %v3074
        %v3286 = vpop.f32.mrb[0].mxu0
        %v3287 = vadd.f32 0.0, %v3286
        %v3288 = vpop.f32.mrb[0].mxu0
        %3289 = vmatprep.mubr.f32.mxu0 0.0
        %3290 = vmatmul.mubr.f32.gmra.mrb[0].mxu0 %v3077
        %v3291 = vpop.f32.mrb[0].mxu0
        %v3292 = vadd.f32 0.0, %v3291
        %v3293 = vpop.f32.mrb[0].mxu0
        %3294 = vmatprep.mubr.f32.mxu0 0.0
        %3295 = vmatmul.mubr.f32.gmra.mrb[0].mxu0 %v3080
        %v3296 = vpop.f32.mrb[0].mxu0
        %v3297 = vadd.f32 0.0, %v3296
        %v3298 = vpop.f32.mrb[0].mxu0
        %3299 = vmatprep.mubr.f32.mxu0 0.0
        %3300 = vmatmul.mubr.f32.gmra.mrb[0].mxu0 %v3083
        %v3301 = vpop.f32.mrb[0].mxu0
        %v3302 = vadd.f32 0.0, %v3301
        %v3303 = vpop.f32.mrb[0].mxu0
        %3304 = vmatprep.mubr.f32.mxu0 0.0
        %3305 = vmatmul.mubr.f32.gmra.mrb[0].mxu0 %v3086
        %v3306 = vpop.f32.mrb[0].mxu0
        %v3307 = vadd.f32 0.0, %v3306
        %v3308 = vpop.f32.mrb[0].mxu0
        %3309 = vmatprep.mubr.f32.mxu0 0.0
        %3310 = vmatmul.mubr.f32.gmra.mrb[0].mxu0 %v3089
        %v3311 = vpop.f32.mrb[0].mxu0
        %v3312 = vadd.f32 0.0, %v3311
        %v3313 = vpop.f32.mrb[0].mxu0
        %3314 = vmatprep.mubr.f32.mxu0 0.0
        %3315 = vmatmul.mubr.f32.gmra.mrb[0].mxu0 %v3092
        %v3316 = vpop.f32.mrb[0].mxu0
        %v3317 = vadd.f32 0.0, %v3316
        %v3318 = vpop.f32.mrb[0].mxu0
        %3319 = vmatprep.mubr.f32.mxu0 0.0
        %3320 = vmatmul.mubr.f32.gmra.mrb[0].mxu0 %v3095
        %v3321 = vpop.f32.mrb[0].mxu0
        %v3322 = vadd.f32 0.0, %v3321
        %v3323 = vpop.f32.mrb[0].mxu0
        %3324 = vdwg.mxu0
        %v3325 = vadd.f32 %v2967, %v3167
        %v3326 = vadd.f32 %v2968, %v3172
        %v3327 = vadd.f32 %v2969, %v3177
        %v3328 = vadd.f32 %v2970, %v3182
        %v3329 = vadd.f32 %v2971, %v3187
        %v3330 = vadd.f32 %v2972, %v3192
        %v3331 = vadd.f32 %v2973, %v3197
        %v3332 = vadd.f32 %v2974, %v3202
        %v3333 = vadd.f32 %v2975, %v3207
        %v3334 = vadd.f32 %v2976, %v3212
        %v3335 = vadd.f32 %v2977, %v3217
        %v3336 = vadd.f32 %v2978, %v3222
        %v3337 = vadd.f32 %v2979, %v3227
        %v3338 = vadd.f32 %v2980, %v3232
        %v3339 = vadd.f32 %v2981, %v3237
        %v3340 = vadd.f32 %v2982, %v3242
        %v3341 = vadd.f32 %v2983, %v3247
        %v3342 = vadd.f32 %v2984, %v3252
        %v3343 = vadd.f32 %v2985, %v3257
        %v3344 = vadd.f32 %v2986, %v3262
        %v3345 = vadd.f32 %v2987, %v3267
        %v3346 = vadd.f32 %v2988, %v3272
        %v3347 = vadd.f32 %v2989, %v3277
        %v3348 = vadd.f32 %v2990, %v3282
        %v3349 = vadd.f32 %v2991, %v3287
        %v3350 = vadd.f32 %v2992, %v3292
        %v3351 = vadd.f32 %v2993, %v3297
        %v3352 = vadd.f32 %v2994, %v3302
        %v3353 = vadd.f32 %v2995, %v3307
        %v3354 = vadd.f32 %v2996, %v3312
        %v3355 = vadd.f32 %v2997, %v3317
        %v3356 = vadd.f32 %v2998, %v3322
        %3357 = vst [vmem:[#allocation2] sm:$0xff] %v3325
        %3358 = vst [vmem:[#allocation2 + $0x8] sm:$0xff] %v3326
        %3359 = vst [vmem:[#allocation2 + $0x10] sm:$0xff] %v3327
        %3360 = vst [vmem:[#allocation2 + $0x18] sm:$0xff] %v3328
        %3361 = vst [vmem:[#allocation2 + $0x20] sm:$0xff] %v3329
        %3362 = vst [vmem:[#allocation2 + $0x28] sm:$0xff] %v3330
        %3363 = vst [vmem:[#allocation2 + $0x30] sm:$0xff] %v3331
        %3364 = vst [vmem:[#allocation2 + $0x38] sm:$0xff] %v3332
        %3365 = vst [vmem:[#allocation2 + $0x40] sm:$0xff] %v3333
        %3366 = vst [vmem:[#allocation2 + $0x48] sm:$0xff] %v3334
        %3367 = vst [vmem:[#allocation2 + $0x50] sm:$0xff] %v3335
        %3368 = vst [vmem:[#allocation2 + $0x58] sm:$0xff] %v3336
        %3369 = vst [vmem:[#allocation2 + $0x60] sm:$0xff] %v3337
        %3370 = vst [vmem:[#allocation2 + $0x68] sm:$0xff] %v3338
        %3371 = vst [vmem:[#allocation2 + $0x70] sm:$0xff] %v3339
        %3372 = vst [vmem:[#allocation2 + $0x78] sm:$0xff] %v3340
        %3373 = vst [vmem:[#allocation2 + $0x80] sm:$0xff] %v3341
        %3374 = vst [vmem:[#allocation2 + $0x88] sm:$0xff] %v3342
        %3375 = vst [vmem:[#allocation2 + $0x90] sm:$0xff] %v3343
        %3376 = vst [vmem:[#allocation2 + $0x98] sm:$0xff] %v3344
        %3377 = vst [vmem:[#allocation2 + $0xa0] sm:$0xff] %v3345
        %3378 = vst [vmem:[#allocation2 + $0xa8] sm:$0xff] %v3346
        %3379 = vst [vmem:[#allocation2 + $0xb0] sm:$0xff] %v3347
        %3380 = vst [vmem:[#allocation2 + $0xb8] sm:$0xff] %v3348
        %3381 = vst [vmem:[#allocation2 + $0xc0] sm:$0xff] %v3349
        %3382 = vst [vmem:[#allocation2 + $0xc8] sm:$0xff] %v3350
        %3383 = vst [vmem:[#allocation2 + $0xd0] sm:$0xff] %v3351
        %3384 = vst [vmem:[#allocation2 + $0xd8] sm:$0xff] %v3352
        %3385 = vst [vmem:[#allocation2 + $0xe0] sm:$0xff] %v3353
        %3386 = vst [vmem:[#allocation2 + $0xe8] sm:$0xff] %v3354
        %3387 = vst [vmem:[#allocation2 + $0xf0] sm:$0xff] %v3355
        %3388 = vst [vmem:[#allocation2 + $0xf8] sm:$0xff] %v3356
        %v3389 = vld [vmem:[%s2934 + $0x1] sm:$0xff]
        %v3390 = vld [vmem:[%s2934 + $0x9] sm:$0xff]
        %v3391 = vld [vmem:[%s2934 + $0x19] sm:$0xff]
        %v3392 = vld [vmem:[%s2934 + $0x21] sm:$0xff]
        %v3393 = vld [vmem:[%s2934 + $0x31] sm:$0xff]
        %v3394 = vld [vmem:[%s2934 + $0x39] sm:$0xff]
        %v3395 = vld [vmem:[%s2934 + $0x49] sm:$0xff]
        %v3396 = vld [vmem:[%s2934 + $0x51] sm:$0xff]
        %v3397 = vld [vmem:[%s2934 + $0x61] sm:$0xff]
        %v3398 = vld [vmem:[%s2934 + $0x69] sm:$0xff]
        %v3399 = vld [vmem:[%s2934 + $0x79] sm:$0xff]
        %v3400 = vld [vmem:[%s2934 + $0x81] sm:$0xff]
        %v3401 = vld [vmem:[%s2934 + $0x91] sm:$0xff]
        %v3402 = vld [vmem:[%s2934 + $0x99] sm:$0xff]
        %v3403 = vld [vmem:[%s2934 + $0xa9] sm:$0xff]
        %v3404 = vld [vmem:[%s2934 + $0xb1] sm:$0xff]
        %v3405 = vld [vmem:[%s2934 + $0xc1] sm:$0xff]
        %v3406 = vld [vmem:[%s2934 + $0xc9] sm:$0xff]
        %v3407 = vld [vmem:[%s2934 + $0xd9] sm:$0xff]
        %v3408 = vld [vmem:[%s2934 + $0xe1] sm:$0xff]
        %v3409 = vld [vmem:[%s2934 + $0xf1] sm:$0xff]
        %v3410 = vld [vmem:[%s2934 + $0xf9] sm:$0xff]
        %v3411 = vld [vmem:[%s2934 + $0x109] sm:$0xff]
        %v3412 = vld [vmem:[%s2934 + $0x111] sm:$0xff]
        %v3413 = vld [vmem:[%s2934 + $0x121] sm:$0xff]
        %v3414 = vld [vmem:[%s2934 + $0x129] sm:$0xff]
        %v3415 = vld [vmem:[%s2934 + $0x139] sm:$0xff]
        %v3416 = vld [vmem:[%s2934 + $0x141] sm:$0xff]
        %v3417 = vld [vmem:[%s2934 + $0x151] sm:$0xff]
        %v3418 = vld [vmem:[%s2934 + $0x159] sm:$0xff]
        %v3419 = vld [vmem:[%s2934 + $0x169] sm:$0xff]
        %v3420 = vld [vmem:[%s2934 + $0x171] sm:$0xff]
        %v3421 = vld [vmem:[#allocation2] sm:$0xff]
        %v3422 = vld [vmem:[#allocation2 + $0x8] sm:$0xff]
        %v3423 = vld [vmem:[#allocation2 + $0x10] sm:$0xff]
        %v3424 = vld [vmem:[#allocation2 + $0x18] sm:$0xff]
        %v3425 = vld [vmem:[#allocation2 + $0x20] sm:$0xff]
        %v3426 = vld [vmem:[#allocation2 + $0x28] sm:$0xff]
        %v3427 = vld [vmem:[#allocation2 + $0x30] sm:$0xff]
        %v3428 = vld [vmem:[#allocation2 + $0x38] sm:$0xff]
        %v3429 = vld [vmem:[#allocation2 + $0x40] sm:$0xff]
        %v3430 = vld [vmem:[#allocation2 + $0x48] sm:$0xff]
        %v3431 = vld [vmem:[#allocation2 + $0x50] sm:$0xff]
        %v3432 = vld [vmem:[#allocation2 + $0x58] sm:$0xff]
        %v3433 = vld [vmem:[#allocation2 + $0x60] sm:$0xff]
        %v3434 = vld [vmem:[#allocation2 + $0x68] sm:$0xff]
        %v3435 = vld [vmem:[#allocation2 + $0x70] sm:$0xff]
        %v3436 = vld [vmem:[#allocation2 + $0x78] sm:$0xff]
        %v3437 = vld [vmem:[#allocation2 + $0x80] sm:$0xff]
        %v3438 = vld [vmem:[#allocation2 + $0x88] sm:$0xff]
        %v3439 = vld [vmem:[#allocation2 + $0x90] sm:$0xff]
        %v3440 = vld [vmem:[#allocation2 + $0x98] sm:$0xff]
        %v3441 = vld [vmem:[#allocation2 + $0xa0] sm:$0xff]
        %v3442 = vld [vmem:[#allocation2 + $0xa8] sm:$0xff]
        %v3443 = vld [vmem:[#allocation2 + $0xb0] sm:$0xff]
        %v3444 = vld [vmem:[#allocation2 + $0xb8] sm:$0xff]
        %v3445 = vld [vmem:[#allocation2 + $0xc0] sm:$0xff]
        %v3446 = vld [vmem:[#allocation2 + $0xc8] sm:$0xff]
        %v3447 = vld [vmem:[#allocation2 + $0xd0] sm:$0xff]
        %v3448 = vld [vmem:[#allocation2 + $0xd8] sm:$0xff]
        %v3449 = vld [vmem:[#allocation2 + $0xe0] sm:$0xff]
        %v3450 = vld [vmem:[#allocation2 + $0xe8] sm:$0xff]
        %v3451 = vld [vmem:[#allocation2 + $0xf0] sm:$0xff]
        %v3452 = vld [vmem:[#allocation2 + $0xf8] sm:$0xff]
        %s3453 = scalar_lea.vmem %s1, 28
        %v3454 = vld [vmem:[%s3453] sm:$0xf]
        %v3456 = vsel %vm273, %v3389, 0
        %v3459 = vsel %vm273, %v3390, 0
        %v3462 = vsel %vm273, %v3391, 0
        %v3465 = vsel %vm273, %v3392, 0
        %v3468 = vsel %vm273, %v3393, 0
        %v3471 = vsel %vm273, %v3394, 0
        %v3474 = vsel %vm273, %v3395, 0
        %v3477 = vsel %vm273, %v3396, 0
        %v3480 = vsel %vm273, %v3397, 0
        %v3483 = vsel %vm273, %v3398, 0
        %v3486 = vsel %vm273, %v3399, 0
        %v3489 = vsel %vm273, %v3400, 0
        %v3492 = vsel %vm273, %v3401, 0
        %v3495 = vsel %vm273, %v3402, 0
        %v3498 = vsel %vm273, %v3403, 0
        %v3501 = vsel %vm273, %v3404, 0
        %v3504 = vsel %vm273, %v3405, 0
        %v3507 = vsel %vm273, %v3406, 0
        %v3510 = vsel %vm273, %v3407, 0
        %v3513 = vsel %vm273, %v3408, 0
        %v3516 = vsel %vm273, %v3409, 0
        %v3519 = vsel %vm273, %v3410, 0
        %v3522 = vsel %vm273, %v3411, 0
        %v3525 = vsel %vm273, %v3412, 0
        %v3528 = vsel %vm273, %v3413, 0
        %v3531 = vsel %vm273, %v3414, 0
        %v3534 = vsel %vm273, %v3415, 0
        %v3537 = vsel %vm273, %v3416, 0
        %v3540 = vsel %vm273, %v3417, 0
        %v3543 = vsel %vm273, %v3418, 0
        %v3546 = vsel %vm273, %v3419, 0
        %v3549 = vsel %vm273, %v3420, 0
        %v3552 = vsel %vm370, %v3454, 0
        %3554 = vmatprep.subr.mxu0 0.0
        %3555 = vmatpush1.msra.mxu0 %v3552
        %3556 = vmatprep.subr.mxu0 0.0
        %3557 = vmatpush1.msra.mxu0 0.0
        %3558 = vmatprep.subr.mxu0 0.0
        %3559 = vmatpush1.msra.mxu0 0.0
        %3560 = vmatprep.subr.mxu0 0.0
        %3561 = vmatpush1.msra.mxu0 0.0
        %3562 = vmatprep.subr.mxu0 0.0
        %3563 = vmatpush1.msra.mxu0 0.0
        %3564 = vmatprep.subr.mxu0 0.0
        %3565 = vmatpush1.msra.mxu0 0.0
        %3566 = vmatprep.subr.mxu0 0.0
        %3567 = vmatpush1.msra.mxu0 0.0
        %3568 = vmatprep.subr.mxu0 0.0
        %3569 = vmatpush1.msra.mxu0 0.0
        %3570 = vmatprep.subr.mxu0 0.0
        %3571 = vmatpush1.msra.mxu0 0.0
        %3572 = vmatprep.subr.mxu0 0.0
        %3573 = vmatpush1.msra.mxu0 0.0
        %3574 = vmatprep.subr.mxu0 0.0
        %3575 = vmatpush1.msra.mxu0 0.0
        %3576 = vmatprep.subr.mxu0 0.0
        %3577 = vmatpush1.msra.mxu0 0.0
        %3578 = vmatprep.subr.mxu0 0.0
        %3579 = vmatpush1.msra.mxu0 0.0
        %3580 = vmatprep.subr.mxu0 0.0
        %3581 = vmatpush1.msra.mxu0 0.0
        %3582 = vmatprep.subr.mxu0 0.0
        %3583 = vmatpush1.msra.mxu0 0.0
        %3584 = vmatprep.subr.mxu0 0.0
        %3585 = vmatpush1.msra.mxu0 0.0
        %3586 = vmatprep.subr.mxu0 0.0
        %3587 = vmatpush1.msra.mxu0 0.0
        %3588 = vmatprep.subr.mxu0 0.0
        %3589 = vmatpush1.msra.mxu0 0.0
        %3590 = vmatprep.subr.mxu0 0.0
        %3591 = vmatpush1.msra.mxu0 0.0
        %3592 = vmatprep.subr.mxu0 0.0
        %3593 = vmatpush1.msra.mxu0 0.0
        %3594 = vmatprep.subr.mxu0 0.0
        %3595 = vmatpush1.msra.mxu0 0.0
        %3596 = vmatprep.subr.mxu0 0.0
        %3597 = vmatpush1.msra.mxu0 0.0
        %3598 = vmatprep.subr.mxu0 0.0
        %3599 = vmatpush1.msra.mxu0 0.0
        %3600 = vmatprep.subr.mxu0 0.0
        %3601 = vmatpush1.msra.mxu0 0.0
        %3602 = vmatprep.subr.mxu0 0.0
        %3603 = vmatpush1.msra.mxu0 0.0
        %3604 = vmatprep.subr.mxu0 0.0
        %3605 = vmatpush1.msra.mxu0 0.0
        %3606 = vmatprep.subr.mxu0 0.0
        %3607 = vmatpush1.msra.mxu0 0.0
        %3608 = vmatprep.subr.mxu0 0.0
        %3609 = vmatpush1.msra.mxu0 0.0
        %3610 = vmatprep.subr.mxu0 0.0
        %3611 = vmatpush1.msra.mxu0 0.0
        %3612 = vmatprep.subr.mxu0 0.0
        %3613 = vmatpush1.msra.mxu0 0.0
        %3614 = vmatprep.subr.mxu0 0.0
        %3615 = vmatpush1.msra.mxu0 0.0
        %3616 = vmatprep.subr.mxu0 0.0
        %3617 = vmatpush1.msra.mxu0 0.0
        %3618 = vmatprep.mubr.f32.mxu0 0.0
        %3619 = vmatmul.mubr.f32.gmra.mrb[0].mxu0 %v3456
        %v3620 = vpop.f32.mrb[0].mxu0
        %v3621 = vadd.f32 0.0, %v3620
        %v3622 = vpop.f32.mrb[0].mxu0
        %3623 = vmatprep.mubr.f32.mxu0 0.0
        %3624 = vmatmul.mubr.f32.gmra.mrb[0].mxu0 %v3459
        %v3625 = vpop.f32.mrb[0].mxu0
        %v3626 = vadd.f32 0.0, %v3625
        %v3627 = vpop.f32.mrb[0].mxu0
        %3628 = vmatprep.mubr.f32.mxu0 0.0
        %3629 = vmatmul.mubr.f32.gmra.mrb[0].mxu0 %v3462
        %v3630 = vpop.f32.mrb[0].mxu0
        %v3631 = vadd.f32 0.0, %v3630
        %v3632 = vpop.f32.mrb[0].mxu0
        %3633 = vmatprep.mubr.f32.mxu0 0.0
        %3634 = vmatmul.mubr.f32.gmra.mrb[0].mxu0 %v3465
        %v3635 = vpop.f32.mrb[0].mxu0
        %v3636 = vadd.f32 0.0, %v3635
        %v3637 = vpop.f32.mrb[0].mxu0
        %3638 = vmatprep.mubr.f32.mxu0 0.0
        %3639 = vmatmul.mubr.f32.gmra.mrb[0].mxu0 %v3468
        %v3640 = vpop.f32.mrb[0].mxu0
        %v3641 = vadd.f32 0.0, %v3640
        %v3642 = vpop.f32.mrb[0].mxu0
        %3643 = vmatprep.mubr.f32.mxu0 0.0
        %3644 = vmatmul.mubr.f32.gmra.mrb[0].mxu0 %v3471
        %v3645 = vpop.f32.mrb[0].mxu0
        %v3646 = vadd.f32 0.0, %v3645
        %v3647 = vpop.f32.mrb[0].mxu0
        %3648 = vmatprep.mubr.f32.mxu0 0.0
        %3649 = vmatmul.mubr.f32.gmra.mrb[0].mxu0 %v3474
        %v3650 = vpop.f32.mrb[0].mxu0
        %v3651 = vadd.f32 0.0, %v3650
        %v3652 = vpop.f32.mrb[0].mxu0
        %3653 = vmatprep.mubr.f32.mxu0 0.0
        %3654 = vmatmul.mubr.f32.gmra.mrb[0].mxu0 %v3477
        %v3655 = vpop.f32.mrb[0].mxu0
        %v3656 = vadd.f32 0.0, %v3655
        %v3657 = vpop.f32.mrb[0].mxu0
        %3658 = vmatprep.mubr.f32.mxu0 0.0
        %3659 = vmatmul.mubr.f32.gmra.mrb[0].mxu0 %v3480
        %v3660 = vpop.f32.mrb[0].mxu0
        %v3661 = vadd.f32 0.0, %v3660
        %v3662 = vpop.f32.mrb[0].mxu0
        %3663 = vmatprep.mubr.f32.mxu0 0.0
        %3664 = vmatmul.mubr.f32.gmra.mrb[0].mxu0 %v3483
        %v3665 = vpop.f32.mrb[0].mxu0
        %v3666 = vadd.f32 0.0, %v3665
        %v3667 = vpop.f32.mrb[0].mxu0
        %3668 = vmatprep.mubr.f32.mxu0 0.0
        %3669 = vmatmul.mubr.f32.gmra.mrb[0].mxu0 %v3486
        %v3670 = vpop.f32.mrb[0].mxu0
        %v3671 = vadd.f32 0.0, %v3670
        %v3672 = vpop.f32.mrb[0].mxu0
        %3673 = vmatprep.mubr.f32.mxu0 0.0
        %3674 = vmatmul.mubr.f32.gmra.mrb[0].mxu0 %v3489
        %v3675 = vpop.f32.mrb[0].mxu0
        %v3676 = vadd.f32 0.0, %v3675
        %v3677 = vpop.f32.mrb[0].mxu0
        %3678 = vmatprep.mubr.f32.mxu0 0.0
        %3679 = vmatmul.mubr.f32.gmra.mrb[0].mxu0 %v3492
        %v3680 = vpop.f32.mrb[0].mxu0
        %v3681 = vadd.f32 0.0, %v3680
        %v3682 = vpop.f32.mrb[0].mxu0
        %3683 = vmatprep.mubr.f32.mxu0 0.0
        %3684 = vmatmul.mubr.f32.gmra.mrb[0].mxu0 %v3495
        %v3685 = vpop.f32.mrb[0].mxu0
        %v3686 = vadd.f32 0.0, %v3685
        %v3687 = vpop.f32.mrb[0].mxu0
        %3688 = vmatprep.mubr.f32.mxu0 0.0
        %3689 = vmatmul.mubr.f32.gmra.mrb[0].mxu0 %v3498
        %v3690 = vpop.f32.mrb[0].mxu0
        %v3691 = vadd.f32 0.0, %v3690
        %v3692 = vpop.f32.mrb[0].mxu0
        %3693 = vmatprep.mubr.f32.mxu0 0.0
        %3694 = vmatmul.mubr.f32.gmra.mrb[0].mxu0 %v3501
        %v3695 = vpop.f32.mrb[0].mxu0
        %v3696 = vadd.f32 0.0, %v3695
        %v3697 = vpop.f32.mrb[0].mxu0
        %3698 = vmatprep.mubr.f32.mxu0 0.0
        %3699 = vmatmul.mubr.f32.gmra.mrb[0].mxu0 %v3504
        %v3700 = vpop.f32.mrb[0].mxu0
        %v3701 = vadd.f32 0.0, %v3700
        %v3702 = vpop.f32.mrb[0].mxu0
        %3703 = vmatprep.mubr.f32.mxu0 0.0
        %3704 = vmatmul.mubr.f32.gmra.mrb[0].mxu0 %v3507
        %v3705 = vpop.f32.mrb[0].mxu0
        %v3706 = vadd.f32 0.0, %v3705
        %v3707 = vpop.f32.mrb[0].mxu0
        %3708 = vmatprep.mubr.f32.mxu0 0.0
        %3709 = vmatmul.mubr.f32.gmra.mrb[0].mxu0 %v3510
        %v3710 = vpop.f32.mrb[0].mxu0
        %v3711 = vadd.f32 0.0, %v3710
        %v3712 = vpop.f32.mrb[0].mxu0
        %3713 = vmatprep.mubr.f32.mxu0 0.0
        %3714 = vmatmul.mubr.f32.gmra.mrb[0].mxu0 %v3513
        %v3715 = vpop.f32.mrb[0].mxu0
        %v3716 = vadd.f32 0.0, %v3715
        %v3717 = vpop.f32.mrb[0].mxu0
        %3718 = vmatprep.mubr.f32.mxu0 0.0
        %3719 = vmatmul.mubr.f32.gmra.mrb[0].mxu0 %v3516
        %v3720 = vpop.f32.mrb[0].mxu0
        %v3721 = vadd.f32 0.0, %v3720
        %v3722 = vpop.f32.mrb[0].mxu0
        %3723 = vmatprep.mubr.f32.mxu0 0.0
        %3724 = vmatmul.mubr.f32.gmra.mrb[0].mxu0 %v3519
        %v3725 = vpop.f32.mrb[0].mxu0
        %v3726 = vadd.f32 0.0, %v3725
        %v3727 = vpop.f32.mrb[0].mxu0
        %3728 = vmatprep.mubr.f32.mxu0 0.0
        %3729 = vmatmul.mubr.f32.gmra.mrb[0].mxu0 %v3522
        %v3730 = vpop.f32.mrb[0].mxu0
        %v3731 = vadd.f32 0.0, %v3730
        %v3732 = vpop.f32.mrb[0].mxu0
        %3733 = vmatprep.mubr.f32.mxu0 0.0
        %3734 = vmatmul.mubr.f32.gmra.mrb[0].mxu0 %v3525
        %v3735 = vpop.f32.mrb[0].mxu0
        %v3736 = vadd.f32 0.0, %v3735
        %v3737 = vpop.f32.mrb[0].mxu0
        %3738 = vmatprep.mubr.f32.mxu0 0.0
        %3739 = vmatmul.mubr.f32.gmra.mrb[0].mxu0 %v3528
        %v3740 = vpop.f32.mrb[0].mxu0
        %v3741 = vadd.f32 0.0, %v3740
        %v3742 = vpop.f32.mrb[0].mxu0
        %3743 = vmatprep.mubr.f32.mxu0 0.0
        %3744 = vmatmul.mubr.f32.gmra.mrb[0].mxu0 %v3531
        %v3745 = vpop.f32.mrb[0].mxu0
        %v3746 = vadd.f32 0.0, %v3745
        %v3747 = vpop.f32.mrb[0].mxu0
        %3748 = vmatprep.mubr.f32.mxu0 0.0
        %3749 = vmatmul.mubr.f32.gmra.mrb[0].mxu0 %v3534
        %v3750 = vpop.f32.mrb[0].mxu0
        %v3751 = vadd.f32 0.0, %v3750
        %v3752 = vpop.f32.mrb[0].mxu0
        %3753 = vmatprep.mubr.f32.mxu0 0.0
        %3754 = vmatmul.mubr.f32.gmra.mrb[0].mxu0 %v3537
        %v3755 = vpop.f32.mrb[0].mxu0
        %v3756 = vadd.f32 0.0, %v3755
        %v3757 = vpop.f32.mrb[0].mxu0
        %3758 = vmatprep.mubr.f32.mxu0 0.0
        %3759 = vmatmul.mubr.f32.gmra.mrb[0].mxu0 %v3540
        %v3760 = vpop.f32.mrb[0].mxu0
        %v3761 = vadd.f32 0.0, %v3760
        %v3762 = vpop.f32.mrb[0].mxu0
        %3763 = vmatprep.mubr.f32.mxu0 0.0
        %3764 = vmatmul.mubr.f32.gmra.mrb[0].mxu0 %v3543
        %v3765 = vpop.f32.mrb[0].mxu0
        %v3766 = vadd.f32 0.0, %v3765
        %v3767 = vpop.f32.mrb[0].mxu0
        %3768 = vmatprep.mubr.f32.mxu0 0.0
        %3769 = vmatmul.mubr.f32.gmra.mrb[0].mxu0 %v3546
        %v3770 = vpop.f32.mrb[0].mxu0
        %v3771 = vadd.f32 0.0, %v3770
        %v3772 = vpop.f32.mrb[0].mxu0
        %3773 = vmatprep.mubr.f32.mxu0 0.0
        %3774 = vmatmul.mubr.f32.gmra.mrb[0].mxu0 %v3549
        %v3775 = vpop.f32.mrb[0].mxu0
        %v3776 = vadd.f32 0.0, %v3775
        %v3777 = vpop.f32.mrb[0].mxu0
        %3778 = vdwg.mxu0
        %v3779 = vadd.f32 %v3421, %v3621
        %v3780 = vadd.f32 %v3422, %v3626
        %v3781 = vadd.f32 %v3423, %v3631
        %v3782 = vadd.f32 %v3424, %v3636
        %v3783 = vadd.f32 %v3425, %v3641
        %v3784 = vadd.f32 %v3426, %v3646
        %v3785 = vadd.f32 %v3427, %v3651
        %v3786 = vadd.f32 %v3428, %v3656
        %v3787 = vadd.f32 %v3429, %v3661
        %v3788 = vadd.f32 %v3430, %v3666
        %v3789 = vadd.f32 %v3431, %v3671
        %v3790 = vadd.f32 %v3432, %v3676
        %v3791 = vadd.f32 %v3433, %v3681
        %v3792 = vadd.f32 %v3434, %v3686
        %v3793 = vadd.f32 %v3435, %v3691
        %v3794 = vadd.f32 %v3436, %v3696
        %v3795 = vadd.f32 %v3437, %v3701
        %v3796 = vadd.f32 %v3438, %v3706
        %v3797 = vadd.f32 %v3439, %v3711
        %v3798 = vadd.f32 %v3440, %v3716
        %v3799 = vadd.f32 %v3441, %v3721
        %v3800 = vadd.f32 %v3442, %v3726
        %v3801 = vadd.f32 %v3443, %v3731
        %v3802 = vadd.f32 %v3444, %v3736
        %v3803 = vadd.f32 %v3445, %v3741
        %v3804 = vadd.f32 %v3446, %v3746
        %v3805 = vadd.f32 %v3447, %v3751
        %v3806 = vadd.f32 %v3448, %v3756
        %v3807 = vadd.f32 %v3449, %v3761
        %v3808 = vadd.f32 %v3450, %v3766
        %v3809 = vadd.f32 %v3451, %v3771
        %v3810 = vadd.f32 %v3452, %v3776
        %3811 = vst [vmem:[#allocation2] sm:$0xff] %v3779
        %3812 = vst [vmem:[#allocation2 + $0x8] sm:$0xff] %v3780
        %3813 = vst [vmem:[#allocation2 + $0x10] sm:$0xff] %v3781
        %3814 = vst [vmem:[#allocation2 + $0x18] sm:$0xff] %v3782
        %3815 = vst [vmem:[#allocation2 + $0x20] sm:$0xff] %v3783
        %3816 = vst [vmem:[#allocation2 + $0x28] sm:$0xff] %v3784
        %3817 = vst [vmem:[#allocation2 + $0x30] sm:$0xff] %v3785
        %3818 = vst [vmem:[#allocation2 + $0x38] sm:$0xff] %v3786
        %3819 = vst [vmem:[#allocation2 + $0x40] sm:$0xff] %v3787
        %3820 = vst [vmem:[#allocation2 + $0x48] sm:$0xff] %v3788
        %3821 = vst [vmem:[#allocation2 + $0x50] sm:$0xff] %v3789
        %3822 = vst [vmem:[#allocation2 + $0x58] sm:$0xff] %v3790
        %3823 = vst [vmem:[#allocation2 + $0x60] sm:$0xff] %v3791
        %3824 = vst [vmem:[#allocation2 + $0x68] sm:$0xff] %v3792
        %3825 = vst [vmem:[#allocation2 + $0x70] sm:$0xff] %v3793
        %3826 = vst [vmem:[#allocation2 + $0x78] sm:$0xff] %v3794
        %3827 = vst [vmem:[#allocation2 + $0x80] sm:$0xff] %v3795
        %3828 = vst [vmem:[#allocation2 + $0x88] sm:$0xff] %v3796
        %3829 = vst [vmem:[#allocation2 + $0x90] sm:$0xff] %v3797
        %3830 = vst [vmem:[#allocation2 + $0x98] sm:$0xff] %v3798
        %3831 = vst [vmem:[#allocation2 + $0xa0] sm:$0xff] %v3799
        %3832 = vst [vmem:[#allocation2 + $0xa8] sm:$0xff] %v3800
        %3833 = vst [vmem:[#allocation2 + $0xb0] sm:$0xff] %v3801
        %3834 = vst [vmem:[#allocation2 + $0xb8] sm:$0xff] %v3802
        %3835 = vst [vmem:[#allocation2 + $0xc0] sm:$0xff] %v3803
        %3836 = vst [vmem:[#allocation2 + $0xc8] sm:$0xff] %v3804
        %3837 = vst [vmem:[#allocation2 + $0xd0] sm:$0xff] %v3805
        %3838 = vst [vmem:[#allocation2 + $0xd8] sm:$0xff] %v3806
        %3839 = vst [vmem:[#allocation2 + $0xe0] sm:$0xff] %v3807
        %3840 = vst [vmem:[#allocation2 + $0xe8] sm:$0xff] %v3808
        %3841 = vst [vmem:[#allocation2 + $0xf0] sm:$0xff] %v3809
        %3842 = vst [vmem:[#allocation2 + $0xf8] sm:$0xff] %v3810
        %v3843 = vld [vmem:[%s2934 + $0x2] sm:$0xff]
        %v3844 = vld [vmem:[%s2934 + $0xa] sm:$0xff]
        %v3845 = vld [vmem:[%s2934 + $0x1a] sm:$0xff]
        %v3846 = vld [vmem:[%s2934 + $0x22] sm:$0xff]
        %v3847 = vld [vmem:[%s2934 + $0x32] sm:$0xff]
        %v3848 = vld [vmem:[%s2934 + $0x3a] sm:$0xff]
        %v3849 = vld [vmem:[%s2934 + $0x4a] sm:$0xff]
        %v3850 = vld [vmem:[%s2934 + $0x52] sm:$0xff]
        %v3851 = vld [vmem:[%s2934 + $0x62] sm:$0xff]
        %v3852 = vld [vmem:[%s2934 + $0x6a] sm:$0xff]
        %v3853 = vld [vmem:[%s2934 + $0x7a] sm:$0xff]
        %v3854 = vld [vmem:[%s2934 + $0x82] sm:$0xff]
        %v3855 = vld [vmem:[%s2934 + $0x92] sm:$0xff]
        %v3856 = vld [vmem:[%s2934 + $0x9a] sm:$0xff]
        %v3857 = vld [vmem:[%s2934 + $0xaa] sm:$0xff]
        %v3858 = vld [vmem:[%s2934 + $0xb2] sm:$0xff]
        %v3859 = vld [vmem:[%s2934 + $0xc2] sm:$0xff]
        %v3860 = vld [vmem:[%s2934 + $0xca] sm:$0xff]
        %v3861 = vld [vmem:[%s2934 + $0xda] sm:$0xff]
        %v3862 = vld [vmem:[%s2934 + $0xe2] sm:$0xff]
        %v3863 = vld [vmem:[%s2934 + $0xf2] sm:$0xff]
        %v3864 = vld [vmem:[%s2934 + $0xfa] sm:$0xff]
        %v3865 = vld [vmem:[%s2934 + $0x10a] sm:$0xff]
        %v3866 = vld [vmem:[%s2934 + $0x112] sm:$0xff]
        %v3867 = vld [vmem:[%s2934 + $0x122] sm:$0xff]
        %v3868 = vld [vmem:[%s2934 + $0x12a] sm:$0xff]
        %v3869 = vld [vmem:[%s2934 + $0x13a] sm:$0xff]
        %v3870 = vld [vmem:[%s2934 + $0x142] sm:$0xff]
        %v3871 = vld [vmem:[%s2934 + $0x152] sm:$0xff]
        %v3872 = vld [vmem:[%s2934 + $0x15a] sm:$0xff]
        %v3873 = vld [vmem:[%s2934 + $0x16a] sm:$0xff]
        %v3874 = vld [vmem:[%s2934 + $0x172] sm:$0xff]
        %v3875 = vld [vmem:[#allocation2] sm:$0xff]
        %v3876 = vld [vmem:[#allocation2 + $0x8] sm:$0xff]
        %v3877 = vld [vmem:[#allocation2 + $0x10] sm:$0xff]
        %v3878 = vld [vmem:[#allocation2 + $0x18] sm:$0xff]
        %v3879 = vld [vmem:[#allocation2 + $0x20] sm:$0xff]
        %v3880 = vld [vmem:[#allocation2 + $0x28] sm:$0xff]
        %v3881 = vld [vmem:[#allocation2 + $0x30] sm:$0xff]
        %v3882 = vld [vmem:[#allocation2 + $0x38] sm:$0xff]
        %v3883 = vld [vmem:[#allocation2 + $0x40] sm:$0xff]
        %v3884 = vld [vmem:[#allocation2 + $0x48] sm:$0xff]
        %v3885 = vld [vmem:[#allocation2 + $0x50] sm:$0xff]
        %v3886 = vld [vmem:[#allocation2 + $0x58] sm:$0xff]
        %v3887 = vld [vmem:[#allocation2 + $0x60] sm:$0xff]
        %v3888 = vld [vmem:[#allocation2 + $0x68] sm:$0xff]
        %v3889 = vld [vmem:[#allocation2 + $0x70] sm:$0xff]
        %v3890 = vld [vmem:[#allocation2 + $0x78] sm:$0xff]
        %v3891 = vld [vmem:[#allocation2 + $0x80] sm:$0xff]
        %v3892 = vld [vmem:[#allocation2 + $0x88] sm:$0xff]
        %v3893 = vld [vmem:[#allocation2 + $0x90] sm:$0xff]
        %v3894 = vld [vmem:[#allocation2 + $0x98] sm:$0xff]
        %v3895 = vld [vmem:[#allocation2 + $0xa0] sm:$0xff]
        %v3896 = vld [vmem:[#allocation2 + $0xa8] sm:$0xff]
        %v3897 = vld [vmem:[#allocation2 + $0xb0] sm:$0xff]
        %v3898 = vld [vmem:[#allocation2 + $0xb8] sm:$0xff]
        %v3899 = vld [vmem:[#allocation2 + $0xc0] sm:$0xff]
        %v3900 = vld [vmem:[#allocation2 + $0xc8] sm:$0xff]
        %v3901 = vld [vmem:[#allocation2 + $0xd0] sm:$0xff]
        %v3902 = vld [vmem:[#allocation2 + $0xd8] sm:$0xff]
        %v3903 = vld [vmem:[#allocation2 + $0xe0] sm:$0xff]
        %v3904 = vld [vmem:[#allocation2 + $0xe8] sm:$0xff]
        %v3905 = vld [vmem:[#allocation2 + $0xf0] sm:$0xff]
        %v3906 = vld [vmem:[#allocation2 + $0xf8] sm:$0xff]
        %s3907 = scalar_lea.vmem %s1, 32
        %v3908 = vld [vmem:[%s3907] sm:$0xf]
        %v3910 = vsel %vm273, %v3843, 0
        %v3913 = vsel %vm273, %v3844, 0
        %v3916 = vsel %vm273, %v3845, 0
        %v3919 = vsel %vm273, %v3846, 0
        %v3922 = vsel %vm273, %v3847, 0
        %v3925 = vsel %vm273, %v3848, 0
        %v3928 = vsel %vm273, %v3849, 0
        %v3931 = vsel %vm273, %v3850, 0
        %v3934 = vsel %vm273, %v3851, 0
        %v3937 = vsel %vm273, %v3852, 0
        %v3940 = vsel %vm273, %v3853, 0
        %v3943 = vsel %vm273, %v3854, 0
        %v3946 = vsel %vm273, %v3855, 0
        %v3949 = vsel %vm273, %v3856, 0
        %v3952 = vsel %vm273, %v3857, 0
        %v3955 = vsel %vm273, %v3858, 0
        %v3958 = vsel %vm273, %v3859, 0
        %v3961 = vsel %vm273, %v3860, 0
        %v3964 = vsel %vm273, %v3861, 0
        %v3967 = vsel %vm273, %v3862, 0
        %v3970 = vsel %vm273, %v3863, 0
        %v3973 = vsel %vm273, %v3864, 0
        %v3976 = vsel %vm273, %v3865, 0
        %v3979 = vsel %vm273, %v3866, 0
        %v3982 = vsel %vm273, %v3867, 0
        %v3985 = vsel %vm273, %v3868, 0
        %v3988 = vsel %vm273, %v3869, 0
        %v3991 = vsel %vm273, %v3870, 0
        %v3994 = vsel %vm273, %v3871, 0
        %v3997 = vsel %vm273, %v3872, 0
        %v4000 = vsel %vm273, %v3873, 0
        %v4003 = vsel %vm273, %v3874, 0
        %v4006 = vsel %vm370, %v3908, 0
        %4008 = vmatprep.subr.mxu0 0.0
        %4009 = vmatpush1.msra.mxu0 %v4006
        %4010 = vmatprep.subr.mxu0 0.0
        %4011 = vmatpush1.msra.mxu0 0.0
        %4012 = vmatprep.subr.mxu0 0.0
        %4013 = vmatpush1.msra.mxu0 0.0
        %4014 = vmatprep.subr.mxu0 0.0
        %4015 = vmatpush1.msra.mxu0 0.0
        %4016 = vmatprep.subr.mxu0 0.0
        %4017 = vmatpush1.msra.mxu0 0.0
        %4018 = vmatprep.subr.mxu0 0.0
        %4019 = vmatpush1.msra.mxu0 0.0
        %4020 = vmatprep.subr.mxu0 0.0
        %4021 = vmatpush1.msra.mxu0 0.0
        %4022 = vmatprep.subr.mxu0 0.0
        %4023 = vmatpush1.msra.mxu0 0.0
        %4024 = vmatprep.subr.mxu0 0.0
        %4025 = vmatpush1.msra.mxu0 0.0
        %4026 = vmatprep.subr.mxu0 0.0
        %4027 = vmatpush1.msra.mxu0 0.0
        %4028 = vmatprep.subr.mxu0 0.0
        %4029 = vmatpush1.msra.mxu0 0.0
        %4030 = vmatprep.subr.mxu0 0.0
        %4031 = vmatpush1.msra.mxu0 0.0
        %4032 = vmatprep.subr.mxu0 0.0
        %4033 = vmatpush1.msra.mxu0 0.0
        %4034 = vmatprep.subr.mxu0 0.0
        %4035 = vmatpush1.msra.mxu0 0.0
        %4036 = vmatprep.subr.mxu0 0.0
        %4037 = vmatpush1.msra.mxu0 0.0
        %4038 = vmatprep.subr.mxu0 0.0
        %4039 = vmatpush1.msra.mxu0 0.0
        %4040 = vmatprep.subr.mxu0 0.0
        %4041 = vmatpush1.msra.mxu0 0.0
        %4042 = vmatprep.subr.mxu0 0.0
        %4043 = vmatpush1.msra.mxu0 0.0
        %4044 = vmatprep.subr.mxu0 0.0
        %4045 = vmatpush1.msra.mxu0 0.0
        %4046 = vmatprep.subr.mxu0 0.0
        %4047 = vmatpush1.msra.mxu0 0.0
        %4048 = vmatprep.subr.mxu0 0.0
        %4049 = vmatpush1.msra.mxu0 0.0
        %4050 = vmatprep.subr.mxu0 0.0
        %4051 = vmatpush1.msra.mxu0 0.0
        %4052 = vmatprep.subr.mxu0 0.0
        %4053 = vmatpush1.msra.mxu0 0.0
        %4054 = vmatprep.subr.mxu0 0.0
        %4055 = vmatpush1.msra.mxu0 0.0
        %4056 = vmatprep.subr.mxu0 0.0
        %4057 = vmatpush1.msra.mxu0 0.0
        %4058 = vmatprep.subr.mxu0 0.0
        %4059 = vmatpush1.msra.mxu0 0.0
        %4060 = vmatprep.subr.mxu0 0.0
        %4061 = vmatpush1.msra.mxu0 0.0
        %4062 = vmatprep.subr.mxu0 0.0
        %4063 = vmatpush1.msra.mxu0 0.0
        %4064 = vmatprep.subr.mxu0 0.0
        %4065 = vmatpush1.msra.mxu0 0.0
        %4066 = vmatprep.subr.mxu0 0.0
        %4067 = vmatpush1.msra.mxu0 0.0
        %4068 = vmatprep.subr.mxu0 0.0
        %4069 = vmatpush1.msra.mxu0 0.0
        %4070 = vmatprep.subr.mxu0 0.0
        %4071 = vmatpush1.msra.mxu0 0.0
        %4072 = vmatprep.mubr.f32.mxu0 0.0
        %4073 = vmatmul.mubr.f32.gmra.mrb[0].mxu0 %v3910
        %v4074 = vpop.f32.mrb[0].mxu0
        %v4075 = vadd.f32 0.0, %v4074
        %v4076 = vpop.f32.mrb[0].mxu0
        %4077 = vmatprep.mubr.f32.mxu0 0.0
        %4078 = vmatmul.mubr.f32.gmra.mrb[0].mxu0 %v3913
        %v4079 = vpop.f32.mrb[0].mxu0
        %v4080 = vadd.f32 0.0, %v4079
        %v4081 = vpop.f32.mrb[0].mxu0
        %4082 = vmatprep.mubr.f32.mxu0 0.0
        %4083 = vmatmul.mubr.f32.gmra.mrb[0].mxu0 %v3916
        %v4084 = vpop.f32.mrb[0].mxu0
        %v4085 = vadd.f32 0.0, %v4084
        %v4086 = vpop.f32.mrb[0].mxu0
        %4087 = vmatprep.mubr.f32.mxu0 0.0
        %4088 = vmatmul.mubr.f32.gmra.mrb[0].mxu0 %v3919
        %v4089 = vpop.f32.mrb[0].mxu0
        %v4090 = vadd.f32 0.0, %v4089
        %v4091 = vpop.f32.mrb[0].mxu0
        %4092 = vmatprep.mubr.f32.mxu0 0.0
        %4093 = vmatmul.mubr.f32.gmra.mrb[0].mxu0 %v3922
        %v4094 = vpop.f32.mrb[0].mxu0
        %v4095 = vadd.f32 0.0, %v4094
        %v4096 = vpop.f32.mrb[0].mxu0
        %4097 = vmatprep.mubr.f32.mxu0 0.0
        %4098 = vmatmul.mubr.f32.gmra.mrb[0].mxu0 %v3925
        %v4099 = vpop.f32.mrb[0].mxu0
        %v4100 = vadd.f32 0.0, %v4099
        %v4101 = vpop.f32.mrb[0].mxu0
        %4102 = vmatprep.mubr.f32.mxu0 0.0
        %4103 = vmatmul.mubr.f32.gmra.mrb[0].mxu0 %v3928
        %v4104 = vpop.f32.mrb[0].mxu0
        %v4105 = vadd.f32 0.0, %v4104
        %v4106 = vpop.f32.mrb[0].mxu0
        %4107 = vmatprep.mubr.f32.mxu0 0.0
        %4108 = vmatmul.mubr.f32.gmra.mrb[0].mxu0 %v3931
        %v4109 = vpop.f32.mrb[0].mxu0
        %v4110 = vadd.f32 0.0, %v4109
        %v4111 = vpop.f32.mrb[0].mxu0
        %4112 = vmatprep.mubr.f32.mxu0 0.0
        %4113 = vmatmul.mubr.f32.gmra.mrb[0].mxu0 %v3934
        %v4114 = vpop.f32.mrb[0].mxu0
        %v4115 = vadd.f32 0.0, %v4114
        %v4116 = vpop.f32.mrb[0].mxu0
        %4117 = vmatprep.mubr.f32.mxu0 0.0
        %4118 = vmatmul.mubr.f32.gmra.mrb[0].mxu0 %v3937
        %v4119 = vpop.f32.mrb[0].mxu0
        %v4120 = vadd.f32 0.0, %v4119
        %v4121 = vpop.f32.mrb[0].mxu0
        %4122 = vmatprep.mubr.f32.mxu0 0.0
        %4123 = vmatmul.mubr.f32.gmra.mrb[0].mxu0 %v3940
        %v4124 = vpop.f32.mrb[0].mxu0
        %v4125 = vadd.f32 0.0, %v4124
        %v4126 = vpop.f32.mrb[0].mxu0
        %4127 = vmatprep.mubr.f32.mxu0 0.0
        %4128 = vmatmul.mubr.f32.gmra.mrb[0].mxu0 %v3943
        %v4129 = vpop.f32.mrb[0].mxu0
        %v4130 = vadd.f32 0.0, %v4129
        %v4131 = vpop.f32.mrb[0].mxu0
        %4132 = vmatprep.mubr.f32.mxu0 0.0
        %4133 = vmatmul.mubr.f32.gmra.mrb[0].mxu0 %v3946
        %v4134 = vpop.f32.mrb[0].mxu0
        %v4135 = vadd.f32 0.0, %v4134
        %v4136 = vpop.f32.mrb[0].mxu0
        %4137 = vmatprep.mubr.f32.mxu0 0.0
        %4138 = vmatmul.mubr.f32.gmra.mrb[0].mxu0 %v3949
        %v4139 = vpop.f32.mrb[0].mxu0
        %v4140 = vadd.f32 0.0, %v4139
        %v4141 = vpop.f32.mrb[0].mxu0
        %4142 = vmatprep.mubr.f32.mxu0 0.0
        %4143 = vmatmul.mubr.f32.gmra.mrb[0].mxu0 %v3952
        %v4144 = vpop.f32.mrb[0].mxu0
        %v4145 = vadd.f32 0.0, %v4144
        %v4146 = vpop.f32.mrb[0].mxu0
        %4147 = vmatprep.mubr.f32.mxu0 0.0
        %4148 = vmatmul.mubr.f32.gmra.mrb[0].mxu0 %v3955
        %v4149 = vpop.f32.mrb[0].mxu0
        %v4150 = vadd.f32 0.0, %v4149
        %v4151 = vpop.f32.mrb[0].mxu0
        %4152 = vmatprep.mubr.f32.mxu0 0.0
        %4153 = vmatmul.mubr.f32.gmra.mrb[0].mxu0 %v3958
        %v4154 = vpop.f32.mrb[0].mxu0
        %v4155 = vadd.f32 0.0, %v4154
        %v4156 = vpop.f32.mrb[0].mxu0
        %4157 = vmatprep.mubr.f32.mxu0 0.0
        %4158 = vmatmul.mubr.f32.gmra.mrb[0].mxu0 %v3961
        %v4159 = vpop.f32.mrb[0].mxu0
        %v4160 = vadd.f32 0.0, %v4159
        %v4161 = vpop.f32.mrb[0].mxu0
        %4162 = vmatprep.mubr.f32.mxu0 0.0
        %4163 = vmatmul.mubr.f32.gmra.mrb[0].mxu0 %v3964
        %v4164 = vpop.f32.mrb[0].mxu0
        %v4165 = vadd.f32 0.0, %v4164
        %v4166 = vpop.f32.mrb[0].mxu0
        %4167 = vmatprep.mubr.f32.mxu0 0.0
        %4168 = vmatmul.mubr.f32.gmra.mrb[0].mxu0 %v3967
        %v4169 = vpop.f32.mrb[0].mxu0
        %v4170 = vadd.f32 0.0, %v4169
        %v4171 = vpop.f32.mrb[0].mxu0
        %4172 = vmatprep.mubr.f32.mxu0 0.0
        %4173 = vmatmul.mubr.f32.gmra.mrb[0].mxu0 %v3970
        %v4174 = vpop.f32.mrb[0].mxu0
        %v4175 = vadd.f32 0.0, %v4174
        %v4176 = vpop.f32.mrb[0].mxu0
        %4177 = vmatprep.mubr.f32.mxu0 0.0
        %4178 = vmatmul.mubr.f32.gmra.mrb[0].mxu0 %v3973
        %v4179 = vpop.f32.mrb[0].mxu0
        %v4180 = vadd.f32 0.0, %v4179
        %v4181 = vpop.f32.mrb[0].mxu0
        %4182 = vmatprep.mubr.f32.mxu0 0.0
        %4183 = vmatmul.mubr.f32.gmra.mrb[0].mxu0 %v3976
        %v4184 = vpop.f32.mrb[0].mxu0
        %v4185 = vadd.f32 0.0, %v4184
        %v4186 = vpop.f32.mrb[0].mxu0
        %4187 = vmatprep.mubr.f32.mxu0 0.0
        %4188 = vmatmul.mubr.f32.gmra.mrb[0].mxu0 %v3979
        %v4189 = vpop.f32.mrb[0].mxu0
        %v4190 = vadd.f32 0.0, %v4189
        %v4191 = vpop.f32.mrb[0].mxu0
        %4192 = vmatprep.mubr.f32.mxu0 0.0
        %4193 = vmatmul.mubr.f32.gmra.mrb[0].mxu0 %v3982
        %v4194 = vpop.f32.mrb[0].mxu0
        %v4195 = vadd.f32 0.0, %v4194
        %v4196 = vpop.f32.mrb[0].mxu0
        %4197 = vmatprep.mubr.f32.mxu0 0.0
        %4198 = vmatmul.mubr.f32.gmra.mrb[0].mxu0 %v3985
        %v4199 = vpop.f32.mrb[0].mxu0
        %v4200 = vadd.f32 0.0, %v4199
        %v4201 = vpop.f32.mrb[0].mxu0
        %4202 = vmatprep.mubr.f32.mxu0 0.0
        %4203 = vmatmul.mubr.f32.gmra.mrb[0].mxu0 %v3988
        %v4204 = vpop.f32.mrb[0].mxu0
        %v4205 = vadd.f32 0.0, %v4204
        %v4206 = vpop.f32.mrb[0].mxu0
        %4207 = vmatprep.mubr.f32.mxu0 0.0
        %4208 = vmatmul.mubr.f32.gmra.mrb[0].mxu0 %v3991
        %v4209 = vpop.f32.mrb[0].mxu0
        %v4210 = vadd.f32 0.0, %v4209
        %v4211 = vpop.f32.mrb[0].mxu0
        %4212 = vmatprep.mubr.f32.mxu0 0.0
        %4213 = vmatmul.mubr.f32.gmra.mrb[0].mxu0 %v3994
        %v4214 = vpop.f32.mrb[0].mxu0
        %v4215 = vadd.f32 0.0, %v4214
        %v4216 = vpop.f32.mrb[0].mxu0
        %4217 = vmatprep.mubr.f32.mxu0 0.0
        %4218 = vmatmul.mubr.f32.gmra.mrb[0].mxu0 %v3997
        %v4219 = vpop.f32.mrb[0].mxu0
        %v4220 = vadd.f32 0.0, %v4219
        %v4221 = vpop.f32.mrb[0].mxu0
        %4222 = vmatprep.mubr.f32.mxu0 0.0
        %4223 = vmatmul.mubr.f32.gmra.mrb[0].mxu0 %v4000
        %v4224 = vpop.f32.mrb[0].mxu0
        %v4225 = vadd.f32 0.0, %v4224
        %v4226 = vpop.f32.mrb[0].mxu0
        %4227 = vmatprep.mubr.f32.mxu0 0.0
        %4228 = vmatmul.mubr.f32.gmra.mrb[0].mxu0 %v4003
        %v4229 = vpop.f32.mrb[0].mxu0
        %v4230 = vadd.f32 0.0, %v4229
        %v4231 = vpop.f32.mrb[0].mxu0
        %4232 = vdwg.mxu0
        %v4233 = vadd.f32 %v3875, %v4075
        %v4234 = vadd.f32 %v3876, %v4080
        %v4235 = vadd.f32 %v3877, %v4085
        %v4236 = vadd.f32 %v3878, %v4090
        %v4237 = vadd.f32 %v3879, %v4095
        %v4238 = vadd.f32 %v3880, %v4100
        %v4239 = vadd.f32 %v3881, %v4105
        %v4240 = vadd.f32 %v3882, %v4110
        %v4241 = vadd.f32 %v3883, %v4115
        %v4242 = vadd.f32 %v3884, %v4120
        %v4243 = vadd.f32 %v3885, %v4125
        %v4244 = vadd.f32 %v3886, %v4130
        %v4245 = vadd.f32 %v3887, %v4135
        %v4246 = vadd.f32 %v3888, %v4140
        %v4247 = vadd.f32 %v3889, %v4145
        %v4248 = vadd.f32 %v3890, %v4150
        %v4249 = vadd.f32 %v3891, %v4155
        %v4250 = vadd.f32 %v3892, %v4160
        %v4251 = vadd.f32 %v3893, %v4165
        %v4252 = vadd.f32 %v3894, %v4170
        %v4253 = vadd.f32 %v3895, %v4175
        %v4254 = vadd.f32 %v3896, %v4180
        %v4255 = vadd.f32 %v3897, %v4185
        %v4256 = vadd.f32 %v3898, %v4190
        %v4257 = vadd.f32 %v3899, %v4195
        %v4258 = vadd.f32 %v3900, %v4200
        %v4259 = vadd.f32 %v3901, %v4205
        %v4260 = vadd.f32 %v3902, %v4210
        %v4261 = vadd.f32 %v3903, %v4215
        %v4262 = vadd.f32 %v3904, %v4220
        %v4263 = vadd.f32 %v3905, %v4225
        %v4264 = vadd.f32 %v3906, %v4230
        %4265 = vst [vmem:[#allocation2] sm:$0xff] %v4233
        %4266 = vst [vmem:[#allocation2 + $0x8] sm:$0xff] %v4234
        %4267 = vst [vmem:[#allocation2 + $0x10] sm:$0xff] %v4235
        %4268 = vst [vmem:[#allocation2 + $0x18] sm:$0xff] %v4236
        %4269 = vst [vmem:[#allocation2 + $0x20] sm:$0xff] %v4237
        %4270 = vst [vmem:[#allocation2 + $0x28] sm:$0xff] %v4238
        %4271 = vst [vmem:[#allocation2 + $0x30] sm:$0xff] %v4239
        %4272 = vst [vmem:[#allocation2 + $0x38] sm:$0xff] %v4240
        %4273 = vst [vmem:[#allocation2 + $0x40] sm:$0xff] %v4241
        %4274 = vst [vmem:[#allocation2 + $0x48] sm:$0xff] %v4242
        %4275 = vst [vmem:[#allocation2 + $0x50] sm:$0xff] %v4243
        %4276 = vst [vmem:[#allocation2 + $0x58] sm:$0xff] %v4244
        %4277 = vst [vmem:[#allocation2 + $0x60] sm:$0xff] %v4245
        %4278 = vst [vmem:[#allocation2 + $0x68] sm:$0xff] %v4246
        %4279 = vst [vmem:[#allocation2 + $0x70] sm:$0xff] %v4247
        %4280 = vst [vmem:[#allocation2 + $0x78] sm:$0xff] %v4248
        %4281 = vst [vmem:[#allocation2 + $0x80] sm:$0xff] %v4249
        %4282 = vst [vmem:[#allocation2 + $0x88] sm:$0xff] %v4250
        %4283 = vst [vmem:[#allocation2 + $0x90] sm:$0xff] %v4251
        %4284 = vst [vmem:[#allocation2 + $0x98] sm:$0xff] %v4252
        %4285 = vst [vmem:[#allocation2 + $0xa0] sm:$0xff] %v4253
        %4286 = vst [vmem:[#allocation2 + $0xa8] sm:$0xff] %v4254
        %4287 = vst [vmem:[#allocation2 + $0xb0] sm:$0xff] %v4255
        %4288 = vst [vmem:[#allocation2 + $0xb8] sm:$0xff] %v4256
        %4289 = vst [vmem:[#allocation2 + $0xc0] sm:$0xff] %v4257
        %4290 = vst [vmem:[#allocation2 + $0xc8] sm:$0xff] %v4258
        %4291 = vst [vmem:[#allocation2 + $0xd0] sm:$0xff] %v4259
        %4292 = vst [vmem:[#allocation2 + $0xd8] sm:$0xff] %v4260
        %4293 = vst [vmem:[#allocation2 + $0xe0] sm:$0xff] %v4261
        %4294 = vst [vmem:[#allocation2 + $0xe8] sm:$0xff] %v4262
        %4295 = vst [vmem:[#allocation2 + $0xf0] sm:$0xff] %v4263
        %4296 = vst [vmem:[#allocation2 + $0xf8] sm:$0xff] %v4264
        %v4297 = vld [vmem:[#allocation2] sm:$0xff]
        %v4298 = vld [vmem:[#allocation2 + $0x8] sm:$0xff]
        %v4299 = vld [vmem:[#allocation2 + $0x10] sm:$0xff]
        %v4300 = vld [vmem:[#allocation2 + $0x18] sm:$0xff]
        %v4301 = vld [vmem:[#allocation2 + $0x20] sm:$0xff]
        %v4302 = vld [vmem:[#allocation2 + $0x28] sm:$0xff]
        %v4303 = vld [vmem:[#allocation2 + $0x30] sm:$0xff]
        %v4304 = vld [vmem:[#allocation2 + $0x38] sm:$0xff]
        %v4305 = vld [vmem:[#allocation2 + $0x40] sm:$0xff]
        %v4306 = vld [vmem:[#allocation2 + $0x48] sm:$0xff]
        %v4307 = vld [vmem:[#allocation2 + $0x50] sm:$0xff]
        %v4308 = vld [vmem:[#allocation2 + $0x58] sm:$0xff]
        %v4309 = vld [vmem:[#allocation2 + $0x60] sm:$0xff]
        %v4310 = vld [vmem:[#allocation2 + $0x68] sm:$0xff]
        %v4311 = vld [vmem:[#allocation2 + $0x70] sm:$0xff]
        %v4312 = vld [vmem:[#allocation2 + $0x78] sm:$0xff]
        %v4313 = vld [vmem:[#allocation2 + $0x80] sm:$0xff]
        %v4314 = vld [vmem:[#allocation2 + $0x88] sm:$0xff]
        %v4315 = vld [vmem:[#allocation2 + $0x90] sm:$0xff]
        %v4316 = vld [vmem:[#allocation2 + $0x98] sm:$0xff]
        %v4317 = vld [vmem:[#allocation2 + $0xa0] sm:$0xff]
        %v4318 = vld [vmem:[#allocation2 + $0xa8] sm:$0xff]
        %v4319 = vld [vmem:[#allocation2 + $0xb0] sm:$0xff]
        %v4320 = vld [vmem:[#allocation2 + $0xb8] sm:$0xff]
        %v4321 = vld [vmem:[#allocation2 + $0xc0] sm:$0xff]
        %v4322 = vld [vmem:[#allocation2 + $0xc8] sm:$0xff]
        %v4323 = vld [vmem:[#allocation2 + $0xd0] sm:$0xff]
        %v4324 = vld [vmem:[#allocation2 + $0xd8] sm:$0xff]
        %v4325 = vld [vmem:[#allocation2 + $0xe0] sm:$0xff]
        %v4326 = vld [vmem:[#allocation2 + $0xe8] sm:$0xff]
        %v4327 = vld [vmem:[#allocation2 + $0xf0] sm:$0xff]
        %v4328 = vld [vmem:[#allocation2 + $0xf8] sm:$0xff]
        %v4329 = vsub.f32 0.0, %v4297
        %v4330 = vsub.f32 0.0, %v4298
        %v4331 = vsub.f32 0.0, %v4299
        %v4332 = vsub.f32 0.0, %v4300
        %v4333 = vsub.f32 0.0, %v4301
        %v4334 = vsub.f32 0.0, %v4302
        %v4335 = vsub.f32 0.0, %v4303
        %v4336 = vsub.f32 0.0, %v4304
        %v4337 = vsub.f32 0.0, %v4305
        %v4338 = vsub.f32 0.0, %v4306
        %v4339 = vsub.f32 0.0, %v4307
        %v4340 = vsub.f32 0.0, %v4308
        %v4341 = vsub.f32 0.0, %v4309
        %v4342 = vsub.f32 0.0, %v4310
        %v4343 = vsub.f32 0.0, %v4311
        %v4344 = vsub.f32 0.0, %v4312
        %v4345 = vsub.f32 0.0, %v4313
        %v4346 = vsub.f32 0.0, %v4314
        %v4347 = vsub.f32 0.0, %v4315
        %v4348 = vsub.f32 0.0, %v4316
        %v4349 = vsub.f32 0.0, %v4317
        %v4350 = vsub.f32 0.0, %v4318
        %v4351 = vsub.f32 0.0, %v4319
        %v4352 = vsub.f32 0.0, %v4320
        %v4353 = vsub.f32 0.0, %v4321
        %v4354 = vsub.f32 0.0, %v4322
        %v4355 = vsub.f32 0.0, %v4323
        %v4356 = vsub.f32 0.0, %v4324
        %v4357 = vsub.f32 0.0, %v4325
        %v4358 = vsub.f32 0.0, %v4326
        %v4359 = vsub.f32 0.0, %v4327
        %v4360 = vsub.f32 0.0, %v4328
        %v4361 = vmul.f32 %v4329, 1.442695
        %v4362 = vpow.pop %v4361
        %v4363 = vmul.f32 %v4330, 1.442695
        %v4364 = vpow.pop %v4363
        %v4365 = vmul.f32 %v4331, 1.442695
        %v4366 = vpow.pop %v4365
        %v4367 = vmul.f32 %v4332, 1.442695
        %v4368 = vpow.pop %v4367
        %v4369 = vmul.f32 %v4333, 1.442695
        %v4370 = vpow.pop %v4369
        %v4371 = vmul.f32 %v4334, 1.442695
        %v4372 = vpow.pop %v4371
        %v4373 = vmul.f32 %v4335, 1.442695
        %v4374 = vpow.pop %v4373
        %v4375 = vmul.f32 %v4336, 1.442695
        %v4376 = vpow.pop %v4375
        %v4377 = vmul.f32 %v4337, 1.442695
        %v4378 = vpow.pop %v4377
        %v4379 = vmul.f32 %v4338, 1.442695
        %v4380 = vpow.pop %v4379
        %v4381 = vmul.f32 %v4339, 1.442695
        %v4382 = vpow.pop %v4381
        %v4383 = vmul.f32 %v4340, 1.442695
        %v4384 = vpow.pop %v4383
        %v4385 = vmul.f32 %v4341, 1.442695
        %v4386 = vpow.pop %v4385
        %v4387 = vmul.f32 %v4342, 1.442695
        %v4388 = vpow.pop %v4387
        %v4389 = vmul.f32 %v4343, 1.442695
        %v4390 = vpow.pop %v4389
        %v4391 = vmul.f32 %v4344, 1.442695
        %v4392 = vpow.pop %v4391
        %v4393 = vmul.f32 %v4345, 1.442695
        %v4394 = vpow.pop %v4393
        %v4395 = vmul.f32 %v4346, 1.442695
        %v4396 = vpow.pop %v4395
        %v4397 = vmul.f32 %v4347, 1.442695
        %v4398 = vpow.pop %v4397
        %v4399 = vmul.f32 %v4348, 1.442695
        %v4400 = vpow.pop %v4399
        %v4401 = vmul.f32 %v4349, 1.442695
        %v4402 = vpow.pop %v4401
        %v4403 = vmul.f32 %v4350, 1.442695
        %v4404 = vpow.pop %v4403
        %v4405 = vmul.f32 %v4351, 1.442695
        %v4406 = vpow.pop %v4405
        %v4407 = vmul.f32 %v4352, 1.442695
        %v4408 = vpow.pop %v4407
        %v4409 = vmul.f32 %v4353, 1.442695
        %v4410 = vpow.pop %v4409
        %v4411 = vmul.f32 %v4354, 1.442695
        %v4412 = vpow.pop %v4411
        %v4413 = vmul.f32 %v4355, 1.442695
        %v4414 = vpow.pop %v4413
        %v4415 = vmul.f32 %v4356, 1.442695
        %v4416 = vpow.pop %v4415
        %v4417 = vmul.f32 %v4357, 1.442695
        %v4418 = vpow.pop %v4417
        %v4419 = vmul.f32 %v4358, 1.442695
        %v4420 = vpow.pop %v4419
        %v4421 = vmul.f32 %v4359, 1.442695
        %v4422 = vpow.pop %v4421
        %v4423 = vmul.f32 %v4360, 1.442695
        %v4424 = vpow.pop %v4423
        %v4425 = vadd.f32 %v4362, 1.0
        %v4426 = vadd.f32 %v4364, 1.0
        %v4427 = vadd.f32 %v4366, 1.0
        %v4428 = vadd.f32 %v4368, 1.0
        %v4429 = vadd.f32 %v4370, 1.0
        %v4430 = vadd.f32 %v4372, 1.0
        %v4431 = vadd.f32 %v4374, 1.0
        %v4432 = vadd.f32 %v4376, 1.0
        %v4433 = vadd.f32 %v4378, 1.0
        %v4434 = vadd.f32 %v4380, 1.0
        %v4435 = vadd.f32 %v4382, 1.0
        %v4436 = vadd.f32 %v4384, 1.0
        %v4437 = vadd.f32 %v4386, 1.0
        %v4438 = vadd.f32 %v4388, 1.0
        %v4439 = vadd.f32 %v4390, 1.0
        %v4440 = vadd.f32 %v4392, 1.0
        %v4441 = vadd.f32 %v4394, 1.0
        %v4442 = vadd.f32 %v4396, 1.0
        %v4443 = vadd.f32 %v4398, 1.0
        %v4444 = vadd.f32 %v4400, 1.0
        %v4445 = vadd.f32 %v4402, 1.0
        %v4446 = vadd.f32 %v4404, 1.0
        %v4447 = vadd.f32 %v4406, 1.0
        %v4448 = vadd.f32 %v4408, 1.0
        %v4449 = vadd.f32 %v4410, 1.0
        %v4450 = vadd.f32 %v4412, 1.0
        %v4451 = vadd.f32 %v4414, 1.0
        %v4452 = vadd.f32 %v4416, 1.0
        %v4453 = vadd.f32 %v4418, 1.0
        %v4454 = vadd.f32 %v4420, 1.0
        %v4455 = vadd.f32 %v4422, 1.0
        %v4456 = vadd.f32 %v4424, 1.0
        %v4457 = vrcp.pop %v4425
        %v4458 = vrcp.pop %v4426
        %v4459 = vrcp.pop %v4427
        %v4460 = vrcp.pop %v4428
        %v4461 = vrcp.pop %v4429
        %v4462 = vrcp.pop %v4430
        %v4463 = vrcp.pop %v4431
        %v4464 = vrcp.pop %v4432
        %v4465 = vrcp.pop %v4433
        %v4466 = vrcp.pop %v4434
        %v4467 = vrcp.pop %v4435
        %v4468 = vrcp.pop %v4436
        %v4469 = vrcp.pop %v4437
        %v4470 = vrcp.pop %v4438
        %v4471 = vrcp.pop %v4439
        %v4472 = vrcp.pop %v4440
        %v4473 = vrcp.pop %v4441
        %v4474 = vrcp.pop %v4442
        %v4475 = vrcp.pop %v4443
        %v4476 = vrcp.pop %v4444
        %v4477 = vrcp.pop %v4445
        %v4478 = vrcp.pop %v4446
        %v4479 = vrcp.pop %v4447
        %v4480 = vrcp.pop %v4448
        %v4481 = vrcp.pop %v4449
        %v4482 = vrcp.pop %v4450
        %v4483 = vrcp.pop %v4451
        %v4484 = vrcp.pop %v4452
        %v4485 = vrcp.pop %v4453
        %v4486 = vrcp.pop %v4454
        %v4487 = vrcp.pop %v4455
        %v4488 = vrcp.pop %v4456
        %v4489 = vmul.f32 %v4297, %v4457
        %v4490 = vmul.f32 %v4298, %v4458
        %v4491 = vmul.f32 %v4299, %v4459
        %v4492 = vmul.f32 %v4300, %v4460
        %v4493 = vmul.f32 %v4301, %v4461
        %v4494 = vmul.f32 %v4302, %v4462
        %v4495 = vmul.f32 %v4303, %v4463
        %v4496 = vmul.f32 %v4304, %v4464
        %v4497 = vmul.f32 %v4305, %v4465
        %v4498 = vmul.f32 %v4306, %v4466
        %v4499 = vmul.f32 %v4307, %v4467
        %v4500 = vmul.f32 %v4308, %v4468
        %v4501 = vmul.f32 %v4309, %v4469
        %v4502 = vmul.f32 %v4310, %v4470
        %v4503 = vmul.f32 %v4311, %v4471
        %v4504 = vmul.f32 %v4312, %v4472
        %v4505 = vmul.f32 %v4313, %v4473
        %v4506 = vmul.f32 %v4314, %v4474
        %v4507 = vmul.f32 %v4315, %v4475
        %v4508 = vmul.f32 %v4316, %v4476
        %v4509 = vmul.f32 %v4317, %v4477
        %v4510 = vmul.f32 %v4318, %v4478
        %v4511 = vmul.f32 %v4319, %v4479
        %v4512 = vmul.f32 %v4320, %v4480
        %v4513 = vmul.f32 %v4321, %v4481
        %v4514 = vmul.f32 %v4322, %v4482
        %v4515 = vmul.f32 %v4323, %v4483
        %v4516 = vmul.f32 %v4324, %v4484
        %v4517 = vmul.f32 %v4325, %v4485
        %v4518 = vmul.f32 %v4326, %v4486
        %v4519 = vmul.f32 %v4327, %v4487
        %v4520 = vmul.f32 %v4328, %v4488
        %4521 = vst [vmem:[%s163] sm:$0xff] %v4489
        %4522 = vst [vmem:[%s163 + $0x8] sm:$0xff] %v4490
        %4523 = vst [vmem:[%s163 + $0x10] sm:$0xff] %v4491
        %4524 = vst [vmem:[%s163 + $0x18] sm:$0xff] %v4492
        %4525 = vst [vmem:[%s163 + $0x20] sm:$0xff] %v4493
        %4526 = vst [vmem:[%s163 + $0x28] sm:$0xff] %v4494
        %4527 = vst [vmem:[%s163 + $0x30] sm:$0xff] %v4495
        %4528 = vst [vmem:[%s163 + $0x38] sm:$0xff] %v4496
        %4529 = vst [vmem:[%s163 + $0x40] sm:$0xff] %v4497
        %4530 = vst [vmem:[%s163 + $0x48] sm:$0xff] %v4498
        %4531 = vst [vmem:[%s163 + $0x50] sm:$0xff] %v4499
        %4532 = vst [vmem:[%s163 + $0x58] sm:$0xff] %v4500
        %4533 = vst [vmem:[%s163 + $0x60] sm:$0xff] %v4501
        %4534 = vst [vmem:[%s163 + $0x68] sm:$0xff] %v4502
        %4535 = vst [vmem:[%s163 + $0x70] sm:$0xff] %v4503
        %4536 = vst [vmem:[%s163 + $0x78] sm:$0xff] %v4504
        %4537 = vst [vmem:[%s163 + $0x80] sm:$0xff] %v4505
        %4538 = vst [vmem:[%s163 + $0x88] sm:$0xff] %v4506
        %4539 = vst [vmem:[%s163 + $0x90] sm:$0xff] %v4507
        %4540 = vst [vmem:[%s163 + $0x98] sm:$0xff] %v4508
        %4541 = vst [vmem:[%s163 + $0xa0] sm:$0xff] %v4509
        %4542 = vst [vmem:[%s163 + $0xa8] sm:$0xff] %v4510
        %4543 = vst [vmem:[%s163 + $0xb0] sm:$0xff] %v4511
        %4544 = vst [vmem:[%s163 + $0xb8] sm:$0xff] %v4512
        %4545 = vst [vmem:[%s163 + $0xc0] sm:$0xff] %v4513
        %4546 = vst [vmem:[%s163 + $0xc8] sm:$0xff] %v4514
        %4547 = vst [vmem:[%s163 + $0xd0] sm:$0xff] %v4515
        %4548 = vst [vmem:[%s163 + $0xd8] sm:$0xff] %v4516
        %4549 = vst [vmem:[%s163 + $0xe0] sm:$0xff] %v4517
        %4550 = vst [vmem:[%s163 + $0xe8] sm:$0xff] %v4518
        %4551 = vst [vmem:[%s163 + $0xf0] sm:$0xff] %v4519
        %4552 = vst [vmem:[%s163 + $0xf8] sm:$0xff] %v4520
        %s4553 = sand.u32 %s93, 1
        %s4554 = scalar_lea.sflag [#allocation4], %s4553
        %s4555 = sand.u32 %s93, 1
        %s4556 = smul.addr %s4555, 256
        %s4557 = scalar_lea.vmem [#allocation3], %s4556
        // Predicated region
        $region33: #{tpu_custom_call.1} parent=31 // pred_check
          %p4558 = pneg %p103
        $region34: #{tpu_custom_call.1} parent=31 // pred_check_branch
          %4560 = sbr.rel (%p4558) target = $region36
        $region35: #{tpu_custom_call.1} parent=31 // pred_region
          %s4562 = ssub.s32 4096, 4096
          %4563 = vsyncadd %s4554, %s4562
          %s4564 = smul.addr %s17, 32
          %s4565 = smul.addr %s4564, 128
          %s4566 = scalar_lea.hbm %s3, %s4565
          %s4567 = sshll.u32 %s4557, 4
          %s4568 = int_to_ptr.vmem [resolvable:$true] %s4567
          %4573 = dma.vmem_to_hbm [thread:$0]  %s4568, 4096, %s4566, %s4554, 128, 128, 8
        $region36: #{tpu_custom_call.1} parent=31 // pred_fallthru
          _
      $region32: #{tpu_custom_call.1} parent=5 // pred_fallthru
        _
      %p4574 = scmp.le.s32.totalorder 2, %s12
      // Predicated region
      $region37: #{tpu_custom_call.1} parent=5 // pred_check
        %p4575 = pneg %p4574
      $region38: #{tpu_custom_call.1} parent=5 // pred_check_branch
        %4577 = sbr.rel (%p4575) target = $region40
      $region39: #{tpu_custom_call.1} parent=5 // pred_region
        %s4578 = ssub.s32 %s12, 2
        // Predicated region
        $region41: #{tpu_custom_call.1} parent=39 // pred_check
          %p4579 = pneg %p109
        $region42: #{tpu_custom_call.1} parent=39 // pred_check_branch
          %4581 = sbr.rel (%p4579) target = $region44
        $region43: #{tpu_custom_call.1} parent=39 // pred_region
          %s4582 = sand.u32 %s94, 1
          %s4583 = scalar_lea.sflag [#allocation4], %s4582
          %s4584 = sand.u32 %s94, 1
          %s4585 = smul.addr %s4584, 256
          %s4586 = scalar_lea.vmem [#allocation3], %s4585
          %4587 = dma.done %s4583, 4096
        $region44: #{tpu_custom_call.1} parent=39 // pred_fallthru
          _
      $region40: #{tpu_custom_call.1} parent=5 // pred_fallthru
        _
    $region6: #{tpu_custom_call.1} parent=1 // loop_footer
      %s16 = sadd.s32 1, %s12
    $region7: #{tpu_custom_call.1} parent=1 // loop_footer_branch
      %11 = sbr.rel target = $region3
    $region8: #{tpu_custom_call.1} parent=1 // loop_exit
      _
    %4588 = vsyncpa [#allocation4], 1
    %s4589 = scalar_lea.sflag [#allocation4], 1
    %4590 = vsyncpa %s4589, 1

</llo_original>
